<compile_context>
chip_gen: v6e
topology: v6e:2x2x1
jax: 0.10.0
libtpu: 0.0.40
codegen_flags: <defaults>
</compile_context>

<pallas_src>
import functools
import math

import jax
import jax.numpy as jnp
import numpy as np
from jax.experimental import pallas as pl
from jax.experimental.pallas import tpu as pltpu


DEFAULT_MASK_VALUE = -1e30
# Explicit scoped-VMEM limit: > v5e's 16 MiB default, <= every generation's
# physical VMEM (v7x has 64 MiB).  Actual footprints here are <= ~12 MB.
VMEM_LIMIT_BYTES = 32 * 1024 * 1024


# ----------------------------------------------------------------------------
# helpers
# ----------------------------------------------------------------------------
def _pick_tile(n, cap, quantum):
    """Largest multiple of `quantum` that divides n and is <= cap, else n."""
    best = None
    t = quantum
    limit = min(n, cap)
    while t <= limit:
        if n % t == 0:
            best = t
        t += quantum
    return best if best is not None else n


# ----------------------------------------------------------------------------
# Tiled linear kernel: out = x @ w + b
# ----------------------------------------------------------------------------
def _linear_kernel(x_ref, w_ref, b_ref, o_ref, acc_ref):
    k = pl.program_id(2)

    @pl.when(k == 0)
    def _init():
        acc_ref[...] = jnp.zeros(acc_ref.shape, jnp.float32)

    acc_ref[...] += jnp.dot(x_ref[...], w_ref[...],
                            preferred_element_type=jnp.float32)

    @pl.when(k == pl.num_programs(2) - 1)
    def _done():
        o_ref[...] = (acc_ref[...] + b_ref[...].astype(jnp.float32)).astype(
            o_ref.dtype)


def pallas_linear(x, w, b, *, out_dtype, mxu_dtype=jnp.bfloat16,
                  tm_cap=512, tn_cap=512, tk_cap=1280):
    """x: (M, K), w: (K, N), b: (N,).  Big tiles; K axis collapses when K<=tk_cap."""
    M, K = x.shape
    K2, N = w.shape
    assert K == K2
    b = b.reshape(1, N).astype(jnp.float32)

    tm = _pick_tile(M, tm_cap, 16)     # 16-row quantum: bf16 sublane packing
    tn = _pick_tile(N, tn_cap, 128)
    tk = _pick_tile(K, tk_cap, 128)

    x = x.astype(mxu_dtype)
    w = w.astype(mxu_dtype)

    grid = (M // tm, N // tn, K // tk)
    return pl.pallas_call(
        _linear_kernel,
        grid=grid,
        in_specs=[
            pl.BlockSpec((tm, tk), lambda i, j, k: (i, k)),
            pl.BlockSpec((tk, tn), lambda i, j, k: (k, j)),
            pl.BlockSpec((1, tn), lambda i, j, k: (0, j)),
        ],
        out_specs=pl.BlockSpec((tm, tn), lambda i, j, k: (i, j)),
        out_shape=jax.ShapeDtypeStruct((M, N), out_dtype),
        scratch_shapes=[pltpu.VMEM((tm, tn), jnp.float32)],
        compiler_params=pltpu.CompilerParams(
            dimension_semantics=("parallel", "parallel", "arbitrary"),
            vmem_limit_bytes=VMEM_LIMIT_BYTES),
    )(x, w, b)


# ----------------------------------------------------------------------------
# RoPE + head-major split pre-pass.
#   in : qkv (S, 3*dim), cos/sin (S, D) full-width
#   out: q_rot (H, S, D) pre-scaled by 1/sqrt(D), k_rot (H, S, D), v (H, S, D)
# The per-head lane slicing (head_dim 32/80 not 128-aligned) and K RoPE happen
# once per row here, so the attention hot loop never re-does them.
# ----------------------------------------------------------------------------
def _rope_split_kernel(qkv_ref, cos_ref, sin_ref,
                       q_out_ref, k_out_ref, v_out_ref,
                       *, num_heads, head_dim, scale):
    H, D = num_heads, head_dim
    dim = H * D
    half = D // 2
    cos = cos_ref[...].astype(jnp.float32)     # (tr, D)
    sin = sin_ref[...].astype(jnp.float32)     # (tr, D)

    def rope(x):
        # flash-attn (non-interleaved) rotary in full-width form:
        #   out = x * cos + rotate_half(x) * sin,  rotate_half(x) = [-x2, x1]
        x1 = x[:, :half]
        x2 = x[:, half:]
        rot = jnp.concatenate([-x2, x1], axis=-1)
        return x * cos + rot * sin

    for h in range(H):
        lo = h * D
        qh = qkv_ref[:, lo:lo + D].astype(jnp.float32)
        kh = qkv_ref[:, dim + lo:dim + lo + D].astype(jnp.float32)
        q_out_ref[h] = (rope(qh) * scale).astype(q_out_ref.dtype)
        k_out_ref[h] = rope(kh).astype(k_out_ref.dtype)
        v_out_ref[h] = qkv_ref[:, 2 * dim + lo:2 * dim + lo + D].astype(
            v_out_ref.dtype)


def pallas_rope_split(qkv, cos_full, sin_full, num_heads, *, mxu_dtype,
                      tr_cap=512):
    S, three_dim = qkv.shape
    dim = three_dim // 3
    D = dim // num_heads
    scale = 1.0 / math.sqrt(D)
    tr = _pick_tile(S, tr_cap, 8)

    kernel = functools.partial(_rope_split_kernel, num_heads=num_heads,
                               head_dim=D, scale=scale)
    out_sds = jax.ShapeDtypeStruct((num_heads, S, D), mxu_dtype)
    q_rot, k_rot, v = pl.pallas_call(
        kernel,
        grid=(S // tr,),
        in_specs=[
            pl.BlockSpec((tr, three_dim), lambda i: (i, 0)),
            pl.BlockSpec((tr, D), lambda i: (i, 0)),
            pl.BlockSpec((tr, D), lambda i: (i, 0)),
        ],
        out_specs=(
            pl.BlockSpec((num_heads, tr, D), lambda i: (0, i, 0)),
            pl.BlockSpec((num_heads, tr, D), lambda i: (0, i, 0)),
            pl.BlockSpec((num_heads, tr, D), lambda i: (0, i, 0)),
        ),
        out_shape=(out_sds, out_sds, out_sds),
        compiler_params=pltpu.CompilerParams(
            dimension_semantics=("parallel",),
            vmem_limit_bytes=VMEM_LIMIT_BYTES),
    )(qkv, cos_full, sin_full)
    return q_rot, k_rot, v


# ----------------------------------------------------------------------------
# Flash-style varlen attention.
# Grid: (num_q_tiles, max_active_kv_tiles); kv axis innermost ("arbitrary").
# ----------------------------------------------------------------------------
def _flash_attn_kernel(kfirst_ref, klast_ref,                 # scalar prefetch
                       q_ref, k_ref, v_ref,                   # (H,tq,D),(H,tk,D),(H,tk,D)
                       segq_ref, segk_ref,                    # (tq,1), (1,tk)
                       o_ref,                                 # (tq, H*D)
                       m_ref, l_ref, acc_ref,                 # scratch
                       *, mxu_dtype):
    qi = pl.program_id(0)
    ki = pl.program_id(1)

    @pl.when(ki == 0)
    def _init():
        m_ref[...] = jnp.full(m_ref.shape, DEFAULT_MASK_VALUE, jnp.float32)
        l_ref[...] = jnp.zeros(l_ref.shape, jnp.float32)
        acc_ref[...] = jnp.zeros(acc_ref.shape, jnp.float32)

    # Compressed kv axis: local step ki maps to absolute kv tile kfirst+ki.
    # Steps past klast are clamped by the index_map (no DMA) and gated here.
    active = ki <= klast_ref[qi] - kfirst_ref[qi]

    @pl.when(active)
    def _update():
        # (tq,1)==(1,tk) broadcast: lane-major key segs, no in-kernel transpose.
        mask = segq_ref[...] == segk_ref[...]                  # (tq, tk) bool
        bias = jnp.where(mask, 0.0, DEFAULT_MASK_VALUE)        # once, not per head
        pmask = mask.astype(jnp.float32)                       # once, not per head

        # Batched-over-heads scores; q is already RoPE'd and scaled by 1/sqrt(D).
        s = jnp.einsum("hqd,hkd->hqk", q_ref[...], k_ref[...],
                       preferred_element_type=jnp.float32)
        s = s + bias[None]

        m_prev = m_ref[...]                                    # (H, tq, 1)
        m_new = jnp.maximum(m_prev, jnp.max(s, axis=-1, keepdims=True))
        alpha = jnp.exp(m_prev - m_new)
        # Explicit multiplicative mask: query rows that are fully masked inside
        # an active kv tile (segment boundary inside the q tile) must add
        # exactly 0 to l/acc even while their running max is still -1e30.
        p = jnp.exp(s - m_new) * pmask[None]

        l_ref[...] = alpha * l_ref[...] + jnp.sum(p, axis=-1, keepdims=True)
        acc_ref[...] = alpha * acc_ref[...] + jnp.einsum(
            "hqk,hkd->hqd", p.astype(mxu_dtype), v_ref[...],
            preferred_element_type=jnp.float32)
        m_ref[...] = m_new

    @pl.when(ki == pl.num_programs(1) - 1)
    def _finalize():
        l = l_ref[...]
        l = jnp.where(l == 0.0, 1.0, l)          # guard degenerate/padded rows
        inv_l = pl.reciprocal(l, approx=False)   # exact: output may be f32
        norm = acc_ref[...] * inv_l              # (H, tq, D) f32
        num_heads = norm.shape[0]
        # One lane-dense (tq, H*D) store per q tile (heads concatenated along
        # lanes) instead of H narrow stores.
        out = jnp.concatenate([norm[h] for h in range(num_heads)], axis=-1)
        o_ref[...] = out.astype(o_ref.dtype)


def pallas_flash_attention(q_rot, k_rot, v, seg_col, seg_row, kfirst, klast,
                           nk_active, *, tq, tk, mxu_dtype, out_dtype):
    H, S, D = q_rot.shape
    dim = H * D
    nq = S // tq

    def q_map(qi, ki, kf, kl):
        return (0, qi, 0)

    def kv_map(qi, ki, kf, kl):
        # Clamp out-of-range steps onto an already-resident block: no extra DMA.
        return (0, jnp.minimum(kf[qi] + ki, kl[qi]), 0)

    def segq_map(qi, ki, kf, kl):
        return (qi, 0)

    def segk_map(qi, ki, kf, kl):
        return (0, jnp.minimum(kf[qi] + ki, kl[qi]))

    def out_map(qi, ki, kf, kl):
        return (qi, 0)

    kernel = functools.partial(_flash_attn_kernel, mxu_dtype=mxu_dtype)

    grid_spec = pltpu.PrefetchScalarGridSpec(
        num_scalar_prefetch=2,
        grid=(nq, nk_active),
        in_specs=[
            pl.BlockSpec((H, tq, D), q_map),       # q_rot, head-major
            pl.BlockSpec((H, tk, D), kv_map),      # k_rot, head-major
            pl.BlockSpec((H, tk, D), kv_map),      # v,     head-major
            pl.BlockSpec((tq, 1), segq_map),       # query segment ids
            pl.BlockSpec((1, tk), segk_map),       # key segment ids (lane-major)
        ],
        out_specs=pl.BlockSpec((tq, dim), out_map),
        scratch_shapes=[
            pltpu.VMEM((H, tq, 1), jnp.float32),   # running max
            pltpu.VMEM((H, tq, 1), jnp.float32),   # running denom
            pltpu.VMEM((H, tq, D), jnp.float32),   # output accumulator
        ],
    )

    return pl.pallas_call(
        kernel,
        grid_spec=grid_spec,
        out_shape=jax.ShapeDtypeStruct((S, dim), out_dtype),
        compiler_params=pltpu.CompilerParams(
            dimension_semantics=("parallel", "arbitrary"),
            vmem_limit_bytes=VMEM_LIMIT_BYTES),
    )(kfirst, klast, q_rot, k_rot, v, seg_col, seg_row)


# ----------------------------------------------------------------------------
# Full module forward.
# ----------------------------------------------------------------------------
def qwen_vision_flash_attention_forward(hidden_states, cu_seqlens, cos, sin,
                                        params, num_heads, *,
                                        mxu_dtype=jnp.bfloat16, tq=256, tk=256):
    """hidden_states: (S, dim); cu_seqlens: (n+1,) concrete int array (same
    host-side requirement as the torch module's `.item()`); cos/sin: (S, head_dim)."""
    S, dim = hidden_states.shape
    D = dim // num_heads
    tq = min(tq, S)
    tk = min(tk, S)
    assert S % tq == 0 and S % tk == 0 and tq % 8 == 0 and tk % 128 == 0

    # 1. qkv projection (tiled Pallas matmul); output stays lane-dense (S, 3*dim).
    qkv = pallas_linear(hidden_states, params["w_qkv"], params["b_qkv"],
                        out_dtype=mxu_dtype, mxu_dtype=mxu_dtype)

    # chunk(2, dim=-1)[0], then rebroadcast to full head_dim width so the RoPE
    # pre-pass consumes lane-dense (S, D) cos/sin blocks.
    cos_half = cos[:, : D // 2].astype(jnp.float32)
    sin_half = sin[:, : D // 2].astype(jnp.float32)
    cos_full = jnp.concatenate([cos_half, cos_half], axis=-1)
    sin_full = jnp.concatenate([sin_half, sin_half], axis=-1)

    # 2. RoPE + head-major split pre-pass (q pre-scaled by 1/sqrt(D)).
    q_rot, k_rot, v = pallas_rope_split(qkv, cos_full, sin_full, num_heads,
                                        mxu_dtype=mxu_dtype)

    # Host-side varlen bookkeeping (cu_seqlens is concrete, mirroring the
    # original module): segment ids and the contiguous active kv-tile range
    # per query tile; the kv grid is compressed to the maximum active count so
    # dead (q, kv) tile pairs never become grid steps.
    cu = np.asarray(jax.device_get(cu_seqlens)).astype(np.int64)
    pos = np.arange(S)
    seg_np = (pos[:, None] >= cu[None, 1:-1]).sum(axis=1).astype(np.int32)
    nq, nk = S // tq, S // tk
    q_seg = seg_np.reshape(nq, tq)
    k_seg = seg_np.reshape(nk, tk)
    overlap = ((k_seg[:, -1][None, :] >= q_seg[:, 0][:, None]) &
               (k_seg[:, 0][None, :] <= q_seg[:, -1][:, None]))
    kfirst = np.argmax(overlap, axis=1).astype(np.int32)
    klast = (nk - 1 - np.argmax(overlap[:, ::-1], axis=1)).astype(np.int32)
    nk_active = int((klast - kfirst).max()) + 1

    seg_col = jnp.asarray(seg_np.reshape(S, 1))   # query side (sublane-major)
    seg_row = jnp.asarray(seg_np.reshape(1, S))   # key side   (lane-major)

    # 3. flash attention with compressed kv grid -> (S, dim), lane-dense.
    attn = pallas_flash_attention(
        q_rot, k_rot, v, seg_col, seg_row,
        jnp.asarray(kfirst), jnp.asarray(klast), nk_active,
        tq=tq, tk=tk, mxu_dtype=mxu_dtype, out_dtype=mxu_dtype)

    # 4. output projection (tiled Pallas matmul).
    return pallas_linear(attn, params["w_proj"], params["b_proj"],
                         out_dtype=hidden_states.dtype, mxu_dtype=mxu_dtype)


# ----------------------------------------------------------------------------
# Pure-JAX reference (for correctness check only).
# ----------------------------------------------------------------------------
def reference_forward(hidden_states, cu_seqlens, cos, sin, params, num_heads):
    S, dim = hidden_states.shape
    D = dim // num_heads
    qkv = hidden_states @ params["w_qkv"] + params["b_qkv"]
    qkv = qkv.reshape(S, 3, num_heads, D)
    q, k, v = qkv[:, 0], qkv[:, 1], qkv[:, 2]     # (S, H, D)

    c = cos[:, None, : D // 2]
    s_ = sin[:, None, : D // 2]

    def rope(x):
        x1, x2 = x[..., : D // 2], x[..., D // 2:]
        return jnp.concatenate([x1 * c - x2 * s_, x2 * c + x1 * s_], axis=-1)

    q, k = rope(q), rope(k)
    scale = 1.0 / math.sqrt(D)
    scores = jnp.einsum("qhd,khd->hqk", q, k) * scale

    positions = jnp.arange(S)
    seg = jnp.sum((positions[:, None] >= cu_seqlens[None, 1:-1]).astype(jnp.int32), 1)
    mask = seg[None, :, None] == seg[None, None, :]
    scores = jnp.where(mask, scores, -jnp.inf)
    p = jax.nn.softmax(scores, axis=-1)
    o = jnp.einsum("hqk,khd->qhd", p, v).reshape(S, dim)
    return o @ params["w_proj"] + params["b_proj"]


if __name__ == "__main__":
    SEQ = 512
    NUM_HEADS = 4
    HEAD_DIM = 32
    DIM = NUM_HEADS * HEAD_DIM  # 128

    key = jax.random.PRNGKey(0)
    k_x, k_wqkv, k_bqkv, k_wproj, k_bproj = jax.random.split(key, 5)

    hidden_states = jax.random.normal(k_x, (SEQ, DIM), dtype=jnp.float32)

    # Parameters stored as (in, out) for x @ W.
    params = {
        "w_qkv": jax.random.normal(k_wqkv, (DIM, 3 * DIM), jnp.float32) * 0.05,
        "b_qkv": jax.random.normal(k_bqkv, (3 * DIM,), jnp.float32) * 0.05,
        "w_proj": jax.random.normal(k_wproj, (DIM, DIM), jnp.float32) * 0.05,
        "b_proj": jax.random.normal(k_bproj, (DIM,), jnp.float32) * 0.05,
    }

    # Five variable-length segments: boundaries inside tiles exercise the
    # intra-tile mask, short segments exercise kv-grid compression
    # (nk_active = 2 < nk = 4 at tq = tk = 128).
    cu_seqlens = jnp.array([0, 64, 128, 256, 320, 512], dtype=jnp.int32)

    # position_embeddings (cos, sin) of shape (seq, head_dim), standard rotary.
    inv_freq = 1.0 / (10000.0 ** (jnp.arange(0, HEAD_DIM // 2, dtype=jnp.float32)
                                  / (HEAD_DIM // 2)))
    rotary = jnp.arange(SEQ, dtype=jnp.float32)[:, None] * inv_freq[None, :]
    emb = jnp.concatenate([rotary, rotary], axis=-1)      # (SEQ, HEAD_DIM)
    cos, sin = jnp.cos(emb), jnp.sin(emb)

    # Production path: bf16 MXU operands, f32 accumulation / softmax.
    out_bf16 = qwen_vision_flash_attention_forward(
        hidden_states, cu_seqlens, cos, sin, params, NUM_HEADS,
        mxu_dtype=jnp.bfloat16, tq=128, tk=128)
    # Full-f32 path: tight correctness check of kernel logic.
    out_f32 = qwen_vision_flash_attention_forward(
        hidden_states, cu_seqlens, cos, sin, params, NUM_HEADS,
        mxu_dtype=jnp.float32, tq=128, tk=128)
    out_bf16, out_f32 = jax.block_until_ready((out_bf16, out_f32))

    ref = reference_forward(hidden_states, cu_seqlens, cos, sin, params, NUM_HEADS)

    assert out_bf16.shape == (SEQ, DIM) and out_f32.shape == (SEQ, DIM)
    assert jnp.allclose(out_f32, ref, atol=2e-3, rtol=2e-3), "f32 path mismatch"
    assert jnp.allclose(out_bf16, ref, atol=6e-2, rtol=6e-2), "bf16 path mismatch"

    print("KERNEL_OK")
</pallas_src>

<mosaic_0001>
module attributes {stable_mosaic.version = 11 : i64} {
  func.func @_linear_kernel(%arg0: i32, %arg1: i32, %arg2: i32, %arg3: memref<512x128xbf16, #tpu.memory_space<vmem>>, %arg4: memref<128x384xbf16, #tpu.memory_space<vmem>>, %arg5: memref<1x384xf32, #tpu.memory_space<vmem>>, %arg6: memref<512x384xbf16, #tpu.memory_space<vmem>>, %arg7: memref<512x384xf32, #tpu.memory_space<vmem>>) attributes {dimension_semantics = [#tpu.dimension_semantics<parallel>, #tpu.dimension_semantics<parallel>, #tpu.dimension_semantics<arbitrary>], iteration_bounds = array<i64: 1, 1, 1>, scalar_prefetch = 0 : i64, scratch_operands = 1 : i64, tpu.core_type = #tpu.core_type<tc>, window_params = [{transform_indices = @transform_0, window_bounds = array<i64: 512, 128>}, {transform_indices = @transform_1, window_bounds = array<i64: 128, 384>}, {transform_indices = @transform_2, window_bounds = array<i64: 1, 384>}, {transform_indices = @transform_3, window_bounds = array<i64: 512, 384>}]} {
    %c0_i32 = arith.constant 0 : i32
    %0 = arith.cmpi eq, %arg2, %c0_i32 : i32
    %1 = arith.extui %0 : i1 to i32
    %c0_i32_0 = arith.constant 0 : i32
    %2 = arith.cmpi ne, %1, %c0_i32_0 : i32
    scf.if %2 {
      %cst_10 = arith.constant 0.000000e+00 : f32
      %12 = vector.broadcast %cst_10 : f32 to vector<512x384xf32>
      %c0_11 = arith.constant 0 : index
      %c0_12 = arith.constant 0 : index
      %13 = vector.load %arg7[%c0_11, %c0_12] : memref<512x384xf32, #tpu.memory_space<vmem>>, vector<512x384xf32>
      tpu.vector_store %arg7[%c0_11, %c0_12], %12 {strides = array<i32>} : memref<512x384xf32, #tpu.memory_space<vmem>>, vector<512x384xf32>,
    } else {
    }
    %c0 = arith.constant 0 : index
    %c0_1 = arith.constant 0 : index
    %3 = vector.load %arg7[%c0, %c0_1] : memref<512x384xf32, #tpu.memory_space<vmem>>, vector<512x384xf32>
    %c0_2 = arith.constant 0 : index
    %c0_3 = arith.constant 0 : index
    %4 = vector.load %arg3[%c0_2, %c0_3] : memref<512x128xbf16, #tpu.memory_space<vmem>>, vector<512x128xbf16>
    %c0_4 = arith.constant 0 : index
    %c0_5 = arith.constant 0 : index
    %5 = vector.load %arg4[%c0_4, %c0_5] : memref<128x384xbf16, #tpu.memory_space<vmem>>, vector<128x384xbf16>
    %cst = arith.constant dense<0.000000e+00> : vector<512x384xf32>
    %6 = tpu.matmul %4, %5, %cst {dimension_numbers = #tpu.dot_dimension_numbers<[1], [0], [0], [1], [0, 0, 1, 1], [], []>} : vector<512x128xbf16>, vector<128x384xbf16>, vector<512x384xf32> -> vector<512x384xf32>
    %7 = arith.addf %3, %6 : vector<512x384xf32>
    %c0_6 = arith.constant 0 : index
    %c0_7 = arith.constant 0 : index
    %8 = vector.load %arg7[%c0_6, %c0_7] : memref<512x384xf32, #tpu.memory_space<vmem>>, vector<512x384xf32>
    tpu.vector_store %arg7[%c0_6, %c0_7], %7 {strides = array<i32>} : memref<512x384xf32, #tpu.memory_space<vmem>>, vector<512x384xf32>,
    %c0_i32_8 = arith.constant 0 : i32
    %9 = arith.cmpi eq, %arg2, %c0_i32_8 : i32
    %10 = arith.extui %9 : i1 to i32
    %c0_i32_9 = arith.constant 0 : i32
    %11 = arith.cmpi ne, %10, %c0_i32_9 : i32
    scf.if %11 {
      %c0_10 = arith.constant 0 : index
      %c0_11 = arith.constant 0 : index
      %12 = vector.load %arg7[%c0_10, %c0_11] : memref<512x384xf32, #tpu.memory_space<vmem>>, vector<512x384xf32>
      %c0_12 = arith.constant 0 : index
      %c0_13 = arith.constant 0 : index
      %13 = vector.load %arg5[%c0_12, %c0_13] : memref<1x384xf32, #tpu.memory_space<vmem>>, vector<1x384xf32>
      %14 = vector.broadcast %13 : vector<1x384xf32> to vector<512x384xf32>
      %15 = arith.addf %12, %14 : vector<512x384xf32>
      %16 = arith.truncf %15 : vector<512x384xf32> to vector<512x384xbf16>
      %c0_14 = arith.constant 0 : index
      %c0_15 = arith.constant 0 : index
      %17 = vector.load %arg6[%c0_14, %c0_15] : memref<512x384xbf16, #tpu.memory_space<vmem>>, vector<512x384xbf16>
      tpu.vector_store %arg6[%c0_14, %c0_15], %16 {strides = array<i32>} : memref<512x384xbf16, #tpu.memory_space<vmem>>, vector<512x384xbf16>,
    } else {
    }
    return
  }
  func.func @transform_0(%arg0: i32, %arg1: i32, %arg2: i32) -> (i32, i32) {
    %c0_i32 = arith.constant 0 : i32
    return %arg0, %arg2 : i32, i32
  }
  func.func @transform_1(%arg0: i32, %arg1: i32, %arg2: i32) -> (i32, i32) {
    %c0_i32 = arith.constant 0 : i32
    return %arg2, %arg1 : i32, i32
  }
  func.func @transform_2(%arg0: i32, %arg1: i32, %arg2: i32) -> (i32, i32) {
    %c0_i32 = arith.constant 0 : i32
    %c0_i32_0 = arith.constant 0 : i32
    return %c0_i32, %arg1 : i32, i32
  }
  func.func @transform_3(%arg0: i32, %arg1: i32, %arg2: i32) -> (i32, i32) {
    %c0_i32 = arith.constant 0 : i32
    return %arg0, %arg1 : i32, i32
  }
}

</mosaic_0001>

<llo_original>
// kernel: tpu_custom_call.1
$region0: #{tpu_custom_call.1}
  #allocation0 [shape = 'u32[]', space=smem, size = 0x4, offset = 0x4, fixed_abs, tag = 'smem constant byte address 0x4 - core index']
  #allocation1 [shape = 'u32[144,128]{1,0:T(1,128)}', space=vmem, size = 0x12000, scoped, tag = 'internal scratch']
  #allocation2 [shape = 'f32[512,384]{1,0:T(8,128)}', space=vmem, size = 0xc0000, scoped, tag = 'scratch operand']
  %s0 = inlined_call_operand.hbm [shape: bf16[512,128], index: 0, kind: input, shape index: {}]
  %s1 = inlined_call_operand.hbm [shape: bf16[128,384], index: 1, kind: input, shape index: {}]
  %s2 = inlined_call_operand.vmem [shape: f32[1,384], index: 2, kind: input, shape index: {}]
  %s3 = inlined_call_operand.hbm [shape: bf16[512,384], index: 3, kind: output, shape index: {}]
  %s4 = sld [smem:[#allocation0]]
  $region38: #{tpu_custom_call.1} parent=0
    _
  %s6 = ssub.s32 1, %s4
  %s7 = scalar_select 0, %s6, %s4
  $region1: #{tpu_custom_call.1} parent=0
    #allocation3 [shape = 'u8[131072]{0}', space=vmem, size = 0x20000, scoped, tag = 'input window, operand 0, single buffered']
    #allocation4 [shape = 's32[1]{0}', space=sflag, size = 0x4, scoped, tag = 'scoped memory for tpu_custom_call.1']
    #allocation5 [shape = 's32[1]{0}', space=sflag, size = 0x4, scoped, tag = 'scoped memory for tpu_custom_call.1']
    #allocation6 [shape = 'u8[98304]{0}', space=vmem, size = 0x18000, scoped, tag = 'input window, operand 1, single buffered']
    #allocation7 [shape = 's32[1]{0}', space=sflag, size = 0x4, scoped, tag = 'scoped memory for tpu_custom_call.1']
    #allocation8 [shape = 'u8[393216]{0}', space=vmem, size = 0x60000, scoped, tag = 'output window, operand 0, single buffered']
    %8 = vsyncpa [#allocation4], 0
    %9 = vsyncpa [#allocation7], 0
    %10 = vsyncpa [#allocation5], 0
    // Predicated region
    $region2: #{tpu_custom_call.1} parent=1 // pred_check
      _
    $region3: #{tpu_custom_call.1} parent=1 // pred_check_branch
      %12 = sbr.rel (0) target = $region5
    $region4: #{tpu_custom_call.1} parent=1 // pred_region
      %s14 = ssub.s32 4096, 4096
      %15 = vsyncadd [#allocation4], %s14
      %s16 = sshll.u32 [#allocation3], 4
      %s17 = int_to_ptr.vmem [resolvable:$true] %s16
      %22 = dma.hbm_to_vmem [thread:$0]  %s0, 4096, %s17, [#allocation4], 64, 64, 4
    $region5: #{tpu_custom_call.1} parent=1 // pred_fallthru
      _
    // Predicated region
    $region6: #{tpu_custom_call.1} parent=1 // pred_check
      _
    $region7: #{tpu_custom_call.1} parent=1 // pred_check_branch
      %24 = sbr.rel (0) target = $region9
    $region8: #{tpu_custom_call.1} parent=1 // pred_region
      %s26 = ssub.s32 3072, 3072
      %27 = vsyncadd [#allocation7], %s26
      %s28 = sshll.u32 [#allocation6], 4
      %s29 = int_to_ptr.vmem [resolvable:$true] %s28
      %34 = dma.hbm_to_vmem [thread:$0]  %s1, 3072, %s29, [#allocation7], 192, 192, 12
    $region9: #{tpu_custom_call.1} parent=1 // pred_fallthru
      _
    // Predicated region
    $region10: #{tpu_custom_call.1} parent=1 // pred_check
      _
    $region11: #{tpu_custom_call.1} parent=1 // pred_check_branch
      %36 = sbr.rel (0) target = $region13
    $region12: #{tpu_custom_call.1} parent=1 // pred_region
      _
    $region13: #{tpu_custom_call.1} parent=1 // pred_fallthru
      _
    // Predicated region
    $region14: #{tpu_custom_call.1} parent=1 // pred_check
      _
    $region15: #{tpu_custom_call.1} parent=1 // pred_check_branch
      %38 = sbr.rel (0) target = $region17
    $region16: #{tpu_custom_call.1} parent=1 // pred_region
      %39 = dma.done [#allocation4], 4096
    $region17: #{tpu_custom_call.1} parent=1 // pred_fallthru
      _
    // Predicated region
    $region18: #{tpu_custom_call.1} parent=1 // pred_check
      _
    $region19: #{tpu_custom_call.1} parent=1 // pred_check_branch
      %41 = sbr.rel (0) target = $region21
    $region20: #{tpu_custom_call.1} parent=1 // pred_region
      %42 = dma.done [#allocation7], 3072
    $region21: #{tpu_custom_call.1} parent=1 // pred_fallthru
      _
    %p44 = scmp.eq.s32.totalorder 0, 0
    // Predicated region
    $region22: #{tpu_custom_call.1} parent=1 // pred_check
      %p45 = pneg %p44
    $region23: #{tpu_custom_call.1} parent=1 // pred_check_branch
      %47 = sbr.rel (%p45) target = $region25
    $region24: #{tpu_custom_call.1} parent=1 // pred_region
      %48 = vst [vmem:[#allocation2] sm:$0xff] 0.0
      %49 = vst [vmem:[#allocation2 + $0x8] sm:$0xff] 0.0
      %50 = vst [vmem:[#allocation2 + $0x10] sm:$0xff] 0.0
      %51 = vst [vmem:[#allocation2 + $0x18] sm:$0xff] 0.0
      %52 = vst [vmem:[#allocation2 + $0x20] sm:$0xff] 0.0
      %53 = vst [vmem:[#allocation2 + $0x28] sm:$0xff] 0.0
      %54 = vst [vmem:[#allocation2 + $0x30] sm:$0xff] 0.0
      %55 = vst [vmem:[#allocation2 + $0x38] sm:$0xff] 0.0
      %56 = vst [vmem:[#allocation2 + $0x40] sm:$0xff] 0.0
      %57 = vst [vmem:[#allocation2 + $0x48] sm:$0xff] 0.0
      %58 = vst [vmem:[#allocation2 + $0x50] sm:$0xff] 0.0
      %59 = vst [vmem:[#allocation2 + $0x58] sm:$0xff] 0.0
      %60 = vst [vmem:[#allocation2 + $0x60] sm:$0xff] 0.0
      %61 = vst [vmem:[#allocation2 + $0x68] sm:$0xff] 0.0
      %62 = vst [vmem:[#allocation2 + $0x70] sm:$0xff] 0.0
      %63 = vst [vmem:[#allocation2 + $0x78] sm:$0xff] 0.0
      %64 = vst [vmem:[#allocation2 + $0x80] sm:$0xff] 0.0
      %65 = vst [vmem:[#allocation2 + $0x88] sm:$0xff] 0.0
      %66 = vst [vmem:[#allocation2 + $0x90] sm:$0xff] 0.0
      %67 = vst [vmem:[#allocation2 + $0x98] sm:$0xff] 0.0
      %68 = vst [vmem:[#allocation2 + $0xa0] sm:$0xff] 0.0
      %69 = vst [vmem:[#allocation2 + $0xa8] sm:$0xff] 0.0
      %70 = vst [vmem:[#allocation2 + $0xb0] sm:$0xff] 0.0
      %71 = vst [vmem:[#allocation2 + $0xb8] sm:$0xff] 0.0
      %72 = vst [vmem:[#allocation2 + $0xc0] sm:$0xff] 0.0
      %73 = vst [vmem:[#allocation2 + $0xc8] sm:$0xff] 0.0
      %74 = vst [vmem:[#allocation2 + $0xd0] sm:$0xff] 0.0
      %75 = vst [vmem:[#allocation2 + $0xd8] sm:$0xff] 0.0
      %76 = vst [vmem:[#allocation2 + $0xe0] sm:$0xff] 0.0
      %77 = vst [vmem:[#allocation2 + $0xe8] sm:$0xff] 0.0
      %78 = vst [vmem:[#allocation2 + $0xf0] sm:$0xff] 0.0
      %79 = vst [vmem:[#allocation2 + $0xf8] sm:$0xff] 0.0
      %80 = vst [vmem:[#allocation2 + $0x100] sm:$0xff] 0.0
      %81 = vst [vmem:[#allocation2 + $0x108] sm:$0xff] 0.0
      %82 = vst [vmem:[#allocation2 + $0x110] sm:$0xff] 0.0
      %83 = vst [vmem:[#allocation2 + $0x118] sm:$0xff] 0.0
      %84 = vst [vmem:[#allocation2 + $0x120] sm:$0xff] 0.0
      %85 = vst [vmem:[#allocation2 + $0x128] sm:$0xff] 0.0
      %86 = vst [vmem:[#allocation2 + $0x130] sm:$0xff] 0.0
      %87 = vst [vmem:[#allocation2 + $0x138] sm:$0xff] 0.0
      %88 = vst [vmem:[#allocation2 + $0x140] sm:$0xff] 0.0
      %89 = vst [vmem:[#allocation2 + $0x148] sm:$0xff] 0.0
      %90 = vst [vmem:[#allocation2 + $0x150] sm:$0xff] 0.0
      %91 = vst [vmem:[#allocation2 + $0x158] sm:$0xff] 0.0
      %92 = vst [vmem:[#allocation2 + $0x160] sm:$0xff] 0.0
      %93 = vst [vmem:[#allocation2 + $0x168] sm:$0xff] 0.0
      %94 = vst [vmem:[#allocation2 + $0x170] sm:$0xff] 0.0
      %95 = vst [vmem:[#allocation2 + $0x178] sm:$0xff] 0.0
      %96 = vst [vmem:[#allocation2 + $0x180] sm:$0xff] 0.0
      %97 = vst [vmem:[#allocation2 + $0x188] sm:$0xff] 0.0
      %98 = vst [vmem:[#allocation2 + $0x190] sm:$0xff] 0.0
      %99 = vst [vmem:[#allocation2 + $0x198] sm:$0xff] 0.0
      %100 = vst [vmem:[#allocation2 + $0x1a0] sm:$0xff] 0.0
      %101 = vst [vmem:[#allocation2 + $0x1a8] sm:$0xff] 0.0
      %102 = vst [vmem:[#allocation2 + $0x1b0] sm:$0xff] 0.0
      %103 = vst [vmem:[#allocation2 + $0x1b8] sm:$0xff] 0.0
      %104 = vst [vmem:[#allocation2 + $0x1c0] sm:$0xff] 0.0
      %105 = vst [vmem:[#allocation2 + $0x1c8] sm:$0xff] 0.0
      %106 = vst [vmem:[#allocation2 + $0x1d0] sm:$0xff] 0.0
      %107 = vst [vmem:[#allocation2 + $0x1d8] sm:$0xff] 0.0
      %108 = vst [vmem:[#allocation2 + $0x1e0] sm:$0xff] 0.0
      %109 = vst [vmem:[#allocation2 + $0x1e8] sm:$0xff] 0.0
      %110 = vst [vmem:[#allocation2 + $0x1f0] sm:$0xff] 0.0
      %111 = vst [vmem:[#allocation2 + $0x1f8] sm:$0xff] 0.0
      %112 = vst [vmem:[#allocation2 + $0x200] sm:$0xff] 0.0
      %113 = vst [vmem:[#allocation2 + $0x208] sm:$0xff] 0.0
      %114 = vst [vmem:[#allocation2 + $0x210] sm:$0xff] 0.0
      %115 = vst [vmem:[#allocation2 + $0x218] sm:$0xff] 0.0
      %116 = vst [vmem:[#allocation2 + $0x220] sm:$0xff] 0.0
      %117 = vst [vmem:[#allocation2 + $0x228] sm:$0xff] 0.0
      %118 = vst [vmem:[#allocation2 + $0x230] sm:$0xff] 0.0
      %119 = vst [vmem:[#allocation2 + $0x238] sm:$0xff] 0.0
      %120 = vst [vmem:[#allocation2 + $0x240] sm:$0xff] 0.0
      %121 = vst [vmem:[#allocation2 + $0x248] sm:$0xff] 0.0
      %122 = vst [vmem:[#allocation2 + $0x250] sm:$0xff] 0.0
      %123 = vst [vmem:[#allocation2 + $0x258] sm:$0xff] 0.0
      %124 = vst [vmem:[#allocation2 + $0x260] sm:$0xff] 0.0
      %125 = vst [vmem:[#allocation2 + $0x268] sm:$0xff] 0.0
      %126 = vst [vmem:[#allocation2 + $0x270] sm:$0xff] 0.0
      %127 = vst [vmem:[#allocation2 + $0x278] sm:$0xff] 0.0
      %128 = vst [vmem:[#allocation2 + $0x280] sm:$0xff] 0.0
      %129 = vst [vmem:[#allocation2 + $0x288] sm:$0xff] 0.0
      %130 = vst [vmem:[#allocation2 + $0x290] sm:$0xff] 0.0
      %131 = vst [vmem:[#allocation2 + $0x298] sm:$0xff] 0.0
      %132 = vst [vmem:[#allocation2 + $0x2a0] sm:$0xff] 0.0
      %133 = vst [vmem:[#allocation2 + $0x2a8] sm:$0xff] 0.0
      %134 = vst [vmem:[#allocation2 + $0x2b0] sm:$0xff] 0.0
      %135 = vst [vmem:[#allocation2 + $0x2b8] sm:$0xff] 0.0
      %136 = vst [vmem:[#allocation2 + $0x2c0] sm:$0xff] 0.0
      %137 = vst [vmem:[#allocation2 + $0x2c8] sm:$0xff] 0.0
      %138 = vst [vmem:[#allocation2 + $0x2d0] sm:$0xff] 0.0
      %139 = vst [vmem:[#allocation2 + $0x2d8] sm:$0xff] 0.0
      %140 = vst [vmem:[#allocation2 + $0x2e0] sm:$0xff] 0.0
      %141 = vst [vmem:[#allocation2 + $0x2e8] sm:$0xff] 0.0
      %142 = vst [vmem:[#allocation2 + $0x2f0] sm:$0xff] 0.0
      %143 = vst [vmem:[#allocation2 + $0x2f8] sm:$0xff] 0.0
      %144 = vst [vmem:[#allocation2 + $0x300] sm:$0xff] 0.0
      %145 = vst [vmem:[#allocation2 + $0x308] sm:$0xff] 0.0
      %146 = vst [vmem:[#allocation2 + $0x310] sm:$0xff] 0.0
      %147 = vst [vmem:[#allocation2 + $0x318] sm:$0xff] 0.0
      %148 = vst [vmem:[#allocation2 + $0x320] sm:$0xff] 0.0
      %149 = vst [vmem:[#allocation2 + $0x328] sm:$0xff] 0.0
      %150 = vst [vmem:[#allocation2 + $0x330] sm:$0xff] 0.0
      %151 = vst [vmem:[#allocation2 + $0x338] sm:$0xff] 0.0
      %152 = vst [vmem:[#allocation2 + $0x340] sm:$0xff] 0.0
      %153 = vst [vmem:[#allocation2 + $0x348] sm:$0xff] 0.0
      %154 = vst [vmem:[#allocation2 + $0x350] sm:$0xff] 0.0
      %155 = vst [vmem:[#allocation2 + $0x358] sm:$0xff] 0.0
      %156 = vst [vmem:[#allocation2 + $0x360] sm:$0xff] 0.0
      %157 = vst [vmem:[#allocation2 + $0x368] sm:$0xff] 0.0
      %158 = vst [vmem:[#allocation2 + $0x370] sm:$0xff] 0.0
      %159 = vst [vmem:[#allocation2 + $0x378] sm:$0xff] 0.0
      %160 = vst [vmem:[#allocation2 + $0x380] sm:$0xff] 0.0
      %161 = vst [vmem:[#allocation2 + $0x388] sm:$0xff] 0.0
      %162 = vst [vmem:[#allocation2 + $0x390] sm:$0xff] 0.0
      %163 = vst [vmem:[#allocation2 + $0x398] sm:$0xff] 0.0
      %164 = vst [vmem:[#allocation2 + $0x3a0] sm:$0xff] 0.0
      %165 = vst [vmem:[#allocation2 + $0x3a8] sm:$0xff] 0.0
      %166 = vst [vmem:[#allocation2 + $0x3b0] sm:$0xff] 0.0
      %167 = vst [vmem:[#allocation2 + $0x3b8] sm:$0xff] 0.0
      %168 = vst [vmem:[#allocation2 + $0x3c0] sm:$0xff] 0.0
      %169 = vst [vmem:[#allocation2 + $0x3c8] sm:$0xff] 0.0
      %170 = vst [vmem:[#allocation2 + $0x3d0] sm:$0xff] 0.0
      %171 = vst [vmem:[#allocation2 + $0x3d8] sm:$0xff] 0.0
      %172 = vst [vmem:[#allocation2 + $0x3e0] sm:$0xff] 0.0
      %173 = vst [vmem:[#allocation2 + $0x3e8] sm:$0xff] 0.0
      %174 = vst [vmem:[#allocation2 + $0x3f0] sm:$0xff] 0.0
      %175 = vst [vmem:[#allocation2 + $0x3f8] sm:$0xff] 0.0
      %176 = vst [vmem:[#allocation2 + $0x400] sm:$0xff] 0.0
      %177 = vst [vmem:[#allocation2 + $0x408] sm:$0xff] 0.0
      %178 = vst [vmem:[#allocation2 + $0x410] sm:$0xff] 0.0
      %179 = vst [vmem:[#allocation2 + $0x418] sm:$0xff] 0.0
      %180 = vst [vmem:[#allocation2 + $0x420] sm:$0xff] 0.0
      %181 = vst [vmem:[#allocation2 + $0x428] sm:$0xff] 0.0
      %182 = vst [vmem:[#allocation2 + $0x430] sm:$0xff] 0.0
      %183 = vst [vmem:[#allocation2 + $0x438] sm:$0xff] 0.0
      %184 = vst [vmem:[#allocation2 + $0x440] sm:$0xff] 0.0
      %185 = vst [vmem:[#allocation2 + $0x448] sm:$0xff] 0.0
      %186 = vst [vmem:[#allocation2 + $0x450] sm:$0xff] 0.0
      %187 = vst [vmem:[#allocation2 + $0x458] sm:$0xff] 0.0
      %188 = vst [vmem:[#allocation2 + $0x460] sm:$0xff] 0.0
      %189 = vst [vmem:[#allocation2 + $0x468] sm:$0xff] 0.0
      %190 = vst [vmem:[#allocation2 + $0x470] sm:$0xff] 0.0
      %191 = vst [vmem:[#allocation2 + $0x478] sm:$0xff] 0.0
      %192 = vst [vmem:[#allocation2 + $0x480] sm:$0xff] 0.0
      %193 = vst [vmem:[#allocation2 + $0x488] sm:$0xff] 0.0
      %194 = vst [vmem:[#allocation2 + $0x490] sm:$0xff] 0.0
      %195 = vst [vmem:[#allocation2 + $0x498] sm:$0xff] 0.0
      %196 = vst [vmem:[#allocation2 + $0x4a0] sm:$0xff] 0.0
      %197 = vst [vmem:[#allocation2 + $0x4a8] sm:$0xff] 0.0
      %198 = vst [vmem:[#allocation2 + $0x4b0] sm:$0xff] 0.0
      %199 = vst [vmem:[#allocation2 + $0x4b8] sm:$0xff] 0.0
      %200 = vst [vmem:[#allocation2 + $0x4c0] sm:$0xff] 0.0
      %201 = vst [vmem:[#allocation2 + $0x4c8] sm:$0xff] 0.0
      %202 = vst [vmem:[#allocation2 + $0x4d0] sm:$0xff] 0.0
      %203 = vst [vmem:[#allocation2 + $0x4d8] sm:$0xff] 0.0
      %204 = vst [vmem:[#allocation2 + $0x4e0] sm:$0xff] 0.0
      %205 = vst [vmem:[#allocation2 + $0x4e8] sm:$0xff] 0.0
      %206 = vst [vmem:[#allocation2 + $0x4f0] sm:$0xff] 0.0
      %207 = vst [vmem:[#allocation2 + $0x4f8] sm:$0xff] 0.0
      %208 = vst [vmem:[#allocation2 + $0x500] sm:$0xff] 0.0
      %209 = vst [vmem:[#allocation2 + $0x508] sm:$0xff] 0.0
      %210 = vst [vmem:[#allocation2 + $0x510] sm:$0xff] 0.0
      %211 = vst [vmem:[#allocation2 + $0x518] sm:$0xff] 0.0
      %212 = vst [vmem:[#allocation2 + $0x520] sm:$0xff] 0.0
      %213 = vst [vmem:[#allocation2 + $0x528] sm:$0xff] 0.0
      %214 = vst [vmem:[#allocation2 + $0x530] sm:$0xff] 0.0
      %215 = vst [vmem:[#allocation2 + $0x538] sm:$0xff] 0.0
      %216 = vst [vmem:[#allocation2 + $0x540] sm:$0xff] 0.0
      %217 = vst [vmem:[#allocation2 + $0x548] sm:$0xff] 0.0
      %218 = vst [vmem:[#allocation2 + $0x550] sm:$0xff] 0.0
      %219 = vst [vmem:[#allocation2 + $0x558] sm:$0xff] 0.0
      %220 = vst [vmem:[#allocation2 + $0x560] sm:$0xff] 0.0
      %221 = vst [vmem:[#allocation2 + $0x568] sm:$0xff] 0.0
      %222 = vst [vmem:[#allocation2 + $0x570] sm:$0xff] 0.0
      %223 = vst [vmem:[#allocation2 + $0x578] sm:$0xff] 0.0
      %224 = vst [vmem:[#allocation2 + $0x580] sm:$0xff] 0.0
      %225 = vst [vmem:[#allocation2 + $0x588] sm:$0xff] 0.0
      %226 = vst [vmem:[#allocation2 + $0x590] sm:$0xff] 0.0
      %227 = vst [vmem:[#allocation2 + $0x598] sm:$0xff] 0.0
      %228 = vst [vmem:[#allocation2 + $0x5a0] sm:$0xff] 0.0
      %229 = vst [vmem:[#allocation2 + $0x5a8] sm:$0xff] 0.0
      %230 = vst [vmem:[#allocation2 + $0x5b0] sm:$0xff] 0.0
      %231 = vst [vmem:[#allocation2 + $0x5b8] sm:$0xff] 0.0
      %232 = vst [vmem:[#allocation2 + $0x5c0] sm:$0xff] 0.0
      %233 = vst [vmem:[#allocation2 + $0x5c8] sm:$0xff] 0.0
      %234 = vst [vmem:[#allocation2 + $0x5d0] sm:$0xff] 0.0
      %235 = vst [vmem:[#allocation2 + $0x5d8] sm:$0xff] 0.0
      %236 = vst [vmem:[#allocation2 + $0x5e0] sm:$0xff] 0.0
      %237 = vst [vmem:[#allocation2 + $0x5e8] sm:$0xff] 0.0
      %238 = vst [vmem:[#allocation2 + $0x5f0] sm:$0xff] 0.0
      %239 = vst [vmem:[#allocation2 + $0x5f8] sm:$0xff] 0.0
    $region25: #{tpu_custom_call.1} parent=1 // pred_fallthru
      _
    %v240 = vld [vmem:[#allocation2] sm:$0xff]
    %v241 = vld [vmem:[#allocation2 + $0x8] sm:$0xff]
    %v242 = vld [vmem:[#allocation2 + $0x10] sm:$0xff]
    %v243 = vld [vmem:[#allocation2 + $0x18] sm:$0xff]
    %v244 = vld [vmem:[#allocation2 + $0x20] sm:$0xff]
    %v245 = vld [vmem:[#allocation2 + $0x28] sm:$0xff]
    %v246 = vld [vmem:[#allocation2 + $0x30] sm:$0xff]
    %v247 = vld [vmem:[#allocation2 + $0x38] sm:$0xff]
    %v248 = vld [vmem:[#allocation2 + $0x40] sm:$0xff]
    %v249 = vld [vmem:[#allocation2 + $0x48] sm:$0xff]
    %v250 = vld [vmem:[#allocation2 + $0x50] sm:$0xff]
    %v251 = vld [vmem:[#allocation2 + $0x58] sm:$0xff]
    %v252 = vld [vmem:[#allocation2 + $0x60] sm:$0xff]
    %v253 = vld [vmem:[#allocation2 + $0x68] sm:$0xff]
    %v254 = vld [vmem:[#allocation2 + $0x70] sm:$0xff]
    %v255 = vld [vmem:[#allocation2 + $0x78] sm:$0xff]
    %v256 = vld [vmem:[#allocation2 + $0x80] sm:$0xff]
    %v257 = vld [vmem:[#allocation2 + $0x88] sm:$0xff]
    %v258 = vld [vmem:[#allocation2 + $0x90] sm:$0xff]
    %v259 = vld [vmem:[#allocation2 + $0x98] sm:$0xff]
    %v260 = vld [vmem:[#allocation2 + $0xa0] sm:$0xff]
    %v261 = vld [vmem:[#allocation2 + $0xa8] sm:$0xff]
    %v262 = vld [vmem:[#allocation2 + $0xb0] sm:$0xff]
    %v263 = vld [vmem:[#allocation2 + $0xb8] sm:$0xff]
    %v264 = vld [vmem:[#allocation2 + $0xc0] sm:$0xff]
    %v265 = vld [vmem:[#allocation2 + $0xc8] sm:$0xff]
    %v266 = vld [vmem:[#allocation2 + $0xd0] sm:$0xff]
    %v267 = vld [vmem:[#allocation2 + $0xd8] sm:$0xff]
    %v268 = vld [vmem:[#allocation2 + $0xe0] sm:$0xff]
    %v269 = vld [vmem:[#allocation2 + $0xe8] sm:$0xff]
    %v270 = vld [vmem:[#allocation2 + $0xf0] sm:$0xff]
    %v271 = vld [vmem:[#allocation2 + $0xf8] sm:$0xff]
    %v272 = vld [vmem:[#allocation2 + $0x100] sm:$0xff]
    %v273 = vld [vmem:[#allocation2 + $0x108] sm:$0xff]
    %v274 = vld [vmem:[#allocation2 + $0x110] sm:$0xff]
    %v275 = vld [vmem:[#allocation2 + $0x118] sm:$0xff]
    %v276 = vld [vmem:[#allocation2 + $0x120] sm:$0xff]
    %v277 = vld [vmem:[#allocation2 + $0x128] sm:$0xff]
    %v278 = vld [vmem:[#allocation2 + $0x130] sm:$0xff]
    %v279 = vld [vmem:[#allocation2 + $0x138] sm:$0xff]
    %v280 = vld [vmem:[#allocation2 + $0x140] sm:$0xff]
    %v281 = vld [vmem:[#allocation2 + $0x148] sm:$0xff]
    %v282 = vld [vmem:[#allocation2 + $0x150] sm:$0xff]
    %v283 = vld [vmem:[#allocation2 + $0x158] sm:$0xff]
    %v284 = vld [vmem:[#allocation2 + $0x160] sm:$0xff]
    %v285 = vld [vmem:[#allocation2 + $0x168] sm:$0xff]
    %v286 = vld [vmem:[#allocation2 + $0x170] sm:$0xff]
    %v287 = vld [vmem:[#allocation2 + $0x178] sm:$0xff]
    %v288 = vld [vmem:[#allocation2 + $0x180] sm:$0xff]
    %v289 = vld [vmem:[#allocation2 + $0x188] sm:$0xff]
    %v290 = vld [vmem:[#allocation2 + $0x190] sm:$0xff]
    %v291 = vld [vmem:[#allocation2 + $0x198] sm:$0xff]
    %v292 = vld [vmem:[#allocation2 + $0x1a0] sm:$0xff]
    %v293 = vld [vmem:[#allocation2 + $0x1a8] sm:$0xff]
    %v294 = vld [vmem:[#allocation2 + $0x1b0] sm:$0xff]
    %v295 = vld [vmem:[#allocation2 + $0x1b8] sm:$0xff]
    %v296 = vld [vmem:[#allocation2 + $0x1c0] sm:$0xff]
    %v297 = vld [vmem:[#allocation2 + $0x1c8] sm:$0xff]
    %v298 = vld [vmem:[#allocation2 + $0x1d0] sm:$0xff]
    %v299 = vld [vmem:[#allocation2 + $0x1d8] sm:$0xff]
    %v300 = vld [vmem:[#allocation2 + $0x1e0] sm:$0xff]
    %v301 = vld [vmem:[#allocation2 + $0x1e8] sm:$0xff]
    %v302 = vld [vmem:[#allocation2 + $0x1f0] sm:$0xff]
    %v303 = vld [vmem:[#allocation2 + $0x1f8] sm:$0xff]
    %v304 = vld [vmem:[#allocation2 + $0x200] sm:$0xff]
    %v305 = vld [vmem:[#allocation2 + $0x208] sm:$0xff]
    %v306 = vld [vmem:[#allocation2 + $0x210] sm:$0xff]
    %v307 = vld [vmem:[#allocation2 + $0x218] sm:$0xff]
    %v308 = vld [vmem:[#allocation2 + $0x220] sm:$0xff]
    %v309 = vld [vmem:[#allocation2 + $0x228] sm:$0xff]
    %v310 = vld [vmem:[#allocation2 + $0x230] sm:$0xff]
    %v311 = vld [vmem:[#allocation2 + $0x238] sm:$0xff]
    %v312 = vld [vmem:[#allocation2 + $0x240] sm:$0xff]
    %v313 = vld [vmem:[#allocation2 + $0x248] sm:$0xff]
    %v314 = vld [vmem:[#allocation2 + $0x250] sm:$0xff]
    %v315 = vld [vmem:[#allocation2 + $0x258] sm:$0xff]
    %v316 = vld [vmem:[#allocation2 + $0x260] sm:$0xff]
    %v317 = vld [vmem:[#allocation2 + $0x268] sm:$0xff]
    %v318 = vld [vmem:[#allocation2 + $0x270] sm:$0xff]
    %v319 = vld [vmem:[#allocation2 + $0x278] sm:$0xff]
    %v320 = vld [vmem:[#allocation2 + $0x280] sm:$0xff]
    %v321 = vld [vmem:[#allocation2 + $0x288] sm:$0xff]
    %v322 = vld [vmem:[#allocation2 + $0x290] sm:$0xff]
    %v323 = vld [vmem:[#allocation2 + $0x298] sm:$0xff]
    %v324 = vld [vmem:[#allocation2 + $0x2a0] sm:$0xff]
    %v325 = vld [vmem:[#allocation2 + $0x2a8] sm:$0xff]
    %v326 = vld [vmem:[#allocation2 + $0x2b0] sm:$0xff]
    %v327 = vld [vmem:[#allocation2 + $0x2b8] sm:$0xff]
    %v328 = vld [vmem:[#allocation2 + $0x2c0] sm:$0xff]
    %v329 = vld [vmem:[#allocation2 + $0x2c8] sm:$0xff]
    %v330 = vld [vmem:[#allocation2 + $0x2d0] sm:$0xff]
    %v331 = vld [vmem:[#allocation2 + $0x2d8] sm:$0xff]
    %v332 = vld [vmem:[#allocation2 + $0x2e0] sm:$0xff]
    %v333 = vld [vmem:[#allocation2 + $0x2e8] sm:$0xff]
    %v334 = vld [vmem:[#allocation2 + $0x2f0] sm:$0xff]
    %v335 = vld [vmem:[#allocation2 + $0x2f8] sm:$0xff]
    %v336 = vld [vmem:[#allocation2 + $0x300] sm:$0xff]
    %v337 = vld [vmem:[#allocation2 + $0x308] sm:$0xff]
    %v338 = vld [vmem:[#allocation2 + $0x310] sm:$0xff]
    %v339 = vld [vmem:[#allocation2 + $0x318] sm:$0xff]
    %v340 = vld [vmem:[#allocation2 + $0x320] sm:$0xff]
    %v341 = vld [vmem:[#allocation2 + $0x328] sm:$0xff]
    %v342 = vld [vmem:[#allocation2 + $0x330] sm:$0xff]
    %v343 = vld [vmem:[#allocation2 + $0x338] sm:$0xff]
    %v344 = vld [vmem:[#allocation2 + $0x340] sm:$0xff]
    %v345 = vld [vmem:[#allocation2 + $0x348] sm:$0xff]
    %v346 = vld [vmem:[#allocation2 + $0x350] sm:$0xff]
    %v347 = vld [vmem:[#allocation2 + $0x358] sm:$0xff]
    %v348 = vld [vmem:[#allocation2 + $0x360] sm:$0xff]
    %v349 = vld [vmem:[#allocation2 + $0x368] sm:$0xff]
    %v350 = vld [vmem:[#allocation2 + $0x370] sm:$0xff]
    %v351 = vld [vmem:[#allocation2 + $0x378] sm:$0xff]
    %v352 = vld [vmem:[#allocation2 + $0x380] sm:$0xff]
    %v353 = vld [vmem:[#allocation2 + $0x388] sm:$0xff]
    %v354 = vld [vmem:[#allocation2 + $0x390] sm:$0xff]
    %v355 = vld [vmem:[#allocation2 + $0x398] sm:$0xff]
    %v356 = vld [vmem:[#allocation2 + $0x3a0] sm:$0xff]
    %v357 = vld [vmem:[#allocation2 + $0x3a8] sm:$0xff]
    %v358 = vld [vmem:[#allocation2 + $0x3b0] sm:$0xff]
    %v359 = vld [vmem:[#allocation2 + $0x3b8] sm:$0xff]
    %v360 = vld [vmem:[#allocation2 + $0x3c0] sm:$0xff]
    %v361 = vld [vmem:[#allocation2 + $0x3c8] sm:$0xff]
    %v362 = vld [vmem:[#allocation2 + $0x3d0] sm:$0xff]
    %v363 = vld [vmem:[#allocation2 + $0x3d8] sm:$0xff]
    %v364 = vld [vmem:[#allocation2 + $0x3e0] sm:$0xff]
    %v365 = vld [vmem:[#allocation2 + $0x3e8] sm:$0xff]
    %v366 = vld [vmem:[#allocation2 + $0x3f0] sm:$0xff]
    %v367 = vld [vmem:[#allocation2 + $0x3f8] sm:$0xff]
    %v368 = vld [vmem:[#allocation2 + $0x400] sm:$0xff]
    %v369 = vld [vmem:[#allocation2 + $0x408] sm:$0xff]
    %v370 = vld [vmem:[#allocation2 + $0x410] sm:$0xff]
    %v371 = vld [vmem:[#allocation2 + $0x418] sm:$0xff]
    %v372 = vld [vmem:[#allocation2 + $0x420] sm:$0xff]
    %v373 = vld [vmem:[#allocation2 + $0x428] sm:$0xff]
    %v374 = vld [vmem:[#allocation2 + $0x430] sm:$0xff]
    %v375 = vld [vmem:[#allocation2 + $0x438] sm:$0xff]
    %v376 = vld [vmem:[#allocation2 + $0x440] sm:$0xff]
    %v377 = vld [vmem:[#allocation2 + $0x448] sm:$0xff]
    %v378 = vld [vmem:[#allocation2 + $0x450] sm:$0xff]
    %v379 = vld [vmem:[#allocation2 + $0x458] sm:$0xff]
    %v380 = vld [vmem:[#allocation2 + $0x460] sm:$0xff]
    %v381 = vld [vmem:[#allocation2 + $0x468] sm:$0xff]
    %v382 = vld [vmem:[#allocation2 + $0x470] sm:$0xff]
    %v383 = vld [vmem:[#allocation2 + $0x478] sm:$0xff]
    %v384 = vld [vmem:[#allocation2 + $0x480] sm:$0xff]
    %v385 = vld [vmem:[#allocation2 + $0x488] sm:$0xff]
    %v386 = vld [vmem:[#allocation2 + $0x490] sm:$0xff]
    %v387 = vld [vmem:[#allocation2 + $0x498] sm:$0xff]
    %v388 = vld [vmem:[#allocation2 + $0x4a0] sm:$0xff]
    %v389 = vld [vmem:[#allocation2 + $0x4a8] sm:$0xff]
    %v390 = vld [vmem:[#allocation2 + $0x4b0] sm:$0xff]
    %v391 = vld [vmem:[#allocation2 + $0x4b8] sm:$0xff]
    %v392 = vld [vmem:[#allocation2 + $0x4c0] sm:$0xff]
    %v393 = vld [vmem:[#allocation2 + $0x4c8] sm:$0xff]
    %v394 = vld [vmem:[#allocation2 + $0x4d0] sm:$0xff]
    %v395 = vld [vmem:[#allocation2 + $0x4d8] sm:$0xff]
    %v396 = vld [vmem:[#allocation2 + $0x4e0] sm:$0xff]
    %v397 = vld [vmem:[#allocation2 + $0x4e8] sm:$0xff]
    %v398 = vld [vmem:[#allocation2 + $0x4f0] sm:$0xff]
    %v399 = vld [vmem:[#allocation2 + $0x4f8] sm:$0xff]
    %v400 = vld [vmem:[#allocation2 + $0x500] sm:$0xff]
    %v401 = vld [vmem:[#allocation2 + $0x508] sm:$0xff]
    %v402 = vld [vmem:[#allocation2 + $0x510] sm:$0xff]
    %v403 = vld [vmem:[#allocation2 + $0x518] sm:$0xff]
    %v404 = vld [vmem:[#allocation2 + $0x520] sm:$0xff]
    %v405 = vld [vmem:[#allocation2 + $0x528] sm:$0xff]
    %v406 = vld [vmem:[#allocation2 + $0x530] sm:$0xff]
    %v407 = vld [vmem:[#allocation2 + $0x538] sm:$0xff]
    %v408 = vld [vmem:[#allocation2 + $0x540] sm:$0xff]
    %v409 = vld [vmem:[#allocation2 + $0x548] sm:$0xff]
    %v410 = vld [vmem:[#allocation2 + $0x550] sm:$0xff]
    %v411 = vld [vmem:[#allocation2 + $0x558] sm:$0xff]
    %v412 = vld [vmem:[#allocation2 + $0x560] sm:$0xff]
    %v413 = vld [vmem:[#allocation2 + $0x568] sm:$0xff]
    %v414 = vld [vmem:[#allocation2 + $0x570] sm:$0xff]
    %v415 = vld [vmem:[#allocation2 + $0x578] sm:$0xff]
    %v416 = vld [vmem:[#allocation2 + $0x580] sm:$0xff]
    %v417 = vld [vmem:[#allocation2 + $0x588] sm:$0xff]
    %v418 = vld [vmem:[#allocation2 + $0x590] sm:$0xff]
    %v419 = vld [vmem:[#allocation2 + $0x598] sm:$0xff]
    %v420 = vld [vmem:[#allocation2 + $0x5a0] sm:$0xff]
    %v421 = vld [vmem:[#allocation2 + $0x5a8] sm:$0xff]
    %v422 = vld [vmem:[#allocation2 + $0x5b0] sm:$0xff]
    %v423 = vld [vmem:[#allocation2 + $0x5b8] sm:$0xff]
    %v424 = vld [vmem:[#allocation2 + $0x5c0] sm:$0xff]
    %v425 = vld [vmem:[#allocation2 + $0x5c8] sm:$0xff]
    %v426 = vld [vmem:[#allocation2 + $0x5d0] sm:$0xff]
    %v427 = vld [vmem:[#allocation2 + $0x5d8] sm:$0xff]
    %v428 = vld [vmem:[#allocation2 + $0x5e0] sm:$0xff]
    %v429 = vld [vmem:[#allocation2 + $0x5e8] sm:$0xff]
    %v430 = vld [vmem:[#allocation2 + $0x5f0] sm:$0xff]
    %v431 = vld [vmem:[#allocation2 + $0x5f8] sm:$0xff]
    %v432 = vld [vmem:[#allocation3] sm:$0xf]
    %v433 = vld [vmem:[#allocation3 + $0x4] sm:$0xf]
    %v434 = vld [vmem:[#allocation3 + $0x8] sm:$0xf]
    %v435 = vld [vmem:[#allocation3 + $0xc] sm:$0xf]
    %v436 = vld [vmem:[#allocation3 + $0x10] sm:$0xf]
    %v437 = vld [vmem:[#allocation3 + $0x14] sm:$0xf]
    %v438 = vld [vmem:[#allocation3 + $0x18] sm:$0xf]
    %v439 = vld [vmem:[#allocation3 + $0x1c] sm:$0xf]
    %v440 = vld [vmem:[#allocation3 + $0x20] sm:$0xf]
    %v441 = vld [vmem:[#allocation3 + $0x24] sm:$0xf]
    %v442 = vld [vmem:[#allocation3 + $0x28] sm:$0xf]
    %v443 = vld [vmem:[#allocation3 + $0x2c] sm:$0xf]
    %v444 = vld [vmem:[#allocation3 + $0x30] sm:$0xf]
    %v445 = vld [vmem:[#allocation3 + $0x34] sm:$0xf]
    %v446 = vld [vmem:[#allocation3 + $0x38] sm:$0xf]
    %v447 = vld [vmem:[#allocation3 + $0x3c] sm:$0xf]
    %v448 = vld [vmem:[#allocation3 + $0x40] sm:$0xf]
    %v449 = vld [vmem:[#allocation3 + $0x44] sm:$0xf]
    %v450 = vld [vmem:[#allocation3 + $0x48] sm:$0xf]
    %v451 = vld [vmem:[#allocation3 + $0x4c] sm:$0xf]
    %v452 = vld [vmem:[#allocation3 + $0x50] sm:$0xf]
    %v453 = vld [vmem:[#allocation3 + $0x54] sm:$0xf]
    %v454 = vld [vmem:[#allocation3 + $0x58] sm:$0xf]
    %v455 = vld [vmem:[#allocation3 + $0x5c] sm:$0xf]
    %v456 = vld [vmem:[#allocation3 + $0x60] sm:$0xf]
    %v457 = vld [vmem:[#allocation3 + $0x64] sm:$0xf]
    %v458 = vld [vmem:[#allocation3 + $0x68] sm:$0xf]
    %v459 = vld [vmem:[#allocation3 + $0x6c] sm:$0xf]
    %v460 = vld [vmem:[#allocation3 + $0x70] sm:$0xf]
    %v461 = vld [vmem:[#allocation3 + $0x74] sm:$0xf]
    %v462 = vld [vmem:[#allocation3 + $0x78] sm:$0xf]
    %v463 = vld [vmem:[#allocation3 + $0x7c] sm:$0xf]
    %v464 = vld [vmem:[#allocation3 + $0x80] sm:$0xf]
    %v465 = vld [vmem:[#allocation3 + $0x84] sm:$0xf]
    %v466 = vld [vmem:[#allocation3 + $0x88] sm:$0xf]
    %v467 = vld [vmem:[#allocation3 + $0x8c] sm:$0xf]
    %v468 = vld [vmem:[#allocation3 + $0x90] sm:$0xf]
    %v469 = vld [vmem:[#allocation3 + $0x94] sm:$0xf]
    %v470 = vld [vmem:[#allocation3 + $0x98] sm:$0xf]
    %v471 = vld [vmem:[#allocation3 + $0x9c] sm:$0xf]
    %v472 = vld [vmem:[#allocation3 + $0xa0] sm:$0xf]
    %v473 = vld [vmem:[#allocation3 + $0xa4] sm:$0xf]
    %v474 = vld [vmem:[#allocation3 + $0xa8] sm:$0xf]
    %v475 = vld [vmem:[#allocation3 + $0xac] sm:$0xf]
    %v476 = vld [vmem:[#allocation3 + $0xb0] sm:$0xf]
    %v477 = vld [vmem:[#allocation3 + $0xb4] sm:$0xf]
    %v478 = vld [vmem:[#allocation3 + $0xb8] sm:$0xf]
    %v479 = vld [vmem:[#allocation3 + $0xbc] sm:$0xf]
    %v480 = vld [vmem:[#allocation3 + $0xc0] sm:$0xf]
    %v481 = vld [vmem:[#allocation3 + $0xc4] sm:$0xf]
    %v482 = vld [vmem:[#allocation3 + $0xc8] sm:$0xf]
    %v483 = vld [vmem:[#allocation3 + $0xcc] sm:$0xf]
    %v484 = vld [vmem:[#allocation3 + $0xd0] sm:$0xf]
    %v485 = vld [vmem:[#allocation3 + $0xd4] sm:$0xf]
    %v486 = vld [vmem:[#allocation3 + $0xd8] sm:$0xf]
    %v487 = vld [vmem:[#allocation3 + $0xdc] sm:$0xf]
    %v488 = vld [vmem:[#allocation3 + $0xe0] sm:$0xf]
    %v489 = vld [vmem:[#allocation3 + $0xe4] sm:$0xf]
    %v490 = vld [vmem:[#allocation3 + $0xe8] sm:$0xf]
    %v491 = vld [vmem:[#allocation3 + $0xec] sm:$0xf]
    %v492 = vld [vmem:[#allocation3 + $0xf0] sm:$0xf]
    %v493 = vld [vmem:[#allocation3 + $0xf4] sm:$0xf]
    %v494 = vld [vmem:[#allocation3 + $0xf8] sm:$0xf]
    %v495 = vld [vmem:[#allocation3 + $0xfc] sm:$0xf]
    %v496 = vld [vmem:[#allocation6] sm:$0xff]
    %v497 = vld [vmem:[#allocation6 + $0x8] sm:$0xf]
    %v498 = vld [vmem:[#allocation6 + $0xc] sm:$0xff]
    %v499 = vld [vmem:[#allocation6 + $0x14] sm:$0xf]
    %v500 = vld [vmem:[#allocation6 + $0x18] sm:$0xff]
    %v501 = vld [vmem:[#allocation6 + $0x20] sm:$0xf]
    %v502 = vld [vmem:[#allocation6 + $0x24] sm:$0xff]
    %v503 = vld [vmem:[#allocation6 + $0x2c] sm:$0xf]
    %v504 = vld [vmem:[#allocation6 + $0x30] sm:$0xff]
    %v505 = vld [vmem:[#allocation6 + $0x38] sm:$0xf]
    %v506 = vld [vmem:[#allocation6 + $0x3c] sm:$0xff]
    %v507 = vld [vmem:[#allocation6 + $0x44] sm:$0xf]
    %v508 = vld [vmem:[#allocation6 + $0x48] sm:$0xff]
    %v509 = vld [vmem:[#allocation6 + $0x50] sm:$0xf]
    %v510 = vld [vmem:[#allocation6 + $0x54] sm:$0xff]
    %v511 = vld [vmem:[#allocation6 + $0x5c] sm:$0xf]
    %v512 = vld [vmem:[#allocation6 + $0x60] sm:$0xff]
    %v513 = vld [vmem:[#allocation6 + $0x68] sm:$0xf]
    %v514 = vld [vmem:[#allocation6 + $0x6c] sm:$0xff]
    %v515 = vld [vmem:[#allocation6 + $0x74] sm:$0xf]
    %v516 = vld [vmem:[#allocation6 + $0x78] sm:$0xff]
    %v517 = vld [vmem:[#allocation6 + $0x80] sm:$0xf]
    %v518 = vld [vmem:[#allocation6 + $0x84] sm:$0xff]
    %v519 = vld [vmem:[#allocation6 + $0x8c] sm:$0xf]
    %v520 = vld [vmem:[#allocation6 + $0x90] sm:$0xff]
    %v521 = vld [vmem:[#allocation6 + $0x98] sm:$0xf]
    %v522 = vld [vmem:[#allocation6 + $0x9c] sm:$0xff]
    %v523 = vld [vmem:[#allocation6 + $0xa4] sm:$0xf]
    %v524 = vld [vmem:[#allocation6 + $0xa8] sm:$0xff]
    %v525 = vld [vmem:[#allocation6 + $0xb0] sm:$0xf]
    %v526 = vld [vmem:[#allocation6 + $0xb4] sm:$0xff]
    %v527 = vld [vmem:[#allocation6 + $0xbc] sm:$0xf]
    %v592 = vunpack.c.l.b16 %v432
    %v593 = vunpack.c.l.b16 %v433
    %v594 = vunpack.c.l.b16 %v434
    %v595 = vunpack.c.l.b16 %v435
    %v596 = vunpack.c.l.b16 %v436
    %v597 = vunpack.c.l.b16 %v437
    %v598 = vunpack.c.l.b16 %v438
    %v599 = vunpack.c.l.b16 %v439
    %v600 = vunpack.c.l.b16 %v440
    %v601 = vunpack.c.l.b16 %v441
    %v602 = vunpack.c.l.b16 %v442
    %v603 = vunpack.c.l.b16 %v443
    %v604 = vunpack.c.l.b16 %v444
    %v605 = vunpack.c.l.b16 %v445
    %v606 = vunpack.c.l.b16 %v446
    %v607 = vunpack.c.l.b16 %v447
    %v608 = vunpack.c.l.b16 %v448
    %v609 = vunpack.c.l.b16 %v449
    %v610 = vunpack.c.l.b16 %v450
    %v611 = vunpack.c.l.b16 %v451
    %v612 = vunpack.c.l.b16 %v452
    %v613 = vunpack.c.l.b16 %v453
    %v614 = vunpack.c.l.b16 %v454
    %v615 = vunpack.c.l.b16 %v455
    %v616 = vunpack.c.l.b16 %v456
    %v617 = vunpack.c.l.b16 %v457
    %v618 = vunpack.c.l.b16 %v458
    %v619 = vunpack.c.l.b16 %v459
    %v620 = vunpack.c.l.b16 %v460
    %v621 = vunpack.c.l.b16 %v461
    %v622 = vunpack.c.l.b16 %v462
    %v623 = vunpack.c.l.b16 %v463
    %v624 = vunpack.c.l.b16 %v464
    %v625 = vunpack.c.l.b16 %v465
    %v626 = vunpack.c.l.b16 %v466
    %v627 = vunpack.c.l.b16 %v467
    %v628 = vunpack.c.l.b16 %v468
    %v629 = vunpack.c.l.b16 %v469
    %v630 = vunpack.c.l.b16 %v470
    %v631 = vunpack.c.l.b16 %v471
    %v632 = vunpack.c.l.b16 %v472
    %v633 = vunpack.c.l.b16 %v473
    %v634 = vunpack.c.l.b16 %v474
    %v635 = vunpack.c.l.b16 %v475
    %v636 = vunpack.c.l.b16 %v476
    %v637 = vunpack.c.l.b16 %v477
    %v638 = vunpack.c.l.b16 %v478
    %v639 = vunpack.c.l.b16 %v479
    %v640 = vunpack.c.l.b16 %v480
    %v641 = vunpack.c.l.b16 %v481
    %v642 = vunpack.c.l.b16 %v482
    %v643 = vunpack.c.l.b16 %v483
    %v644 = vunpack.c.l.b16 %v484
    %v645 = vunpack.c.l.b16 %v485
    %v646 = vunpack.c.l.b16 %v486
    %v647 = vunpack.c.l.b16 %v487
    %v648 = vunpack.c.l.b16 %v488
    %v649 = vunpack.c.l.b16 %v489
    %v650 = vunpack.c.l.b16 %v490
    %v651 = vunpack.c.l.b16 %v491
    %v652 = vunpack.c.l.b16 %v492
    %v653 = vunpack.c.l.b16 %v493
    %v654 = vunpack.c.l.b16 %v494
    %v655 = vunpack.c.l.b16 %v495
    %v656 = vpack.c.b16 %v593, %v592
    %v657 = vpack.c.b16 %v595, %v594
    %v658 = vpack.c.b16 %v597, %v596
    %v659 = vpack.c.b16 %v599, %v598
    %v660 = vpack.c.b16 %v601, %v600
    %v661 = vpack.c.b16 %v603, %v602
    %v662 = vpack.c.b16 %v605, %v604
    %v663 = vpack.c.b16 %v607, %v606
    %v664 = vpack.c.b16 %v609, %v608
    %v665 = vpack.c.b16 %v611, %v610
    %v666 = vpack.c.b16 %v613, %v612
    %v667 = vpack.c.b16 %v615, %v614
    %v668 = vpack.c.b16 %v617, %v616
    %v669 = vpack.c.b16 %v619, %v618
    %v670 = vpack.c.b16 %v621, %v620
    %v671 = vpack.c.b16 %v623, %v622
    %v672 = vpack.c.b16 %v625, %v624
    %v673 = vpack.c.b16 %v627, %v626
    %v674 = vpack.c.b16 %v629, %v628
    %v675 = vpack.c.b16 %v631, %v630
    %v676 = vpack.c.b16 %v633, %v632
    %v677 = vpack.c.b16 %v635, %v634
    %v678 = vpack.c.b16 %v637, %v636
    %v679 = vpack.c.b16 %v639, %v638
    %v680 = vpack.c.b16 %v641, %v640
    %v681 = vpack.c.b16 %v643, %v642
    %v682 = vpack.c.b16 %v645, %v644
    %v683 = vpack.c.b16 %v647, %v646
    %v684 = vpack.c.b16 %v649, %v648
    %v685 = vpack.c.b16 %v651, %v650
    %v686 = vpack.c.b16 %v653, %v652
    %v687 = vpack.c.b16 %v655, %v654
    %v752 = vunpack.c.l.b16 %v496
    %v753 = vunpack.c.h.b16 %v496
    %v754 = vunpack.c.l.b16 %v497
    %v755 = vunpack.c.l.b16 %v498
    %v756 = vunpack.c.h.b16 %v498
    %v757 = vunpack.c.l.b16 %v499
    %v758 = vunpack.c.l.b16 %v500
    %v759 = vunpack.c.h.b16 %v500
    %v760 = vunpack.c.l.b16 %v501
    %v761 = vunpack.c.l.b16 %v502
    %v762 = vunpack.c.h.b16 %v502
    %v763 = vunpack.c.l.b16 %v503
    %v764 = vunpack.c.l.b16 %v504
    %v765 = vunpack.c.h.b16 %v504
    %v766 = vunpack.c.l.b16 %v505
    %v767 = vunpack.c.l.b16 %v506
    %v768 = vunpack.c.h.b16 %v506
    %v769 = vunpack.c.l.b16 %v507
    %v770 = vunpack.c.l.b16 %v508
    %v771 = vunpack.c.h.b16 %v508
    %v772 = vunpack.c.l.b16 %v509
    %v773 = vunpack.c.l.b16 %v510
    %v774 = vunpack.c.h.b16 %v510
    %v775 = vunpack.c.l.b16 %v511
    %v776 = vunpack.c.l.b16 %v512
    %v777 = vunpack.c.h.b16 %v512
    %v778 = vunpack.c.l.b16 %v513
    %v779 = vunpack.c.l.b16 %v514
    %v780 = vunpack.c.h.b16 %v514
    %v781 = vunpack.c.l.b16 %v515
    %v782 = vunpack.c.l.b16 %v516
    %v783 = vunpack.c.h.b16 %v516
    %v784 = vunpack.c.l.b16 %v517
    %v785 = vunpack.c.l.b16 %v518
    %v786 = vunpack.c.h.b16 %v518
    %v787 = vunpack.c.l.b16 %v519
    %v788 = vunpack.c.l.b16 %v520
    %v789 = vunpack.c.h.b16 %v520
    %v790 = vunpack.c.l.b16 %v521
    %v791 = vunpack.c.l.b16 %v522
    %v792 = vunpack.c.h.b16 %v522
    %v793 = vunpack.c.l.b16 %v523
    %v794 = vunpack.c.l.b16 %v524
    %v795 = vunpack.c.h.b16 %v524
    %v796 = vunpack.c.l.b16 %v525
    %v797 = vunpack.c.l.b16 %v526
    %v798 = vunpack.c.h.b16 %v526
    %v799 = vunpack.c.l.b16 %v527
    %v800 = vpack.c.b16 %v755, %v752
    %v801 = vpack.c.b16 %v756, %v753
    %v802 = vpack.c.b16 %v757, %v754
    %v803 = vpack.c.b16 %v761, %v758
    %v804 = vpack.c.b16 %v762, %v759
    %v805 = vpack.c.b16 %v763, %v760
    %v806 = vpack.c.b16 %v767, %v764
    %v807 = vpack.c.b16 %v768, %v765
    %v808 = vpack.c.b16 %v769, %v766
    %v809 = vpack.c.b16 %v773, %v770
    %v810 = vpack.c.b16 %v774, %v771
    %v811 = vpack.c.b16 %v775, %v772
    %v812 = vpack.c.b16 %v779, %v776
    %v813 = vpack.c.b16 %v780, %v777
    %v814 = vpack.c.b16 %v781, %v778
    %v815 = vpack.c.b16 %v785, %v782
    %v816 = vpack.c.b16 %v786, %v783
    %v817 = vpack.c.b16 %v787, %v784
    %v818 = vpack.c.b16 %v791, %v788
    %v819 = vpack.c.b16 %v792, %v789
    %v820 = vpack.c.b16 %v793, %v790
    %v821 = vpack.c.b16 %v797, %v794
    %v822 = vpack.c.b16 %v798, %v795
    %v823 = vpack.c.b16 %v799, %v796
    %848 = vmatprep.subr.bf16.mxu0 %v822
    %849 = vmatpush1.bf16.msra.mxu0 %v821
    %850 = vmatprep.subr.bf16.mxu0 %v819
    %851 = vmatpush1.bf16.msra.mxu0 %v818
    %852 = vmatprep.subr.bf16.mxu0 %v816
    %853 = vmatpush1.bf16.msra.mxu0 %v815
    %854 = vmatprep.subr.bf16.mxu0 %v813
    %855 = vmatpush1.bf16.msra.mxu0 %v812
    %856 = vmatprep.subr.bf16.mxu0 %v810
    %857 = vmatpush1.bf16.msra.mxu0 %v809
    %858 = vmatprep.subr.bf16.mxu0 %v807
    %859 = vmatpush1.bf16.msra.mxu0 %v806
    %860 = vmatprep.subr.bf16.mxu0 %v804
    %861 = vmatpush1.bf16.msra.mxu0 %v803
    %862 = vmatprep.subr.bf16.mxu0 %v801
    %863 = vmatpush1.bf16.msra.mxu0 %v800
    %864 = vmatprep.subr.bf16.mxu0 0
    %865 = vmatpush2.bf16.msra.mxu0 0
    %866 = vmatprep.subr.bf16.mxu0 0
    %867 = vmatpush2.bf16.msra.mxu0 0
    %868 = vmatprep.subr.bf16.mxu0 0
    %869 = vmatpush2.bf16.msra.mxu0 0
    %870 = vmatprep.subr.bf16.mxu0 0
    %871 = vmatpush2.bf16.msra.mxu0 0
    %872 = vmatprep.subr.bf16.mxu0 0
    %873 = vmatpush2.bf16.msra.mxu0 0
    %874 = vmatprep.subr.bf16.mxu0 0
    %875 = vmatpush2.bf16.msra.mxu0 0
    %876 = vmatprep.subr.bf16.mxu0 0
    %877 = vmatpush2.bf16.msra.mxu0 0
    %878 = vmatprep.subr.bf16.mxu0 0
    %879 = vmatpush2.bf16.msra.mxu0 0
    %880 = vmatprep.mubr.bf16.mxu0 0
    %881 = vmatmul.mubr.bf16.gmra.mxu0 %v656
    %v882 = vpop.f32.mrf.mxu0
    %v883 = vadd.f32 0.0, %v882
    %v884 = vpop.f32.mrf.mxu0
    %v885 = vadd.f32 0.0, %v884
    %v886 = vpop.f32.mrf.mxu0
    %v887 = vadd.f32 0.0, %v886
    %v888 = vpop.f32.mrf.mxu0
    %v889 = vadd.f32 0.0, %v888
    %890 = vmatprep.mubr.bf16.mxu0 0
    %891 = vmatmul.mubr.bf16.gmra.mxu0 %v657
    %v892 = vpop.f32.mrf.mxu0
    %v893 = vadd.f32 0.0, %v892
    %v894 = vpop.f32.mrf.mxu0
    %v895 = vadd.f32 0.0, %v894
    %v896 = vpop.f32.mrf.mxu0
    %v897 = vadd.f32 0.0, %v896
    %v898 = vpop.f32.mrf.mxu0
    %v899 = vadd.f32 0.0, %v898
    %900 = vmatprep.mubr.bf16.mxu0 0
    %901 = vmatmul.mubr.bf16.gmra.mxu0 %v658
    %v902 = vpop.f32.mrf.mxu0
    %v903 = vadd.f32 0.0, %v902
    %v904 = vpop.f32.mrf.mxu0
    %v905 = vadd.f32 0.0, %v904
    %v906 = vpop.f32.mrf.mxu0
    %v907 = vadd.f32 0.0, %v906
    %v908 = vpop.f32.mrf.mxu0
    %v909 = vadd.f32 0.0, %v908
    %910 = vmatprep.mubr.bf16.mxu0 0
    %911 = vmatmul.mubr.bf16.gmra.mxu0 %v659
    %v912 = vpop.f32.mrf.mxu0
    %v913 = vadd.f32 0.0, %v912
    %v914 = vpop.f32.mrf.mxu0
    %v915 = vadd.f32 0.0, %v914
    %v916 = vpop.f32.mrf.mxu0
    %v917 = vadd.f32 0.0, %v916
    %v918 = vpop.f32.mrf.mxu0
    %v919 = vadd.f32 0.0, %v918
    %920 = vmatprep.mubr.bf16.mxu0 0
    %921 = vmatmul.mubr.bf16.gmra.mxu0 %v660
    %v922 = vpop.f32.mrf.mxu0
    %v923 = vadd.f32 0.0, %v922
    %v924 = vpop.f32.mrf.mxu0
    %v925 = vadd.f32 0.0, %v924
    %v926 = vpop.f32.mrf.mxu0
    %v927 = vadd.f32 0.0, %v926
    %v928 = vpop.f32.mrf.mxu0
    %v929 = vadd.f32 0.0, %v928
    %930 = vmatprep.mubr.bf16.mxu0 0
    %931 = vmatmul.mubr.bf16.gmra.mxu0 %v661
    %v932 = vpop.f32.mrf.mxu0
    %v933 = vadd.f32 0.0, %v932
    %v934 = vpop.f32.mrf.mxu0
    %v935 = vadd.f32 0.0, %v934
    %v936 = vpop.f32.mrf.mxu0
    %v937 = vadd.f32 0.0, %v936
    %v938 = vpop.f32.mrf.mxu0
    %v939 = vadd.f32 0.0, %v938
    %940 = vmatprep.mubr.bf16.mxu0 0
    %941 = vmatmul.mubr.bf16.gmra.mxu0 %v662
    %v942 = vpop.f32.mrf.mxu0
    %v943 = vadd.f32 0.0, %v942
    %v944 = vpop.f32.mrf.mxu0
    %v945 = vadd.f32 0.0, %v944
    %v946 = vpop.f32.mrf.mxu0
    %v947 = vadd.f32 0.0, %v946
    %v948 = vpop.f32.mrf.mxu0
    %v949 = vadd.f32 0.0, %v948
    %950 = vmatprep.mubr.bf16.mxu0 0
    %951 = vmatmul.mubr.bf16.gmra.mxu0 %v663
    %v952 = vpop.f32.mrf.mxu0
    %v953 = vadd.f32 0.0, %v952
    %v954 = vpop.f32.mrf.mxu0
    %v955 = vadd.f32 0.0, %v954
    %v956 = vpop.f32.mrf.mxu0
    %v957 = vadd.f32 0.0, %v956
    %v958 = vpop.f32.mrf.mxu0
    %v959 = vadd.f32 0.0, %v958
    %960 = vmatprep.mubr.bf16.mxu0 0
    %961 = vmatmul.mubr.bf16.gmra.mxu0 %v664
    %v962 = vpop.f32.mrf.mxu0
    %v963 = vadd.f32 0.0, %v962
    %v964 = vpop.f32.mrf.mxu0
    %v965 = vadd.f32 0.0, %v964
    %v966 = vpop.f32.mrf.mxu0
    %v967 = vadd.f32 0.0, %v966
    %v968 = vpop.f32.mrf.mxu0
    %v969 = vadd.f32 0.0, %v968
    %970 = vmatprep.mubr.bf16.mxu0 0
    %971 = vmatmul.mubr.bf16.gmra.mxu0 %v665
    %v972 = vpop.f32.mrf.mxu0
    %v973 = vadd.f32 0.0, %v972
    %v974 = vpop.f32.mrf.mxu0
    %v975 = vadd.f32 0.0, %v974
    %v976 = vpop.f32.mrf.mxu0
    %v977 = vadd.f32 0.0, %v976
    %v978 = vpop.f32.mrf.mxu0
    %v979 = vadd.f32 0.0, %v978
    %980 = vmatprep.mubr.bf16.mxu0 0
    %981 = vmatmul.mubr.bf16.gmra.mxu0 %v666
    %v982 = vpop.f32.mrf.mxu0
    %v983 = vadd.f32 0.0, %v982
    %v984 = vpop.f32.mrf.mxu0
    %v985 = vadd.f32 0.0, %v984
    %v986 = vpop.f32.mrf.mxu0
    %v987 = vadd.f32 0.0, %v986
    %v988 = vpop.f32.mrf.mxu0
    %v989 = vadd.f32 0.0, %v988
    %990 = vmatprep.mubr.bf16.mxu0 0
    %991 = vmatmul.mubr.bf16.gmra.mxu0 %v667
    %v992 = vpop.f32.mrf.mxu0
    %v993 = vadd.f32 0.0, %v992
    %v994 = vpop.f32.mrf.mxu0
    %v995 = vadd.f32 0.0, %v994
    %v996 = vpop.f32.mrf.mxu0
    %v997 = vadd.f32 0.0, %v996
    %v998 = vpop.f32.mrf.mxu0
    %v999 = vadd.f32 0.0, %v998
    %1000 = vmatprep.mubr.bf16.mxu0 0
    %1001 = vmatmul.mubr.bf16.gmra.mxu0 %v668
    %v1002 = vpop.f32.mrf.mxu0
    %v1003 = vadd.f32 0.0, %v1002
    %v1004 = vpop.f32.mrf.mxu0
    %v1005 = vadd.f32 0.0, %v1004
    %v1006 = vpop.f32.mrf.mxu0
    %v1007 = vadd.f32 0.0, %v1006
    %v1008 = vpop.f32.mrf.mxu0
    %v1009 = vadd.f32 0.0, %v1008
    %1010 = vmatprep.mubr.bf16.mxu0 0
    %1011 = vmatmul.mubr.bf16.gmra.mxu0 %v669
    %v1012 = vpop.f32.mrf.mxu0
    %v1013 = vadd.f32 0.0, %v1012
    %v1014 = vpop.f32.mrf.mxu0
    %v1015 = vadd.f32 0.0, %v1014
    %v1016 = vpop.f32.mrf.mxu0
    %v1017 = vadd.f32 0.0, %v1016
    %v1018 = vpop.f32.mrf.mxu0
    %v1019 = vadd.f32 0.0, %v1018
    %1020 = vmatprep.mubr.bf16.mxu0 0
    %1021 = vmatmul.mubr.bf16.gmra.mxu0 %v670
    %v1022 = vpop.f32.mrf.mxu0
    %v1023 = vadd.f32 0.0, %v1022
    %v1024 = vpop.f32.mrf.mxu0
    %v1025 = vadd.f32 0.0, %v1024
    %v1026 = vpop.f32.mrf.mxu0
    %v1027 = vadd.f32 0.0, %v1026
    %v1028 = vpop.f32.mrf.mxu0
    %v1029 = vadd.f32 0.0, %v1028
    %1030 = vmatprep.mubr.bf16.mxu0 0
    %1031 = vmatmul.mubr.bf16.gmra.mxu0 %v671
    %v1032 = vpop.f32.mrf.mxu0
    %v1033 = vadd.f32 0.0, %v1032
    %v1034 = vpop.f32.mrf.mxu0
    %v1035 = vadd.f32 0.0, %v1034
    %v1036 = vpop.f32.mrf.mxu0
    %v1037 = vadd.f32 0.0, %v1036
    %v1038 = vpop.f32.mrf.mxu0
    %v1039 = vadd.f32 0.0, %v1038
    %1040 = vmatprep.mubr.bf16.mxu0 0
    %1041 = vmatmul.mubr.bf16.gmra.mxu0 %v672
    %v1042 = vpop.f32.mrf.mxu0
    %v1043 = vadd.f32 0.0, %v1042
    %v1044 = vpop.f32.mrf.mxu0
    %v1045 = vadd.f32 0.0, %v1044
    %v1046 = vpop.f32.mrf.mxu0
    %v1047 = vadd.f32 0.0, %v1046
    %v1048 = vpop.f32.mrf.mxu0
    %v1049 = vadd.f32 0.0, %v1048
    %1050 = vmatprep.mubr.bf16.mxu0 0
    %1051 = vmatmul.mubr.bf16.gmra.mxu0 %v673
    %v1052 = vpop.f32.mrf.mxu0
    %v1053 = vadd.f32 0.0, %v1052
    %v1054 = vpop.f32.mrf.mxu0
    %v1055 = vadd.f32 0.0, %v1054
    %v1056 = vpop.f32.mrf.mxu0
    %v1057 = vadd.f32 0.0, %v1056
    %v1058 = vpop.f32.mrf.mxu0
    %v1059 = vadd.f32 0.0, %v1058
    %1060 = vmatprep.mubr.bf16.mxu0 0
    %1061 = vmatmul.mubr.bf16.gmra.mxu0 %v674
    %v1062 = vpop.f32.mrf.mxu0
    %v1063 = vadd.f32 0.0, %v1062
    %v1064 = vpop.f32.mrf.mxu0
    %v1065 = vadd.f32 0.0, %v1064
    %v1066 = vpop.f32.mrf.mxu0
    %v1067 = vadd.f32 0.0, %v1066
    %v1068 = vpop.f32.mrf.mxu0
    %v1069 = vadd.f32 0.0, %v1068
    %1070 = vmatprep.mubr.bf16.mxu0 0
    %1071 = vmatmul.mubr.bf16.gmra.mxu0 %v675
    %v1072 = vpop.f32.mrf.mxu0
    %v1073 = vadd.f32 0.0, %v1072
    %v1074 = vpop.f32.mrf.mxu0
    %v1075 = vadd.f32 0.0, %v1074
    %v1076 = vpop.f32.mrf.mxu0
    %v1077 = vadd.f32 0.0, %v1076
    %v1078 = vpop.f32.mrf.mxu0
    %v1079 = vadd.f32 0.0, %v1078
    %1080 = vmatprep.mubr.bf16.mxu0 0
    %1081 = vmatmul.mubr.bf16.gmra.mxu0 %v676
    %v1082 = vpop.f32.mrf.mxu0
    %v1083 = vadd.f32 0.0, %v1082
    %v1084 = vpop.f32.mrf.mxu0
    %v1085 = vadd.f32 0.0, %v1084
    %v1086 = vpop.f32.mrf.mxu0
    %v1087 = vadd.f32 0.0, %v1086
    %v1088 = vpop.f32.mrf.mxu0
    %v1089 = vadd.f32 0.0, %v1088
    %1090 = vmatprep.mubr.bf16.mxu0 0
    %1091 = vmatmul.mubr.bf16.gmra.mxu0 %v677
    %v1092 = vpop.f32.mrf.mxu0
    %v1093 = vadd.f32 0.0, %v1092
    %v1094 = vpop.f32.mrf.mxu0
    %v1095 = vadd.f32 0.0, %v1094
    %v1096 = vpop.f32.mrf.mxu0
    %v1097 = vadd.f32 0.0, %v1096
    %v1098 = vpop.f32.mrf.mxu0
    %v1099 = vadd.f32 0.0, %v1098
    %1100 = vmatprep.mubr.bf16.mxu0 0
    %1101 = vmatmul.mubr.bf16.gmra.mxu0 %v678
    %v1102 = vpop.f32.mrf.mxu0
    %v1103 = vadd.f32 0.0, %v1102
    %v1104 = vpop.f32.mrf.mxu0
    %v1105 = vadd.f32 0.0, %v1104
    %v1106 = vpop.f32.mrf.mxu0
    %v1107 = vadd.f32 0.0, %v1106
    %v1108 = vpop.f32.mrf.mxu0
    %v1109 = vadd.f32 0.0, %v1108
    %1110 = vmatprep.mubr.bf16.mxu0 0
    %1111 = vmatmul.mubr.bf16.gmra.mxu0 %v679
    %v1112 = vpop.f32.mrf.mxu0
    %v1113 = vadd.f32 0.0, %v1112
    %v1114 = vpop.f32.mrf.mxu0
    %v1115 = vadd.f32 0.0, %v1114
    %v1116 = vpop.f32.mrf.mxu0
    %v1117 = vadd.f32 0.0, %v1116
    %v1118 = vpop.f32.mrf.mxu0
    %v1119 = vadd.f32 0.0, %v1118
    %1120 = vmatprep.mubr.bf16.mxu0 0
    %1121 = vmatmul.mubr.bf16.gmra.mxu0 %v680
    %v1122 = vpop.f32.mrf.mxu0
    %v1123 = vadd.f32 0.0, %v1122
    %v1124 = vpop.f32.mrf.mxu0
    %v1125 = vadd.f32 0.0, %v1124
    %v1126 = vpop.f32.mrf.mxu0
    %v1127 = vadd.f32 0.0, %v1126
    %v1128 = vpop.f32.mrf.mxu0
    %v1129 = vadd.f32 0.0, %v1128
    %1130 = vmatprep.mubr.bf16.mxu0 0
    %1131 = vmatmul.mubr.bf16.gmra.mxu0 %v681
    %v1132 = vpop.f32.mrf.mxu0
    %v1133 = vadd.f32 0.0, %v1132
    %v1134 = vpop.f32.mrf.mxu0
    %v1135 = vadd.f32 0.0, %v1134
    %v1136 = vpop.f32.mrf.mxu0
    %v1137 = vadd.f32 0.0, %v1136
    %v1138 = vpop.f32.mrf.mxu0
    %v1139 = vadd.f32 0.0, %v1138
    %1140 = vmatprep.mubr.bf16.mxu0 0
    %1141 = vmatmul.mubr.bf16.gmra.mxu0 %v682
    %v1142 = vpop.f32.mrf.mxu0
    %v1143 = vadd.f32 0.0, %v1142
    %v1144 = vpop.f32.mrf.mxu0
    %v1145 = vadd.f32 0.0, %v1144
    %v1146 = vpop.f32.mrf.mxu0
    %v1147 = vadd.f32 0.0, %v1146
    %v1148 = vpop.f32.mrf.mxu0
    %v1149 = vadd.f32 0.0, %v1148
    %1150 = vmatprep.mubr.bf16.mxu0 0
    %1151 = vmatmul.mubr.bf16.gmra.mxu0 %v683
    %v1152 = vpop.f32.mrf.mxu0
    %v1153 = vadd.f32 0.0, %v1152
    %v1154 = vpop.f32.mrf.mxu0
    %v1155 = vadd.f32 0.0, %v1154
    %v1156 = vpop.f32.mrf.mxu0
    %v1157 = vadd.f32 0.0, %v1156
    %v1158 = vpop.f32.mrf.mxu0
    %v1159 = vadd.f32 0.0, %v1158
    %1160 = vmatprep.mubr.bf16.mxu0 0
    %1161 = vmatmul.mubr.bf16.gmra.mxu0 %v684
    %v1162 = vpop.f32.mrf.mxu0
    %v1163 = vadd.f32 0.0, %v1162
    %v1164 = vpop.f32.mrf.mxu0
    %v1165 = vadd.f32 0.0, %v1164
    %v1166 = vpop.f32.mrf.mxu0
    %v1167 = vadd.f32 0.0, %v1166
    %v1168 = vpop.f32.mrf.mxu0
    %v1169 = vadd.f32 0.0, %v1168
    %1170 = vmatprep.mubr.bf16.mxu0 0
    %1171 = vmatmul.mubr.bf16.gmra.mxu0 %v685
    %v1172 = vpop.f32.mrf.mxu0
    %v1173 = vadd.f32 0.0, %v1172
    %v1174 = vpop.f32.mrf.mxu0
    %v1175 = vadd.f32 0.0, %v1174
    %v1176 = vpop.f32.mrf.mxu0
    %v1177 = vadd.f32 0.0, %v1176
    %v1178 = vpop.f32.mrf.mxu0
    %v1179 = vadd.f32 0.0, %v1178
    %1180 = vmatprep.mubr.bf16.mxu0 0
    %1181 = vmatmul.mubr.bf16.gmra.mxu0 %v686
    %v1182 = vpop.f32.mrf.mxu0
    %v1183 = vadd.f32 0.0, %v1182
    %v1184 = vpop.f32.mrf.mxu0
    %v1185 = vadd.f32 0.0, %v1184
    %v1186 = vpop.f32.mrf.mxu0
    %v1187 = vadd.f32 0.0, %v1186
    %v1188 = vpop.f32.mrf.mxu0
    %v1189 = vadd.f32 0.0, %v1188
    %1190 = vmatprep.mubr.bf16.mxu0 0
    %1191 = vmatmul.mubr.bf16.gmra.mxu0 %v687
    %v1192 = vpop.f32.mrf.mxu0
    %v1193 = vadd.f32 0.0, %v1192
    %v1194 = vpop.f32.mrf.mxu0
    %v1195 = vadd.f32 0.0, %v1194
    %v1196 = vpop.f32.mrf.mxu0
    %v1197 = vadd.f32 0.0, %v1196
    %v1198 = vpop.f32.mrf.mxu0
    %v1199 = vadd.f32 0.0, %v1198
    %1200 = vdwg.mxu0
    %1201 = vmatprep.subr.bf16.mxu0 0
    %1202 = vmatpush1.bf16.msra.mxu0 %v823
    %1203 = vmatprep.subr.bf16.mxu0 0
    %1204 = vmatpush1.bf16.msra.mxu0 %v820
    %1205 = vmatprep.subr.bf16.mxu0 0
    %1206 = vmatpush1.bf16.msra.mxu0 %v817
    %1207 = vmatprep.subr.bf16.mxu0 0
    %1208 = vmatpush1.bf16.msra.mxu0 %v814
    %1209 = vmatprep.subr.bf16.mxu0 0
    %1210 = vmatpush1.bf16.msra.mxu0 %v811
    %1211 = vmatprep.subr.bf16.mxu0 0
    %1212 = vmatpush1.bf16.msra.mxu0 %v808
    %1213 = vmatprep.subr.bf16.mxu0 0
    %1214 = vmatpush1.bf16.msra.mxu0 %v805
    %1215 = vmatprep.subr.bf16.mxu0 0
    %1216 = vmatpush1.bf16.msra.mxu0 %v802
    %1217 = vmatprep.subr.bf16.mxu0 0
    %1218 = vmatpush2.bf16.msra.mxu0 0
    %1219 = vmatprep.subr.bf16.mxu0 0
    %1220 = vmatpush2.bf16.msra.mxu0 0
    %1221 = vmatprep.subr.bf16.mxu0 0
    %1222 = vmatpush2.bf16.msra.mxu0 0
    %1223 = vmatprep.subr.bf16.mxu0 0
    %1224 = vmatpush2.bf16.msra.mxu0 0
    %1225 = vmatprep.subr.bf16.mxu0 0
    %1226 = vmatpush2.bf16.msra.mxu0 0
    %1227 = vmatprep.subr.bf16.mxu0 0
    %1228 = vmatpush2.bf16.msra.mxu0 0
    %1229 = vmatprep.subr.bf16.mxu0 0
    %1230 = vmatpush2.bf16.msra.mxu0 0
    %1231 = vmatprep.subr.bf16.mxu0 0
    %1232 = vmatpush2.bf16.msra.mxu0 0
    %1233 = vmatprep.mubr.bf16.mxu0 0
    %1234 = vmatmul.mubr.bf16.gmra.mxu0 %v656
    %v1235 = vpop.f32.mrf.mxu0
    %v1236 = vadd.f32 0.0, %v1235
    %v1237 = vpop.f32.mrf.mxu0
    %v1238 = vpop.f32.mrf.mxu0
    %v1239 = vadd.f32 0.0, %v1238
    %v1240 = vpop.f32.mrf.mxu0
    %1241 = vmatprep.mubr.bf16.mxu0 0
    %1242 = vmatmul.mubr.bf16.gmra.mxu0 %v657
    %v1243 = vpop.f32.mrf.mxu0
    %v1244 = vadd.f32 0.0, %v1243
    %v1245 = vpop.f32.mrf.mxu0
    %v1246 = vpop.f32.mrf.mxu0
    %v1247 = vadd.f32 0.0, %v1246
    %v1248 = vpop.f32.mrf.mxu0
    %1249 = vmatprep.mubr.bf16.mxu0 0
    %1250 = vmatmul.mubr.bf16.gmra.mxu0 %v658
    %v1251 = vpop.f32.mrf.mxu0
    %v1252 = vadd.f32 0.0, %v1251
    %v1253 = vpop.f32.mrf.mxu0
    %v1254 = vpop.f32.mrf.mxu0
    %v1255 = vadd.f32 0.0, %v1254
    %v1256 = vpop.f32.mrf.mxu0
    %1257 = vmatprep.mubr.bf16.mxu0 0
    %1258 = vmatmul.mubr.bf16.gmra.mxu0 %v659
    %v1259 = vpop.f32.mrf.mxu0
    %v1260 = vadd.f32 0.0, %v1259
    %v1261 = vpop.f32.mrf.mxu0
    %v1262 = vpop.f32.mrf.mxu0
    %v1263 = vadd.f32 0.0, %v1262
    %v1264 = vpop.f32.mrf.mxu0
    %1265 = vmatprep.mubr.bf16.mxu0 0
    %1266 = vmatmul.mubr.bf16.gmra.mxu0 %v660
    %v1267 = vpop.f32.mrf.mxu0
    %v1268 = vadd.f32 0.0, %v1267
    %v1269 = vpop.f32.mrf.mxu0
    %v1270 = vpop.f32.mrf.mxu0
    %v1271 = vadd.f32 0.0, %v1270
    %v1272 = vpop.f32.mrf.mxu0
    %1273 = vmatprep.mubr.bf16.mxu0 0
    %1274 = vmatmul.mubr.bf16.gmra.mxu0 %v661
    %v1275 = vpop.f32.mrf.mxu0
    %v1276 = vadd.f32 0.0, %v1275
    %v1277 = vpop.f32.mrf.mxu0
    %v1278 = vpop.f32.mrf.mxu0
    %v1279 = vadd.f32 0.0, %v1278
    %v1280 = vpop.f32.mrf.mxu0
    %1281 = vmatprep.mubr.bf16.mxu0 0
    %1282 = vmatmul.mubr.bf16.gmra.mxu0 %v662
    %v1283 = vpop.f32.mrf.mxu0
    %v1284 = vadd.f32 0.0, %v1283
    %v1285 = vpop.f32.mrf.mxu0
    %v1286 = vpop.f32.mrf.mxu0
    %v1287 = vadd.f32 0.0, %v1286
    %v1288 = vpop.f32.mrf.mxu0
    %1289 = vmatprep.mubr.bf16.mxu0 0
    %1290 = vmatmul.mubr.bf16.gmra.mxu0 %v663
    %v1291 = vpop.f32.mrf.mxu0
    %v1292 = vadd.f32 0.0, %v1291
    %v1293 = vpop.f32.mrf.mxu0
    %v1294 = vpop.f32.mrf.mxu0
    %v1295 = vadd.f32 0.0, %v1294
    %v1296 = vpop.f32.mrf.mxu0
    %1297 = vmatprep.mubr.bf16.mxu0 0
    %1298 = vmatmul.mubr.bf16.gmra.mxu0 %v664
    %v1299 = vpop.f32.mrf.mxu0
    %v1300 = vadd.f32 0.0, %v1299
    %v1301 = vpop.f32.mrf.mxu0
    %v1302 = vpop.f32.mrf.mxu0
    %v1303 = vadd.f32 0.0, %v1302
    %v1304 = vpop.f32.mrf.mxu0
    %1305 = vmatprep.mubr.bf16.mxu0 0
    %1306 = vmatmul.mubr.bf16.gmra.mxu0 %v665
    %v1307 = vpop.f32.mrf.mxu0
    %v1308 = vadd.f32 0.0, %v1307
    %v1309 = vpop.f32.mrf.mxu0
    %v1310 = vpop.f32.mrf.mxu0
    %v1311 = vadd.f32 0.0, %v1310
    %v1312 = vpop.f32.mrf.mxu0
    %1313 = vmatprep.mubr.bf16.mxu0 0
    %1314 = vmatmul.mubr.bf16.gmra.mxu0 %v666
    %v1315 = vpop.f32.mrf.mxu0
    %v1316 = vadd.f32 0.0, %v1315
    %v1317 = vpop.f32.mrf.mxu0
    %v1318 = vpop.f32.mrf.mxu0
    %v1319 = vadd.f32 0.0, %v1318
    %v1320 = vpop.f32.mrf.mxu0
    %1321 = vmatprep.mubr.bf16.mxu0 0
    %1322 = vmatmul.mubr.bf16.gmra.mxu0 %v667
    %v1323 = vpop.f32.mrf.mxu0
    %v1324 = vadd.f32 0.0, %v1323
    %v1325 = vpop.f32.mrf.mxu0
    %v1326 = vpop.f32.mrf.mxu0
    %v1327 = vadd.f32 0.0, %v1326
    %v1328 = vpop.f32.mrf.mxu0
    %1329 = vmatprep.mubr.bf16.mxu0 0
    %1330 = vmatmul.mubr.bf16.gmra.mxu0 %v668
    %v1331 = vpop.f32.mrf.mxu0
    %v1332 = vadd.f32 0.0, %v1331
    %v1333 = vpop.f32.mrf.mxu0
    %v1334 = vpop.f32.mrf.mxu0
    %v1335 = vadd.f32 0.0, %v1334
    %v1336 = vpop.f32.mrf.mxu0
    %1337 = vmatprep.mubr.bf16.mxu0 0
    %1338 = vmatmul.mubr.bf16.gmra.mxu0 %v669
    %v1339 = vpop.f32.mrf.mxu0
    %v1340 = vadd.f32 0.0, %v1339
    %v1341 = vpop.f32.mrf.mxu0
    %v1342 = vpop.f32.mrf.mxu0
    %v1343 = vadd.f32 0.0, %v1342
    %v1344 = vpop.f32.mrf.mxu0
    %1345 = vmatprep.mubr.bf16.mxu0 0
    %1346 = vmatmul.mubr.bf16.gmra.mxu0 %v670
    %v1347 = vpop.f32.mrf.mxu0
    %v1348 = vadd.f32 0.0, %v1347
    %v1349 = vpop.f32.mrf.mxu0
    %v1350 = vpop.f32.mrf.mxu0
    %v1351 = vadd.f32 0.0, %v1350
    %v1352 = vpop.f32.mrf.mxu0
    %1353 = vmatprep.mubr.bf16.mxu0 0
    %1354 = vmatmul.mubr.bf16.gmra.mxu0 %v671
    %v1355 = vpop.f32.mrf.mxu0
    %v1356 = vadd.f32 0.0, %v1355
    %v1357 = vpop.f32.mrf.mxu0
    %v1358 = vpop.f32.mrf.mxu0
    %v1359 = vadd.f32 0.0, %v1358
    %v1360 = vpop.f32.mrf.mxu0
    %1361 = vmatprep.mubr.bf16.mxu0 0
    %1362 = vmatmul.mubr.bf16.gmra.mxu0 %v672
    %v1363 = vpop.f32.mrf.mxu0
    %v1364 = vadd.f32 0.0, %v1363
    %v1365 = vpop.f32.mrf.mxu0
    %v1366 = vpop.f32.mrf.mxu0
    %v1367 = vadd.f32 0.0, %v1366
    %v1368 = vpop.f32.mrf.mxu0
    %1369 = vmatprep.mubr.bf16.mxu0 0
    %1370 = vmatmul.mubr.bf16.gmra.mxu0 %v673
    %v1371 = vpop.f32.mrf.mxu0
    %v1372 = vadd.f32 0.0, %v1371
    %v1373 = vpop.f32.mrf.mxu0
    %v1374 = vpop.f32.mrf.mxu0
    %v1375 = vadd.f32 0.0, %v1374
    %v1376 = vpop.f32.mrf.mxu0
    %1377 = vmatprep.mubr.bf16.mxu0 0
    %1378 = vmatmul.mubr.bf16.gmra.mxu0 %v674
    %v1379 = vpop.f32.mrf.mxu0
    %v1380 = vadd.f32 0.0, %v1379
    %v1381 = vpop.f32.mrf.mxu0
    %v1382 = vpop.f32.mrf.mxu0
    %v1383 = vadd.f32 0.0, %v1382
    %v1384 = vpop.f32.mrf.mxu0
    %1385 = vmatprep.mubr.bf16.mxu0 0
    %1386 = vmatmul.mubr.bf16.gmra.mxu0 %v675
    %v1387 = vpop.f32.mrf.mxu0
    %v1388 = vadd.f32 0.0, %v1387
    %v1389 = vpop.f32.mrf.mxu0
    %v1390 = vpop.f32.mrf.mxu0
    %v1391 = vadd.f32 0.0, %v1390
    %v1392 = vpop.f32.mrf.mxu0
    %1393 = vmatprep.mubr.bf16.mxu0 0
    %1394 = vmatmul.mubr.bf16.gmra.mxu0 %v676
    %v1395 = vpop.f32.mrf.mxu0
    %v1396 = vadd.f32 0.0, %v1395
    %v1397 = vpop.f32.mrf.mxu0
    %v1398 = vpop.f32.mrf.mxu0
    %v1399 = vadd.f32 0.0, %v1398
    %v1400 = vpop.f32.mrf.mxu0
    %1401 = vmatprep.mubr.bf16.mxu0 0
    %1402 = vmatmul.mubr.bf16.gmra.mxu0 %v677
    %v1403 = vpop.f32.mrf.mxu0
    %v1404 = vadd.f32 0.0, %v1403
    %v1405 = vpop.f32.mrf.mxu0
    %v1406 = vpop.f32.mrf.mxu0
    %v1407 = vadd.f32 0.0, %v1406
    %v1408 = vpop.f32.mrf.mxu0
    %1409 = vmatprep.mubr.bf16.mxu0 0
    %1410 = vmatmul.mubr.bf16.gmra.mxu0 %v678
    %v1411 = vpop.f32.mrf.mxu0
    %v1412 = vadd.f32 0.0, %v1411
    %v1413 = vpop.f32.mrf.mxu0
    %v1414 = vpop.f32.mrf.mxu0
    %v1415 = vadd.f32 0.0, %v1414
    %v1416 = vpop.f32.mrf.mxu0
    %1417 = vmatprep.mubr.bf16.mxu0 0
    %1418 = vmatmul.mubr.bf16.gmra.mxu0 %v679
    %v1419 = vpop.f32.mrf.mxu0
    %v1420 = vadd.f32 0.0, %v1419
    %v1421 = vpop.f32.mrf.mxu0
    %v1422 = vpop.f32.mrf.mxu0
    %v1423 = vadd.f32 0.0, %v1422
    %v1424 = vpop.f32.mrf.mxu0
    %1425 = vmatprep.mubr.bf16.mxu0 0
    %1426 = vmatmul.mubr.bf16.gmra.mxu0 %v680
    %v1427 = vpop.f32.mrf.mxu0
    %v1428 = vadd.f32 0.0, %v1427
    %v1429 = vpop.f32.mrf.mxu0
    %v1430 = vpop.f32.mrf.mxu0
    %v1431 = vadd.f32 0.0, %v1430
    %v1432 = vpop.f32.mrf.mxu0
    %1433 = vmatprep.mubr.bf16.mxu0 0
    %1434 = vmatmul.mubr.bf16.gmra.mxu0 %v681
    %v1435 = vpop.f32.mrf.mxu0
    %v1436 = vadd.f32 0.0, %v1435
    %v1437 = vpop.f32.mrf.mxu0
    %v1438 = vpop.f32.mrf.mxu0
    %v1439 = vadd.f32 0.0, %v1438
    %v1440 = vpop.f32.mrf.mxu0
    %1441 = vmatprep.mubr.bf16.mxu0 0
    %1442 = vmatmul.mubr.bf16.gmra.mxu0 %v682
    %v1443 = vpop.f32.mrf.mxu0
    %v1444 = vadd.f32 0.0, %v1443
    %v1445 = vpop.f32.mrf.mxu0
    %v1446 = vpop.f32.mrf.mxu0
    %v1447 = vadd.f32 0.0, %v1446
    %v1448 = vpop.f32.mrf.mxu0
    %1449 = vmatprep.mubr.bf16.mxu0 0
    %1450 = vmatmul.mubr.bf16.gmra.mxu0 %v683
    %v1451 = vpop.f32.mrf.mxu0
    %v1452 = vadd.f32 0.0, %v1451
    %v1453 = vpop.f32.mrf.mxu0
    %v1454 = vpop.f32.mrf.mxu0
    %v1455 = vadd.f32 0.0, %v1454
    %v1456 = vpop.f32.mrf.mxu0
    %1457 = vmatprep.mubr.bf16.mxu0 0
    %1458 = vmatmul.mubr.bf16.gmra.mxu0 %v684
    %v1459 = vpop.f32.mrf.mxu0
    %v1460 = vadd.f32 0.0, %v1459
    %v1461 = vpop.f32.mrf.mxu0
    %v1462 = vpop.f32.mrf.mxu0
    %v1463 = vadd.f32 0.0, %v1462
    %v1464 = vpop.f32.mrf.mxu0
    %1465 = vmatprep.mubr.bf16.mxu0 0
    %1466 = vmatmul.mubr.bf16.gmra.mxu0 %v685
    %v1467 = vpop.f32.mrf.mxu0
    %v1468 = vadd.f32 0.0, %v1467
    %v1469 = vpop.f32.mrf.mxu0
    %v1470 = vpop.f32.mrf.mxu0
    %v1471 = vadd.f32 0.0, %v1470
    %v1472 = vpop.f32.mrf.mxu0
    %1473 = vmatprep.mubr.bf16.mxu0 0
    %1474 = vmatmul.mubr.bf16.gmra.mxu0 %v686
    %v1475 = vpop.f32.mrf.mxu0
    %v1476 = vadd.f32 0.0, %v1475
    %v1477 = vpop.f32.mrf.mxu0
    %v1478 = vpop.f32.mrf.mxu0
    %v1479 = vadd.f32 0.0, %v1478
    %v1480 = vpop.f32.mrf.mxu0
    %1481 = vmatprep.mubr.bf16.mxu0 0
    %1482 = vmatmul.mubr.bf16.gmra.mxu0 %v687
    %v1483 = vpop.f32.mrf.mxu0
    %v1484 = vadd.f32 0.0, %v1483
    %v1485 = vpop.f32.mrf.mxu0
    %v1486 = vpop.f32.mrf.mxu0
    %v1487 = vadd.f32 0.0, %v1486
    %v1488 = vpop.f32.mrf.mxu0
    %1489 = vdwg.mxu0
    %v1490 = vadd.f32 %v240, %v883
    %v1491 = vadd.f32 %v241, %v885
    %v1492 = vadd.f32 %v242, %v1236
    %v1493 = vadd.f32 %v243, %v887
    %v1494 = vadd.f32 %v244, %v889
    %v1495 = vadd.f32 %v245, %v1239
    %v1496 = vadd.f32 %v246, %v893
    %v1497 = vadd.f32 %v247, %v895
    %v1498 = vadd.f32 %v248, %v1244
    %v1499 = vadd.f32 %v249, %v897
    %v1500 = vadd.f32 %v250, %v899
    %v1501 = vadd.f32 %v251, %v1247
    %v1502 = vadd.f32 %v252, %v903
    %v1503 = vadd.f32 %v253, %v905
    %v1504 = vadd.f32 %v254, %v1252
    %v1505 = vadd.f32 %v255, %v907
    %v1506 = vadd.f32 %v256, %v909
    %v1507 = vadd.f32 %v257, %v1255
    %v1508 = vadd.f32 %v258, %v913
    %v1509 = vadd.f32 %v259, %v915
    %v1510 = vadd.f32 %v260, %v1260
    %v1511 = vadd.f32 %v261, %v917
    %v1512 = vadd.f32 %v262, %v919
    %v1513 = vadd.f32 %v263, %v1263
    %v1514 = vadd.f32 %v264, %v923
    %v1515 = vadd.f32 %v265, %v925
    %v1516 = vadd.f32 %v266, %v1268
    %v1517 = vadd.f32 %v267, %v927
    %v1518 = vadd.f32 %v268, %v929
    %v1519 = vadd.f32 %v269, %v1271
    %v1520 = vadd.f32 %v270, %v933
    %v1521 = vadd.f32 %v271, %v935
    %v1522 = vadd.f32 %v272, %v1276
    %v1523 = vadd.f32 %v273, %v937
    %v1524 = vadd.f32 %v274, %v939
    %v1525 = vadd.f32 %v275, %v1279
    %v1526 = vadd.f32 %v276, %v943
    %v1527 = vadd.f32 %v277, %v945
    %v1528 = vadd.f32 %v278, %v1284
    %v1529 = vadd.f32 %v279, %v947
    %v1530 = vadd.f32 %v280, %v949
    %v1531 = vadd.f32 %v281, %v1287
    %v1532 = vadd.f32 %v282, %v953
    %v1533 = vadd.f32 %v283, %v955
    %v1534 = vadd.f32 %v284, %v1292
    %v1535 = vadd.f32 %v285, %v957
    %v1536 = vadd.f32 %v286, %v959
    %v1537 = vadd.f32 %v287, %v1295
    %v1538 = vadd.f32 %v288, %v963
    %v1539 = vadd.f32 %v289, %v965
    %v1540 = vadd.f32 %v290, %v1300
    %v1541 = vadd.f32 %v291, %v967
    %v1542 = vadd.f32 %v292, %v969
    %v1543 = vadd.f32 %v293, %v1303
    %v1544 = vadd.f32 %v294, %v973
    %v1545 = vadd.f32 %v295, %v975
    %v1546 = vadd.f32 %v296, %v1308
    %v1547 = vadd.f32 %v297, %v977
    %v1548 = vadd.f32 %v298, %v979
    %v1549 = vadd.f32 %v299, %v1311
    %v1550 = vadd.f32 %v300, %v983
    %v1551 = vadd.f32 %v301, %v985
    %v1552 = vadd.f32 %v302, %v1316
    %v1553 = vadd.f32 %v303, %v987
    %v1554 = vadd.f32 %v304, %v989
    %v1555 = vadd.f32 %v305, %v1319
    %v1556 = vadd.f32 %v306, %v993
    %v1557 = vadd.f32 %v307, %v995
    %v1558 = vadd.f32 %v308, %v1324
    %v1559 = vadd.f32 %v309, %v997
    %v1560 = vadd.f32 %v310, %v999
    %v1561 = vadd.f32 %v311, %v1327
    %v1562 = vadd.f32 %v312, %v1003
    %v1563 = vadd.f32 %v313, %v1005
    %v1564 = vadd.f32 %v314, %v1332
    %v1565 = vadd.f32 %v315, %v1007
    %v1566 = vadd.f32 %v316, %v1009
    %v1567 = vadd.f32 %v317, %v1335
    %v1568 = vadd.f32 %v318, %v1013
    %v1569 = vadd.f32 %v319, %v1015
    %v1570 = vadd.f32 %v320, %v1340
    %v1571 = vadd.f32 %v321, %v1017
    %v1572 = vadd.f32 %v322, %v1019
    %v1573 = vadd.f32 %v323, %v1343
    %v1574 = vadd.f32 %v324, %v1023
    %v1575 = vadd.f32 %v325, %v1025
    %v1576 = vadd.f32 %v326, %v1348
    %v1577 = vadd.f32 %v327, %v1027
    %v1578 = vadd.f32 %v328, %v1029
    %v1579 = vadd.f32 %v329, %v1351
    %v1580 = vadd.f32 %v330, %v1033
    %v1581 = vadd.f32 %v331, %v1035
    %v1582 = vadd.f32 %v332, %v1356
    %v1583 = vadd.f32 %v333, %v1037
    %v1584 = vadd.f32 %v334, %v1039
    %v1585 = vadd.f32 %v335, %v1359
    %v1586 = vadd.f32 %v336, %v1043
    %v1587 = vadd.f32 %v337, %v1045
    %v1588 = vadd.f32 %v338, %v1364
    %v1589 = vadd.f32 %v339, %v1047
    %v1590 = vadd.f32 %v340, %v1049
    %v1591 = vadd.f32 %v341, %v1367
    %v1592 = vadd.f32 %v342, %v1053
    %v1593 = vadd.f32 %v343, %v1055
    %v1594 = vadd.f32 %v344, %v1372
    %v1595 = vadd.f32 %v345, %v1057
    %v1596 = vadd.f32 %v346, %v1059
    %v1597 = vadd.f32 %v347, %v1375
    %v1598 = vadd.f32 %v348, %v1063
    %v1599 = vadd.f32 %v349, %v1065
    %v1600 = vadd.f32 %v350, %v1380
    %v1601 = vadd.f32 %v351, %v1067
    %v1602 = vadd.f32 %v352, %v1069
    %v1603 = vadd.f32 %v353, %v1383
    %v1604 = vadd.f32 %v354, %v1073
    %v1605 = vadd.f32 %v355, %v1075
    %v1606 = vadd.f32 %v356, %v1388
    %v1607 = vadd.f32 %v357, %v1077
    %v1608 = vadd.f32 %v358, %v1079
    %v1609 = vadd.f32 %v359, %v1391
    %v1610 = vadd.f32 %v360, %v1083
    %v1611 = vadd.f32 %v361, %v1085
    %v1612 = vadd.f32 %v362, %v1396
    %v1613 = vadd.f32 %v363, %v1087
    %v1614 = vadd.f32 %v364, %v1089
    %v1615 = vadd.f32 %v365, %v1399
    %v1616 = vadd.f32 %v366, %v1093
    %v1617 = vadd.f32 %v367, %v1095
    %v1618 = vadd.f32 %v368, %v1404
    %v1619 = vadd.f32 %v369, %v1097
    %v1620 = vadd.f32 %v370, %v1099
    %v1621 = vadd.f32 %v371, %v1407
    %v1622 = vadd.f32 %v372, %v1103
    %v1623 = vadd.f32 %v373, %v1105
    %v1624 = vadd.f32 %v374, %v1412
    %v1625 = vadd.f32 %v375, %v1107
    %v1626 = vadd.f32 %v376, %v1109
    %v1627 = vadd.f32 %v377, %v1415
    %v1628 = vadd.f32 %v378, %v1113
    %v1629 = vadd.f32 %v379, %v1115
    %v1630 = vadd.f32 %v380, %v1420
    %v1631 = vadd.f32 %v381, %v1117
    %v1632 = vadd.f32 %v382, %v1119
    %v1633 = vadd.f32 %v383, %v1423
    %v1634 = vadd.f32 %v384, %v1123
    %v1635 = vadd.f32 %v385, %v1125
    %v1636 = vadd.f32 %v386, %v1428
    %v1637 = vadd.f32 %v387, %v1127
    %v1638 = vadd.f32 %v388, %v1129
    %v1639 = vadd.f32 %v389, %v1431
    %v1640 = vadd.f32 %v390, %v1133
    %v1641 = vadd.f32 %v391, %v1135
    %v1642 = vadd.f32 %v392, %v1436
    %v1643 = vadd.f32 %v393, %v1137
    %v1644 = vadd.f32 %v394, %v1139
    %v1645 = vadd.f32 %v395, %v1439
    %v1646 = vadd.f32 %v396, %v1143
    %v1647 = vadd.f32 %v397, %v1145
    %v1648 = vadd.f32 %v398, %v1444
    %v1649 = vadd.f32 %v399, %v1147
    %v1650 = vadd.f32 %v400, %v1149
    %v1651 = vadd.f32 %v401, %v1447
    %v1652 = vadd.f32 %v402, %v1153
    %v1653 = vadd.f32 %v403, %v1155
    %v1654 = vadd.f32 %v404, %v1452
    %v1655 = vadd.f32 %v405, %v1157
    %v1656 = vadd.f32 %v406, %v1159
    %v1657 = vadd.f32 %v407, %v1455
    %v1658 = vadd.f32 %v408, %v1163
    %v1659 = vadd.f32 %v409, %v1165
    %v1660 = vadd.f32 %v410, %v1460
    %v1661 = vadd.f32 %v411, %v1167
    %v1662 = vadd.f32 %v412, %v1169
    %v1663 = vadd.f32 %v413, %v1463
    %v1664 = vadd.f32 %v414, %v1173
    %v1665 = vadd.f32 %v415, %v1175
    %v1666 = vadd.f32 %v416, %v1468
    %v1667 = vadd.f32 %v417, %v1177
    %v1668 = vadd.f32 %v418, %v1179
    %v1669 = vadd.f32 %v419, %v1471
    %v1670 = vadd.f32 %v420, %v1183
    %v1671 = vadd.f32 %v421, %v1185
    %v1672 = vadd.f32 %v422, %v1476
    %v1673 = vadd.f32 %v423, %v1187
    %v1674 = vadd.f32 %v424, %v1189
    %v1675 = vadd.f32 %v425, %v1479
    %v1676 = vadd.f32 %v426, %v1193
    %v1677 = vadd.f32 %v427, %v1195
    %v1678 = vadd.f32 %v428, %v1484
    %v1679 = vadd.f32 %v429, %v1197
    %v1680 = vadd.f32 %v430, %v1199
    %v1681 = vadd.f32 %v431, %v1487
    %1682 = vst [vmem:[#allocation2] sm:$0xff] %v1490
    %1683 = vst [vmem:[#allocation2 + $0x8] sm:$0xff] %v1491
    %1684 = vst [vmem:[#allocation2 + $0x10] sm:$0xff] %v1492
    %1685 = vst [vmem:[#allocation2 + $0x18] sm:$0xff] %v1493
    %1686 = vst [vmem:[#allocation2 + $0x20] sm:$0xff] %v1494
    %1687 = vst [vmem:[#allocation2 + $0x28] sm:$0xff] %v1495
    %1688 = vst [vmem:[#allocation2 + $0x30] sm:$0xff] %v1496
    %1689 = vst [vmem:[#allocation2 + $0x38] sm:$0xff] %v1497
    %1690 = vst [vmem:[#allocation2 + $0x40] sm:$0xff] %v1498
    %1691 = vst [vmem:[#allocation2 + $0x48] sm:$0xff] %v1499
    %1692 = vst [vmem:[#allocation2 + $0x50] sm:$0xff] %v1500
    %1693 = vst [vmem:[#allocation2 + $0x58] sm:$0xff] %v1501
    %1694 = vst [vmem:[#allocation2 + $0x60] sm:$0xff] %v1502
    %1695 = vst [vmem:[#allocation2 + $0x68] sm:$0xff] %v1503
    %1696 = vst [vmem:[#allocation2 + $0x70] sm:$0xff] %v1504
    %1697 = vst [vmem:[#allocation2 + $0x78] sm:$0xff] %v1505
    %1698 = vst [vmem:[#allocation2 + $0x80] sm:$0xff] %v1506
    %1699 = vst [vmem:[#allocation2 + $0x88] sm:$0xff] %v1507
    %1700 = vst [vmem:[#allocation2 + $0x90] sm:$0xff] %v1508
    %1701 = vst [vmem:[#allocation2 + $0x98] sm:$0xff] %v1509
    %1702 = vst [vmem:[#allocation2 + $0xa0] sm:$0xff] %v1510
    %1703 = vst [vmem:[#allocation2 + $0xa8] sm:$0xff] %v1511
    %1704 = vst [vmem:[#allocation2 + $0xb0] sm:$0xff] %v1512
    %1705 = vst [vmem:[#allocation2 + $0xb8] sm:$0xff] %v1513
    %1706 = vst [vmem:[#allocation2 + $0xc0] sm:$0xff] %v1514
    %1707 = vst [vmem:[#allocation2 + $0xc8] sm:$0xff] %v1515
    %1708 = vst [vmem:[#allocation2 + $0xd0] sm:$0xff] %v1516
    %1709 = vst [vmem:[#allocation2 + $0xd8] sm:$0xff] %v1517
    %1710 = vst [vmem:[#allocation2 + $0xe0] sm:$0xff] %v1518
    %1711 = vst [vmem:[#allocation2 + $0xe8] sm:$0xff] %v1519
    %1712 = vst [vmem:[#allocation2 + $0xf0] sm:$0xff] %v1520
    %1713 = vst [vmem:[#allocation2 + $0xf8] sm:$0xff] %v1521
    %1714 = vst [vmem:[#allocation2 + $0x100] sm:$0xff] %v1522
    %1715 = vst [vmem:[#allocation2 + $0x108] sm:$0xff] %v1523
    %1716 = vst [vmem:[#allocation2 + $0x110] sm:$0xff] %v1524
    %1717 = vst [vmem:[#allocation2 + $0x118] sm:$0xff] %v1525
    %1718 = vst [vmem:[#allocation2 + $0x120] sm:$0xff] %v1526
    %1719 = vst [vmem:[#allocation2 + $0x128] sm:$0xff] %v1527
    %1720 = vst [vmem:[#allocation2 + $0x130] sm:$0xff] %v1528
    %1721 = vst [vmem:[#allocation2 + $0x138] sm:$0xff] %v1529
    %1722 = vst [vmem:[#allocation2 + $0x140] sm:$0xff] %v1530
    %1723 = vst [vmem:[#allocation2 + $0x148] sm:$0xff] %v1531
    %1724 = vst [vmem:[#allocation2 + $0x150] sm:$0xff] %v1532
    %1725 = vst [vmem:[#allocation2 + $0x158] sm:$0xff] %v1533
    %1726 = vst [vmem:[#allocation2 + $0x160] sm:$0xff] %v1534
    %1727 = vst [vmem:[#allocation2 + $0x168] sm:$0xff] %v1535
    %1728 = vst [vmem:[#allocation2 + $0x170] sm:$0xff] %v1536
    %1729 = vst [vmem:[#allocation2 + $0x178] sm:$0xff] %v1537
    %1730 = vst [vmem:[#allocation2 + $0x180] sm:$0xff] %v1538
    %1731 = vst [vmem:[#allocation2 + $0x188] sm:$0xff] %v1539
    %1732 = vst [vmem:[#allocation2 + $0x190] sm:$0xff] %v1540
    %1733 = vst [vmem:[#allocation2 + $0x198] sm:$0xff] %v1541
    %1734 = vst [vmem:[#allocation2 + $0x1a0] sm:$0xff] %v1542
    %1735 = vst [vmem:[#allocation2 + $0x1a8] sm:$0xff] %v1543
    %1736 = vst [vmem:[#allocation2 + $0x1b0] sm:$0xff] %v1544
    %1737 = vst [vmem:[#allocation2 + $0x1b8] sm:$0xff] %v1545
    %1738 = vst [vmem:[#allocation2 + $0x1c0] sm:$0xff] %v1546
    %1739 = vst [vmem:[#allocation2 + $0x1c8] sm:$0xff] %v1547
    %1740 = vst [vmem:[#allocation2 + $0x1d0] sm:$0xff] %v1548
    %1741 = vst [vmem:[#allocation2 + $0x1d8] sm:$0xff] %v1549
    %1742 = vst [vmem:[#allocation2 + $0x1e0] sm:$0xff] %v1550
    %1743 = vst [vmem:[#allocation2 + $0x1e8] sm:$0xff] %v1551
    %1744 = vst [vmem:[#allocation2 + $0x1f0] sm:$0xff] %v1552
    %1745 = vst [vmem:[#allocation2 + $0x1f8] sm:$0xff] %v1553
    %1746 = vst [vmem:[#allocation2 + $0x200] sm:$0xff] %v1554
    %1747 = vst [vmem:[#allocation2 + $0x208] sm:$0xff] %v1555
    %1748 = vst [vmem:[#allocation2 + $0x210] sm:$0xff] %v1556
    %1749 = vst [vmem:[#allocation2 + $0x218] sm:$0xff] %v1557
    %1750 = vst [vmem:[#allocation2 + $0x220] sm:$0xff] %v1558
    %1751 = vst [vmem:[#allocation2 + $0x228] sm:$0xff] %v1559
    %1752 = vst [vmem:[#allocation2 + $0x230] sm:$0xff] %v1560
    %1753 = vst [vmem:[#allocation2 + $0x238] sm:$0xff] %v1561
    %1754 = vst [vmem:[#allocation2 + $0x240] sm:$0xff] %v1562
    %1755 = vst [vmem:[#allocation2 + $0x248] sm:$0xff] %v1563
    %1756 = vst [vmem:[#allocation2 + $0x250] sm:$0xff] %v1564
    %1757 = vst [vmem:[#allocation2 + $0x258] sm:$0xff] %v1565
    %1758 = vst [vmem:[#allocation2 + $0x260] sm:$0xff] %v1566
    %1759 = vst [vmem:[#allocation2 + $0x268] sm:$0xff] %v1567
    %1760 = vst [vmem:[#allocation2 + $0x270] sm:$0xff] %v1568
    %1761 = vst [vmem:[#allocation2 + $0x278] sm:$0xff] %v1569
    %1762 = vst [vmem:[#allocation2 + $0x280] sm:$0xff] %v1570
    %1763 = vst [vmem:[#allocation2 + $0x288] sm:$0xff] %v1571
    %1764 = vst [vmem:[#allocation2 + $0x290] sm:$0xff] %v1572
    %1765 = vst [vmem:[#allocation2 + $0x298] sm:$0xff] %v1573
    %1766 = vst [vmem:[#allocation2 + $0x2a0] sm:$0xff] %v1574
    %1767 = vst [vmem:[#allocation2 + $0x2a8] sm:$0xff] %v1575
    %1768 = vst [vmem:[#allocation2 + $0x2b0] sm:$0xff] %v1576
    %1769 = vst [vmem:[#allocation2 + $0x2b8] sm:$0xff] %v1577
    %1770 = vst [vmem:[#allocation2 + $0x2c0] sm:$0xff] %v1578
    %1771 = vst [vmem:[#allocation2 + $0x2c8] sm:$0xff] %v1579
    %1772 = vst [vmem:[#allocation2 + $0x2d0] sm:$0xff] %v1580
    %1773 = vst [vmem:[#allocation2 + $0x2d8] sm:$0xff] %v1581
    %1774 = vst [vmem:[#allocation2 + $0x2e0] sm:$0xff] %v1582
    %1775 = vst [vmem:[#allocation2 + $0x2e8] sm:$0xff] %v1583
    %1776 = vst [vmem:[#allocation2 + $0x2f0] sm:$0xff] %v1584
    %1777 = vst [vmem:[#allocation2 + $0x2f8] sm:$0xff] %v1585
    %1778 = vst [vmem:[#allocation2 + $0x300] sm:$0xff] %v1586
    %1779 = vst [vmem:[#allocation2 + $0x308] sm:$0xff] %v1587
    %1780 = vst [vmem:[#allocation2 + $0x310] sm:$0xff] %v1588
    %1781 = vst [vmem:[#allocation2 + $0x318] sm:$0xff] %v1589
    %1782 = vst [vmem:[#allocation2 + $0x320] sm:$0xff] %v1590
    %1783 = vst [vmem:[#allocation2 + $0x328] sm:$0xff] %v1591
    %1784 = vst [vmem:[#allocation2 + $0x330] sm:$0xff] %v1592
    %1785 = vst [vmem:[#allocation2 + $0x338] sm:$0xff] %v1593
    %1786 = vst [vmem:[#allocation2 + $0x340] sm:$0xff] %v1594
    %1787 = vst [vmem:[#allocation2 + $0x348] sm:$0xff] %v1595
    %1788 = vst [vmem:[#allocation2 + $0x350] sm:$0xff] %v1596
    %1789 = vst [vmem:[#allocation2 + $0x358] sm:$0xff] %v1597
    %1790 = vst [vmem:[#allocation2 + $0x360] sm:$0xff] %v1598
    %1791 = vst [vmem:[#allocation2 + $0x368] sm:$0xff] %v1599
    %1792 = vst [vmem:[#allocation2 + $0x370] sm:$0xff] %v1600
    %1793 = vst [vmem:[#allocation2 + $0x378] sm:$0xff] %v1601
    %1794 = vst [vmem:[#allocation2 + $0x380] sm:$0xff] %v1602
    %1795 = vst [vmem:[#allocation2 + $0x388] sm:$0xff] %v1603
    %1796 = vst [vmem:[#allocation2 + $0x390] sm:$0xff] %v1604
    %1797 = vst [vmem:[#allocation2 + $0x398] sm:$0xff] %v1605
    %1798 = vst [vmem:[#allocation2 + $0x3a0] sm:$0xff] %v1606
    %1799 = vst [vmem:[#allocation2 + $0x3a8] sm:$0xff] %v1607
    %1800 = vst [vmem:[#allocation2 + $0x3b0] sm:$0xff] %v1608
    %1801 = vst [vmem:[#allocation2 + $0x3b8] sm:$0xff] %v1609
    %1802 = vst [vmem:[#allocation2 + $0x3c0] sm:$0xff] %v1610
    %1803 = vst [vmem:[#allocation2 + $0x3c8] sm:$0xff] %v1611
    %1804 = vst [vmem:[#allocation2 + $0x3d0] sm:$0xff] %v1612
    %1805 = vst [vmem:[#allocation2 + $0x3d8] sm:$0xff] %v1613
    %1806 = vst [vmem:[#allocation2 + $0x3e0] sm:$0xff] %v1614
    %1807 = vst [vmem:[#allocation2 + $0x3e8] sm:$0xff] %v1615
    %1808 = vst [vmem:[#allocation2 + $0x3f0] sm:$0xff] %v1616
    %1809 = vst [vmem:[#allocation2 + $0x3f8] sm:$0xff] %v1617
    %1810 = vst [vmem:[#allocation2 + $0x400] sm:$0xff] %v1618
    %1811 = vst [vmem:[#allocation2 + $0x408] sm:$0xff] %v1619
    %1812 = vst [vmem:[#allocation2 + $0x410] sm:$0xff] %v1620
    %1813 = vst [vmem:[#allocation2 + $0x418] sm:$0xff] %v1621
    %1814 = vst [vmem:[#allocation2 + $0x420] sm:$0xff] %v1622
    %1815 = vst [vmem:[#allocation2 + $0x428] sm:$0xff] %v1623
    %1816 = vst [vmem:[#allocation2 + $0x430] sm:$0xff] %v1624
    %1817 = vst [vmem:[#allocation2 + $0x438] sm:$0xff] %v1625
    %1818 = vst [vmem:[#allocation2 + $0x440] sm:$0xff] %v1626
    %1819 = vst [vmem:[#allocation2 + $0x448] sm:$0xff] %v1627
    %1820 = vst [vmem:[#allocation2 + $0x450] sm:$0xff] %v1628
    %1821 = vst [vmem:[#allocation2 + $0x458] sm:$0xff] %v1629
    %1822 = vst [vmem:[#allocation2 + $0x460] sm:$0xff] %v1630
    %1823 = vst [vmem:[#allocation2 + $0x468] sm:$0xff] %v1631
    %1824 = vst [vmem:[#allocation2 + $0x470] sm:$0xff] %v1632
    %1825 = vst [vmem:[#allocation2 + $0x478] sm:$0xff] %v1633
    %1826 = vst [vmem:[#allocation2 + $0x480] sm:$0xff] %v1634
    %1827 = vst [vmem:[#allocation2 + $0x488] sm:$0xff] %v1635
    %1828 = vst [vmem:[#allocation2 + $0x490] sm:$0xff] %v1636
    %1829 = vst [vmem:[#allocation2 + $0x498] sm:$0xff] %v1637
    %1830 = vst [vmem:[#allocation2 + $0x4a0] sm:$0xff] %v1638
    %1831 = vst [vmem:[#allocation2 + $0x4a8] sm:$0xff] %v1639
    %1832 = vst [vmem:[#allocation2 + $0x4b0] sm:$0xff] %v1640
    %1833 = vst [vmem:[#allocation2 + $0x4b8] sm:$0xff] %v1641
    %1834 = vst [vmem:[#allocation2 + $0x4c0] sm:$0xff] %v1642
    %1835 = vst [vmem:[#allocation2 + $0x4c8] sm:$0xff] %v1643
    %1836 = vst [vmem:[#allocation2 + $0x4d0] sm:$0xff] %v1644
    %1837 = vst [vmem:[#allocation2 + $0x4d8] sm:$0xff] %v1645
    %1838 = vst [vmem:[#allocation2 + $0x4e0] sm:$0xff] %v1646
    %1839 = vst [vmem:[#allocation2 + $0x4e8] sm:$0xff] %v1647
    %1840 = vst [vmem:[#allocation2 + $0x4f0] sm:$0xff] %v1648
    %1841 = vst [vmem:[#allocation2 + $0x4f8] sm:$0xff] %v1649
    %1842 = vst [vmem:[#allocation2 + $0x500] sm:$0xff] %v1650
    %1843 = vst [vmem:[#allocation2 + $0x508] sm:$0xff] %v1651
    %1844 = vst [vmem:[#allocation2 + $0x510] sm:$0xff] %v1652
    %1845 = vst [vmem:[#allocation2 + $0x518] sm:$0xff] %v1653
    %1846 = vst [vmem:[#allocation2 + $0x520] sm:$0xff] %v1654
    %1847 = vst [vmem:[#allocation2 + $0x528] sm:$0xff] %v1655
    %1848 = vst [vmem:[#allocation2 + $0x530] sm:$0xff] %v1656
    %1849 = vst [vmem:[#allocation2 + $0x538] sm:$0xff] %v1657
    %1850 = vst [vmem:[#allocation2 + $0x540] sm:$0xff] %v1658
    %1851 = vst [vmem:[#allocation2 + $0x548] sm:$0xff] %v1659
    %1852 = vst [vmem:[#allocation2 + $0x550] sm:$0xff] %v1660
    %1853 = vst [vmem:[#allocation2 + $0x558] sm:$0xff] %v1661
    %1854 = vst [vmem:[#allocation2 + $0x560] sm:$0xff] %v1662
    %1855 = vst [vmem:[#allocation2 + $0x568] sm:$0xff] %v1663
    %1856 = vst [vmem:[#allocation2 + $0x570] sm:$0xff] %v1664
    %1857 = vst [vmem:[#allocation2 + $0x578] sm:$0xff] %v1665
    %1858 = vst [vmem:[#allocation2 + $0x580] sm:$0xff] %v1666
    %1859 = vst [vmem:[#allocation2 + $0x588] sm:$0xff] %v1667
    %1860 = vst [vmem:[#allocation2 + $0x590] sm:$0xff] %v1668
    %1861 = vst [vmem:[#allocation2 + $0x598] sm:$0xff] %v1669
    %1862 = vst [vmem:[#allocation2 + $0x5a0] sm:$0xff] %v1670
    %1863 = vst [vmem:[#allocation2 + $0x5a8] sm:$0xff] %v1671
    %1864 = vst [vmem:[#allocation2 + $0x5b0] sm:$0xff] %v1672
    %1865 = vst [vmem:[#allocation2 + $0x5b8] sm:$0xff] %v1673
    %1866 = vst [vmem:[#allocation2 + $0x5c0] sm:$0xff] %v1674
    %1867 = vst [vmem:[#allocation2 + $0x5c8] sm:$0xff] %v1675
    %1868 = vst [vmem:[#allocation2 + $0x5d0] sm:$0xff] %v1676
    %1869 = vst [vmem:[#allocation2 + $0x5d8] sm:$0xff] %v1677
    %1870 = vst [vmem:[#allocation2 + $0x5e0] sm:$0xff] %v1678
    %1871 = vst [vmem:[#allocation2 + $0x5e8] sm:$0xff] %v1679
    %1872 = vst [vmem:[#allocation2 + $0x5f0] sm:$0xff] %v1680
    %1873 = vst [vmem:[#allocation2 + $0x5f8] sm:$0xff] %v1681
    // Predicated region
    $region26: #{tpu_custom_call.1} parent=1 // pred_check
      %p1874 = pneg %p44
    $region27: #{tpu_custom_call.1} parent=1 // pred_check_branch
      %1876 = sbr.rel (%p1874) target = $region29
    $region28: #{tpu_custom_call.1} parent=1 // pred_region
      %v1877 = vld [vmem:[#allocation2] sm:$0xff]
      %v1878 = vld [vmem:[#allocation2 + $0x8] sm:$0xff]
      %v1879 = vld [vmem:[#allocation2 + $0x10] sm:$0xff]
      %v1880 = vld [vmem:[#allocation2 + $0x18] sm:$0xff]
      %v1881 = vld [vmem:[#allocation2 + $0x20] sm:$0xff]
      %v1882 = vld [vmem:[#allocation2 + $0x28] sm:$0xff]
      %v1883 = vld [vmem:[#allocation2 + $0x30] sm:$0xff]
      %v1884 = vld [vmem:[#allocation2 + $0x38] sm:$0xff]
      %v1885 = vld [vmem:[#allocation2 + $0x40] sm:$0xff]
      %v1886 = vld [vmem:[#allocation2 + $0x48] sm:$0xff]
      %v1887 = vld [vmem:[#allocation2 + $0x50] sm:$0xff]
      %v1888 = vld [vmem:[#allocation2 + $0x58] sm:$0xff]
      %v1889 = vld [vmem:[#allocation2 + $0x60] sm:$0xff]
      %v1890 = vld [vmem:[#allocation2 + $0x68] sm:$0xff]
      %v1891 = vld [vmem:[#allocation2 + $0x70] sm:$0xff]
      %v1892 = vld [vmem:[#allocation2 + $0x78] sm:$0xff]
      %v1893 = vld [vmem:[#allocation2 + $0x80] sm:$0xff]
      %v1894 = vld [vmem:[#allocation2 + $0x88] sm:$0xff]
      %v1895 = vld [vmem:[#allocation2 + $0x90] sm:$0xff]
      %v1896 = vld [vmem:[#allocation2 + $0x98] sm:$0xff]
      %v1897 = vld [vmem:[#allocation2 + $0xa0] sm:$0xff]
      %v1898 = vld [vmem:[#allocation2 + $0xa8] sm:$0xff]
      %v1899 = vld [vmem:[#allocation2 + $0xb0] sm:$0xff]
      %v1900 = vld [vmem:[#allocation2 + $0xb8] sm:$0xff]
      %v1901 = vld [vmem:[#allocation2 + $0xc0] sm:$0xff]
      %v1902 = vld [vmem:[#allocation2 + $0xc8] sm:$0xff]
      %v1903 = vld [vmem:[#allocation2 + $0xd0] sm:$0xff]
      %v1904 = vld [vmem:[#allocation2 + $0xd8] sm:$0xff]
      %v1905 = vld [vmem:[#allocation2 + $0xe0] sm:$0xff]
      %v1906 = vld [vmem:[#allocation2 + $0xe8] sm:$0xff]
      %v1907 = vld [vmem:[#allocation2 + $0xf0] sm:$0xff]
      %v1908 = vld [vmem:[#allocation2 + $0xf8] sm:$0xff]
      %v1909 = vld [vmem:[#allocation2 + $0x100] sm:$0xff]
      %v1910 = vld [vmem:[#allocation2 + $0x108] sm:$0xff]
      %v1911 = vld [vmem:[#allocation2 + $0x110] sm:$0xff]
      %v1912 = vld [vmem:[#allocation2 + $0x118] sm:$0xff]
      %v1913 = vld [vmem:[#allocation2 + $0x120] sm:$0xff]
      %v1914 = vld [vmem:[#allocation2 + $0x128] sm:$0xff]
      %v1915 = vld [vmem:[#allocation2 + $0x130] sm:$0xff]
      %v1916 = vld [vmem:[#allocation2 + $0x138] sm:$0xff]
      %v1917 = vld [vmem:[#allocation2 + $0x140] sm:$0xff]
      %v1918 = vld [vmem:[#allocation2 + $0x148] sm:$0xff]
      %v1919 = vld [vmem:[#allocation2 + $0x150] sm:$0xff]
      %v1920 = vld [vmem:[#allocation2 + $0x158] sm:$0xff]
      %v1921 = vld [vmem:[#allocation2 + $0x160] sm:$0xff]
      %v1922 = vld [vmem:[#allocation2 + $0x168] sm:$0xff]
      %v1923 = vld [vmem:[#allocation2 + $0x170] sm:$0xff]
      %v1924 = vld [vmem:[#allocation2 + $0x178] sm:$0xff]
      %v1925 = vld [vmem:[#allocation2 + $0x180] sm:$0xff]
      %v1926 = vld [vmem:[#allocation2 + $0x188] sm:$0xff]
      %v1927 = vld [vmem:[#allocation2 + $0x190] sm:$0xff]
      %v1928 = vld [vmem:[#allocation2 + $0x198] sm:$0xff]
      %v1929 = vld [vmem:[#allocation2 + $0x1a0] sm:$0xff]
      %v1930 = vld [vmem:[#allocation2 + $0x1a8] sm:$0xff]
      %v1931 = vld [vmem:[#allocation2 + $0x1b0] sm:$0xff]
      %v1932 = vld [vmem:[#allocation2 + $0x1b8] sm:$0xff]
      %v1933 = vld [vmem:[#allocation2 + $0x1c0] sm:$0xff]
      %v1934 = vld [vmem:[#allocation2 + $0x1c8] sm:$0xff]
      %v1935 = vld [vmem:[#allocation2 + $0x1d0] sm:$0xff]
      %v1936 = vld [vmem:[#allocation2 + $0x1d8] sm:$0xff]
      %v1937 = vld [vmem:[#allocation2 + $0x1e0] sm:$0xff]
      %v1938 = vld [vmem:[#allocation2 + $0x1e8] sm:$0xff]
      %v1939 = vld [vmem:[#allocation2 + $0x1f0] sm:$0xff]
      %v1940 = vld [vmem:[#allocation2 + $0x1f8] sm:$0xff]
      %v1941 = vld [vmem:[#allocation2 + $0x200] sm:$0xff]
      %v1942 = vld [vmem:[#allocation2 + $0x208] sm:$0xff]
      %v1943 = vld [vmem:[#allocation2 + $0x210] sm:$0xff]
      %v1944 = vld [vmem:[#allocation2 + $0x218] sm:$0xff]
      %v1945 = vld [vmem:[#allocation2 + $0x220] sm:$0xff]
      %v1946 = vld [vmem:[#allocation2 + $0x228] sm:$0xff]
      %v1947 = vld [vmem:[#allocation2 + $0x230] sm:$0xff]
      %v1948 = vld [vmem:[#allocation2 + $0x238] sm:$0xff]
      %v1949 = vld [vmem:[#allocation2 + $0x240] sm:$0xff]
      %v1950 = vld [vmem:[#allocation2 + $0x248] sm:$0xff]
      %v1951 = vld [vmem:[#allocation2 + $0x250] sm:$0xff]
      %v1952 = vld [vmem:[#allocation2 + $0x258] sm:$0xff]
      %v1953 = vld [vmem:[#allocation2 + $0x260] sm:$0xff]
      %v1954 = vld [vmem:[#allocation2 + $0x268] sm:$0xff]
      %v1955 = vld [vmem:[#allocation2 + $0x270] sm:$0xff]
      %v1956 = vld [vmem:[#allocation2 + $0x278] sm:$0xff]
      %v1957 = vld [vmem:[#allocation2 + $0x280] sm:$0xff]
      %v1958 = vld [vmem:[#allocation2 + $0x288] sm:$0xff]
      %v1959 = vld [vmem:[#allocation2 + $0x290] sm:$0xff]
      %v1960 = vld [vmem:[#allocation2 + $0x298] sm:$0xff]
      %v1961 = vld [vmem:[#allocation2 + $0x2a0] sm:$0xff]
      %v1962 = vld [vmem:[#allocation2 + $0x2a8] sm:$0xff]
      %v1963 = vld [vmem:[#allocation2 + $0x2b0] sm:$0xff]
      %v1964 = vld [vmem:[#allocation2 + $0x2b8] sm:$0xff]
      %v1965 = vld [vmem:[#allocation2 + $0x2c0] sm:$0xff]
      %v1966 = vld [vmem:[#allocation2 + $0x2c8] sm:$0xff]
      %v1967 = vld [vmem:[#allocation2 + $0x2d0] sm:$0xff]
      %v1968 = vld [vmem:[#allocation2 + $0x2d8] sm:$0xff]
      %v1969 = vld [vmem:[#allocation2 + $0x2e0] sm:$0xff]
      %v1970 = vld [vmem:[#allocation2 + $0x2e8] sm:$0xff]
      %v1971 = vld [vmem:[#allocation2 + $0x2f0] sm:$0xff]
      %v1972 = vld [vmem:[#allocation2 + $0x2f8] sm:$0xff]
      %v1973 = vld [vmem:[#allocation2 + $0x300] sm:$0xff]
      %v1974 = vld [vmem:[#allocation2 + $0x308] sm:$0xff]
      %v1975 = vld [vmem:[#allocation2 + $0x310] sm:$0xff]
      %v1976 = vld [vmem:[#allocation2 + $0x318] sm:$0xff]
      %v1977 = vld [vmem:[#allocation2 + $0x320] sm:$0xff]
      %v1978 = vld [vmem:[#allocation2 + $0x328] sm:$0xff]
      %v1979 = vld [vmem:[#allocation2 + $0x330] sm:$0xff]
      %v1980 = vld [vmem:[#allocation2 + $0x338] sm:$0xff]
      %v1981 = vld [vmem:[#allocation2 + $0x340] sm:$0xff]
      %v1982 = vld [vmem:[#allocation2 + $0x348] sm:$0xff]
      %v1983 = vld [vmem:[#allocation2 + $0x350] sm:$0xff]
      %v1984 = vld [vmem:[#allocation2 + $0x358] sm:$0xff]
      %v1985 = vld [vmem:[#allocation2 + $0x360] sm:$0xff]
      %v1986 = vld [vmem:[#allocation2 + $0x368] sm:$0xff]
      %v1987 = vld [vmem:[#allocation2 + $0x370] sm:$0xff]
      %v1988 = vld [vmem:[#allocation2 + $0x378] sm:$0xff]
      %v1989 = vld [vmem:[#allocation2 + $0x380] sm:$0xff]
      %v1990 = vld [vmem:[#allocation2 + $0x388] sm:$0xff]
      %v1991 = vld [vmem:[#allocation2 + $0x390] sm:$0xff]
      %v1992 = vld [vmem:[#allocation2 + $0x398] sm:$0xff]
      %v1993 = vld [vmem:[#allocation2 + $0x3a0] sm:$0xff]
      %v1994 = vld [vmem:[#allocation2 + $0x3a8] sm:$0xff]
      %v1995 = vld [vmem:[#allocation2 + $0x3b0] sm:$0xff]
      %v1996 = vld [vmem:[#allocation2 + $0x3b8] sm:$0xff]
      %v1997 = vld [vmem:[#allocation2 + $0x3c0] sm:$0xff]
      %v1998 = vld [vmem:[#allocation2 + $0x3c8] sm:$0xff]
      %v1999 = vld [vmem:[#allocation2 + $0x3d0] sm:$0xff]
      %v2000 = vld [vmem:[#allocation2 + $0x3d8] sm:$0xff]
      %v2001 = vld [vmem:[#allocation2 + $0x3e0] sm:$0xff]
      %v2002 = vld [vmem:[#allocation2 + $0x3e8] sm:$0xff]
      %v2003 = vld [vmem:[#allocation2 + $0x3f0] sm:$0xff]
      %v2004 = vld [vmem:[#allocation2 + $0x3f8] sm:$0xff]
      %v2005 = vld [vmem:[#allocation2 + $0x400] sm:$0xff]
      %v2006 = vld [vmem:[#allocation2 + $0x408] sm:$0xff]
      %v2007 = vld [vmem:[#allocation2 + $0x410] sm:$0xff]
      %v2008 = vld [vmem:[#allocation2 + $0x418] sm:$0xff]
      %v2009 = vld [vmem:[#allocation2 + $0x420] sm:$0xff]
      %v2010 = vld [vmem:[#allocation2 + $0x428] sm:$0xff]
      %v2011 = vld [vmem:[#allocation2 + $0x430] sm:$0xff]
      %v2012 = vld [vmem:[#allocation2 + $0x438] sm:$0xff]
      %v2013 = vld [vmem:[#allocation2 + $0x440] sm:$0xff]
      %v2014 = vld [vmem:[#allocation2 + $0x448] sm:$0xff]
      %v2015 = vld [vmem:[#allocation2 + $0x450] sm:$0xff]
      %v2016 = vld [vmem:[#allocation2 + $0x458] sm:$0xff]
      %v2017 = vld [vmem:[#allocation2 + $0x460] sm:$0xff]
      %v2018 = vld [vmem:[#allocation2 + $0x468] sm:$0xff]
      %v2019 = vld [vmem:[#allocation2 + $0x470] sm:$0xff]
      %v2020 = vld [vmem:[#allocation2 + $0x478] sm:$0xff]
      %v2021 = vld [vmem:[#allocation2 + $0x480] sm:$0xff]
      %v2022 = vld [vmem:[#allocation2 + $0x488] sm:$0xff]
      %v2023 = vld [vmem:[#allocation2 + $0x490] sm:$0xff]
      %v2024 = vld [vmem:[#allocation2 + $0x498] sm:$0xff]
      %v2025 = vld [vmem:[#allocation2 + $0x4a0] sm:$0xff]
      %v2026 = vld [vmem:[#allocation2 + $0x4a8] sm:$0xff]
      %v2027 = vld [vmem:[#allocation2 + $0x4b0] sm:$0xff]
      %v2028 = vld [vmem:[#allocation2 + $0x4b8] sm:$0xff]
      %v2029 = vld [vmem:[#allocation2 + $0x4c0] sm:$0xff]
      %v2030 = vld [vmem:[#allocation2 + $0x4c8] sm:$0xff]
      %v2031 = vld [vmem:[#allocation2 + $0x4d0] sm:$0xff]
      %v2032 = vld [vmem:[#allocation2 + $0x4d8] sm:$0xff]
      %v2033 = vld [vmem:[#allocation2 + $0x4e0] sm:$0xff]
      %v2034 = vld [vmem:[#allocation2 + $0x4e8] sm:$0xff]
      %v2035 = vld [vmem:[#allocation2 + $0x4f0] sm:$0xff]
      %v2036 = vld [vmem:[#allocation2 + $0x4f8] sm:$0xff]
      %v2037 = vld [vmem:[#allocation2 + $0x500] sm:$0xff]
      %v2038 = vld [vmem:[#allocation2 + $0x508] sm:$0xff]
      %v2039 = vld [vmem:[#allocation2 + $0x510] sm:$0xff]
      %v2040 = vld [vmem:[#allocation2 + $0x518] sm:$0xff]
      %v2041 = vld [vmem:[#allocation2 + $0x520] sm:$0xff]
      %v2042 = vld [vmem:[#allocation2 + $0x528] sm:$0xff]
      %v2043 = vld [vmem:[#allocation2 + $0x530] sm:$0xff]
      %v2044 = vld [vmem:[#allocation2 + $0x538] sm:$0xff]
      %v2045 = vld [vmem:[#allocation2 + $0x540] sm:$0xff]
      %v2046 = vld [vmem:[#allocation2 + $0x548] sm:$0xff]
      %v2047 = vld [vmem:[#allocation2 + $0x550] sm:$0xff]
      %v2048 = vld [vmem:[#allocation2 + $0x558] sm:$0xff]
      %v2049 = vld [vmem:[#allocation2 + $0x560] sm:$0xff]
      %v2050 = vld [vmem:[#allocation2 + $0x568] sm:$0xff]
      %v2051 = vld [vmem:[#allocation2 + $0x570] sm:$0xff]
      %v2052 = vld [vmem:[#allocation2 + $0x578] sm:$0xff]
      %v2053 = vld [vmem:[#allocation2 + $0x580] sm:$0xff]
      %v2054 = vld [vmem:[#allocation2 + $0x588] sm:$0xff]
      %v2055 = vld [vmem:[#allocation2 + $0x590] sm:$0xff]
      %v2056 = vld [vmem:[#allocation2 + $0x598] sm:$0xff]
      %v2057 = vld [vmem:[#allocation2 + $0x5a0] sm:$0xff]
      %v2058 = vld [vmem:[#allocation2 + $0x5a8] sm:$0xff]
      %v2059 = vld [vmem:[#allocation2 + $0x5b0] sm:$0xff]
      %v2060 = vld [vmem:[#allocation2 + $0x5b8] sm:$0xff]
      %v2061 = vld [vmem:[#allocation2 + $0x5c0] sm:$0xff]
      %v2062 = vld [vmem:[#allocation2 + $0x5c8] sm:$0xff]
      %v2063 = vld [vmem:[#allocation2 + $0x5d0] sm:$0xff]
      %v2064 = vld [vmem:[#allocation2 + $0x5d8] sm:$0xff]
      %v2065 = vld [vmem:[#allocation2 + $0x5e0] sm:$0xff]
      %v2066 = vld [vmem:[#allocation2 + $0x5e8] sm:$0xff]
      %v2067 = vld [vmem:[#allocation2 + $0x5f0] sm:$0xff]
      %v2068 = vld [vmem:[#allocation2 + $0x5f8] sm:$0xff]
      %v2069 = vld [vmem:[%s2] sm:$0x7]
      %v2071 = vlaneseq
      %v2072 = vshrl.u32 %v2071, 7
      %v2073 = vsub.s32 0, %v2072
      %v2074 = vrot.slane %v2069, %v2073
      %v2075 = vlaneseq
      %v2076 = vshrl.u32 %v2075, 7
      %v2077 = vsub.s32 1, %v2076
      %v2078 = vrot.slane %v2069, %v2077
      %v2079 = vlaneseq
      %v2080 = vshrl.u32 %v2079, 7
      %v2081 = vsub.s32 2, %v2080
      %v2082 = vrot.slane %v2069, %v2081
      %v2086 = vadd.f32 %v1877, %v2074
      %v2087 = vadd.f32 %v1878, %v2078
      %v2088 = vadd.f32 %v1879, %v2082
      %v2089 = vadd.f32 %v1880, %v2074
      %v2090 = vadd.f32 %v1881, %v2078
      %v2091 = vadd.f32 %v1882, %v2082
      %v2092 = vadd.f32 %v1883, %v2074
      %v2093 = vadd.f32 %v1884, %v2078
      %v2094 = vadd.f32 %v1885, %v2082
      %v2095 = vadd.f32 %v1886, %v2074
      %v2096 = vadd.f32 %v1887, %v2078
      %v2097 = vadd.f32 %v1888, %v2082
      %v2098 = vadd.f32 %v1889, %v2074
      %v2099 = vadd.f32 %v1890, %v2078
      %v2100 = vadd.f32 %v1891, %v2082
      %v2101 = vadd.f32 %v1892, %v2074
      %v2102 = vadd.f32 %v1893, %v2078
      %v2103 = vadd.f32 %v1894, %v2082
      %v2104 = vadd.f32 %v1895, %v2074
      %v2105 = vadd.f32 %v1896, %v2078
      %v2106 = vadd.f32 %v1897, %v2082
      %v2107 = vadd.f32 %v1898, %v2074
      %v2108 = vadd.f32 %v1899, %v2078
      %v2109 = vadd.f32 %v1900, %v2082
      %v2110 = vadd.f32 %v1901, %v2074
      %v2111 = vadd.f32 %v1902, %v2078
      %v2112 = vadd.f32 %v1903, %v2082
      %v2113 = vadd.f32 %v1904, %v2074
      %v2114 = vadd.f32 %v1905, %v2078
      %v2115 = vadd.f32 %v1906, %v2082
      %v2116 = vadd.f32 %v1907, %v2074
      %v2117 = vadd.f32 %v1908, %v2078
      %v2118 = vadd.f32 %v1909, %v2082
      %v2119 = vadd.f32 %v1910, %v2074
      %v2120 = vadd.f32 %v1911, %v2078
      %v2121 = vadd.f32 %v1912, %v2082
      %v2122 = vadd.f32 %v1913, %v2074
      %v2123 = vadd.f32 %v1914, %v2078
      %v2124 = vadd.f32 %v1915, %v2082
      %v2125 = vadd.f32 %v1916, %v2074
      %v2126 = vadd.f32 %v1917, %v2078
      %v2127 = vadd.f32 %v1918, %v2082
      %v2128 = vadd.f32 %v1919, %v2074
      %v2129 = vadd.f32 %v1920, %v2078
      %v2130 = vadd.f32 %v1921, %v2082
      %v2131 = vadd.f32 %v1922, %v2074
      %v2132 = vadd.f32 %v1923, %v2078
      %v2133 = vadd.f32 %v1924, %v2082
      %v2134 = vadd.f32 %v1925, %v2074
      %v2135 = vadd.f32 %v1926, %v2078
      %v2136 = vadd.f32 %v1927, %v2082
      %v2137 = vadd.f32 %v1928, %v2074
      %v2138 = vadd.f32 %v1929, %v2078
      %v2139 = vadd.f32 %v1930, %v2082
      %v2140 = vadd.f32 %v1931, %v2074
      %v2141 = vadd.f32 %v1932, %v2078
      %v2142 = vadd.f32 %v1933, %v2082
      %v2143 = vadd.f32 %v1934, %v2074
      %v2144 = vadd.f32 %v1935, %v2078
      %v2145 = vadd.f32 %v1936, %v2082
      %v2146 = vadd.f32 %v1937, %v2074
      %v2147 = vadd.f32 %v1938, %v2078
      %v2148 = vadd.f32 %v1939, %v2082
      %v2149 = vadd.f32 %v1940, %v2074
      %v2150 = vadd.f32 %v1941, %v2078
      %v2151 = vadd.f32 %v1942, %v2082
      %v2152 = vadd.f32 %v1943, %v2074
      %v2153 = vadd.f32 %v1944, %v2078
      %v2154 = vadd.f32 %v1945, %v2082
      %v2155 = vadd.f32 %v1946, %v2074
      %v2156 = vadd.f32 %v1947, %v2078
      %v2157 = vadd.f32 %v1948, %v2082
      %v2158 = vadd.f32 %v1949, %v2074
      %v2159 = vadd.f32 %v1950, %v2078
      %v2160 = vadd.f32 %v1951, %v2082
      %v2161 = vadd.f32 %v1952, %v2074
      %v2162 = vadd.f32 %v1953, %v2078
      %v2163 = vadd.f32 %v1954, %v2082
      %v2164 = vadd.f32 %v1955, %v2074
      %v2165 = vadd.f32 %v1956, %v2078
      %v2166 = vadd.f32 %v1957, %v2082
      %v2167 = vadd.f32 %v1958, %v2074
      %v2168 = vadd.f32 %v1959, %v2078
      %v2169 = vadd.f32 %v1960, %v2082
      %v2170 = vadd.f32 %v1961, %v2074
      %v2171 = vadd.f32 %v1962, %v2078
      %v2172 = vadd.f32 %v1963, %v2082
      %v2173 = vadd.f32 %v1964, %v2074
      %v2174 = vadd.f32 %v1965, %v2078
      %v2175 = vadd.f32 %v1966, %v2082
      %v2176 = vadd.f32 %v1967, %v2074
      %v2177 = vadd.f32 %v1968, %v2078
      %v2178 = vadd.f32 %v1969, %v2082
      %v2179 = vadd.f32 %v1970, %v2074
      %v2180 = vadd.f32 %v1971, %v2078
      %v2181 = vadd.f32 %v1972, %v2082
      %v2182 = vadd.f32 %v1973, %v2074
      %v2183 = vadd.f32 %v1974, %v2078
      %v2184 = vadd.f32 %v1975, %v2082
      %v2185 = vadd.f32 %v1976, %v2074
      %v2186 = vadd.f32 %v1977, %v2078
      %v2187 = vadd.f32 %v1978, %v2082
      %v2188 = vadd.f32 %v1979, %v2074
      %v2189 = vadd.f32 %v1980, %v2078
      %v2190 = vadd.f32 %v1981, %v2082
      %v2191 = vadd.f32 %v1982, %v2074
      %v2192 = vadd.f32 %v1983, %v2078
      %v2193 = vadd.f32 %v1984, %v2082
      %v2194 = vadd.f32 %v1985, %v2074
      %v2195 = vadd.f32 %v1986, %v2078
      %v2196 = vadd.f32 %v1987, %v2082
      %v2197 = vadd.f32 %v1988, %v2074
      %v2198 = vadd.f32 %v1989, %v2078
      %v2199 = vadd.f32 %v1990, %v2082
      %v2200 = vadd.f32 %v1991, %v2074
      %v2201 = vadd.f32 %v1992, %v2078
      %v2202 = vadd.f32 %v1993, %v2082
      %v2203 = vadd.f32 %v1994, %v2074
      %v2204 = vadd.f32 %v1995, %v2078
      %v2205 = vadd.f32 %v1996, %v2082
      %v2206 = vadd.f32 %v1997, %v2074
      %v2207 = vadd.f32 %v1998, %v2078
      %v2208 = vadd.f32 %v1999, %v2082
      %v2209 = vadd.f32 %v2000, %v2074
      %v2210 = vadd.f32 %v2001, %v2078
      %v2211 = vadd.f32 %v2002, %v2082
      %v2212 = vadd.f32 %v2003, %v2074
      %v2213 = vadd.f32 %v2004, %v2078
      %v2214 = vadd.f32 %v2005, %v2082
      %v2215 = vadd.f32 %v2006, %v2074
      %v2216 = vadd.f32 %v2007, %v2078
      %v2217 = vadd.f32 %v2008, %v2082
      %v2218 = vadd.f32 %v2009, %v2074
      %v2219 = vadd.f32 %v2010, %v2078
      %v2220 = vadd.f32 %v2011, %v2082
      %v2221 = vadd.f32 %v2012, %v2074
      %v2222 = vadd.f32 %v2013, %v2078
      %v2223 = vadd.f32 %v2014, %v2082
      %v2224 = vadd.f32 %v2015, %v2074
      %v2225 = vadd.f32 %v2016, %v2078
      %v2226 = vadd.f32 %v2017, %v2082
      %v2227 = vadd.f32 %v2018, %v2074
      %v2228 = vadd.f32 %v2019, %v2078
      %v2229 = vadd.f32 %v2020, %v2082
      %v2230 = vadd.f32 %v2021, %v2074
      %v2231 = vadd.f32 %v2022, %v2078
      %v2232 = vadd.f32 %v2023, %v2082
      %v2233 = vadd.f32 %v2024, %v2074
      %v2234 = vadd.f32 %v2025, %v2078
      %v2235 = vadd.f32 %v2026, %v2082
      %v2236 = vadd.f32 %v2027, %v2074
      %v2237 = vadd.f32 %v2028, %v2078
      %v2238 = vadd.f32 %v2029, %v2082
      %v2239 = vadd.f32 %v2030, %v2074
      %v2240 = vadd.f32 %v2031, %v2078
      %v2241 = vadd.f32 %v2032, %v2082
      %v2242 = vadd.f32 %v2033, %v2074
      %v2243 = vadd.f32 %v2034, %v2078
      %v2244 = vadd.f32 %v2035, %v2082
      %v2245 = vadd.f32 %v2036, %v2074
      %v2246 = vadd.f32 %v2037, %v2078
      %v2247 = vadd.f32 %v2038, %v2082
      %v2248 = vadd.f32 %v2039, %v2074
      %v2249 = vadd.f32 %v2040, %v2078
      %v2250 = vadd.f32 %v2041, %v2082
      %v2251 = vadd.f32 %v2042, %v2074
      %v2252 = vadd.f32 %v2043, %v2078
      %v2253 = vadd.f32 %v2044, %v2082
      %v2254 = vadd.f32 %v2045, %v2074
      %v2255 = vadd.f32 %v2046, %v2078
      %v2256 = vadd.f32 %v2047, %v2082
      %v2257 = vadd.f32 %v2048, %v2074
      %v2258 = vadd.f32 %v2049, %v2078
      %v2259 = vadd.f32 %v2050, %v2082
      %v2260 = vadd.f32 %v2051, %v2074
      %v2261 = vadd.f32 %v2052, %v2078
      %v2262 = vadd.f32 %v2053, %v2082
      %v2263 = vadd.f32 %v2054, %v2074
      %v2264 = vadd.f32 %v2055, %v2078
      %v2265 = vadd.f32 %v2056, %v2082
      %v2266 = vadd.f32 %v2057, %v2074
      %v2267 = vadd.f32 %v2058, %v2078
      %v2268 = vadd.f32 %v2059, %v2082
      %v2269 = vadd.f32 %v2060, %v2074
      %v2270 = vadd.f32 %v2061, %v2078
      %v2271 = vadd.f32 %v2062, %v2082
      %v2272 = vadd.f32 %v2063, %v2074
      %v2273 = vadd.f32 %v2064, %v2078
      %v2274 = vadd.f32 %v2065, %v2082
      %v2275 = vadd.f32 %v2066, %v2074
      %v2276 = vadd.f32 %v2067, %v2078
      %v2277 = vadd.f32 %v2068, %v2082
      %v2278 = vpack.c.bf16 %v2089, %v2086
      %v2279 = vpack.c.bf16 %v2090, %v2087
      %v2280 = vpack.c.bf16 %v2091, %v2088
      %v2281 = vpack.c.bf16 %v2095, %v2092
      %v2282 = vpack.c.bf16 %v2096, %v2093
      %v2283 = vpack.c.bf16 %v2097, %v2094
      %v2284 = vpack.c.bf16 %v2101, %v2098
      %v2285 = vpack.c.bf16 %v2102, %v2099
      %v2286 = vpack.c.bf16 %v2103, %v2100
      %v2287 = vpack.c.bf16 %v2107, %v2104
      %v2288 = vpack.c.bf16 %v2108, %v2105
      %v2289 = vpack.c.bf16 %v2109, %v2106
      %v2290 = vpack.c.bf16 %v2113, %v2110
      %v2291 = vpack.c.bf16 %v2114, %v2111
      %v2292 = vpack.c.bf16 %v2115, %v2112
      %v2293 = vpack.c.bf16 %v2119, %v2116
      %v2294 = vpack.c.bf16 %v2120, %v2117
      %v2295 = vpack.c.bf16 %v2121, %v2118
      %v2296 = vpack.c.bf16 %v2125, %v2122
      %v2297 = vpack.c.bf16 %v2126, %v2123
      %v2298 = vpack.c.bf16 %v2127, %v2124
      %v2299 = vpack.c.bf16 %v2131, %v2128
      %v2300 = vpack.c.bf16 %v2132, %v2129
      %v2301 = vpack.c.bf16 %v2133, %v2130
      %v2302 = vpack.c.bf16 %v2137, %v2134
      %v2303 = vpack.c.bf16 %v2138, %v2135
      %v2304 = vpack.c.bf16 %v2139, %v2136
      %v2305 = vpack.c.bf16 %v2143, %v2140
      %v2306 = vpack.c.bf16 %v2144, %v2141
      %v2307 = vpack.c.bf16 %v2145, %v2142
      %v2308 = vpack.c.bf16 %v2149, %v2146
      %v2309 = vpack.c.bf16 %v2150, %v2147
      %v2310 = vpack.c.bf16 %v2151, %v2148
      %v2311 = vpack.c.bf16 %v2155, %v2152
      %v2312 = vpack.c.bf16 %v2156, %v2153
      %v2313 = vpack.c.bf16 %v2157, %v2154
      %v2314 = vpack.c.bf16 %v2161, %v2158
      %v2315 = vpack.c.bf16 %v2162, %v2159
      %v2316 = vpack.c.bf16 %v2163, %v2160
      %v2317 = vpack.c.bf16 %v2167, %v2164
      %v2318 = vpack.c.bf16 %v2168, %v2165
      %v2319 = vpack.c.bf16 %v2169, %v2166
      %v2320 = vpack.c.bf16 %v2173, %v2170
      %v2321 = vpack.c.bf16 %v2174, %v2171
      %v2322 = vpack.c.bf16 %v2175, %v2172
      %v2323 = vpack.c.bf16 %v2179, %v2176
      %v2324 = vpack.c.bf16 %v2180, %v2177
      %v2325 = vpack.c.bf16 %v2181, %v2178
      %v2326 = vpack.c.bf16 %v2185, %v2182
      %v2327 = vpack.c.bf16 %v2186, %v2183
      %v2328 = vpack.c.bf16 %v2187, %v2184
      %v2329 = vpack.c.bf16 %v2191, %v2188
      %v2330 = vpack.c.bf16 %v2192, %v2189
      %v2331 = vpack.c.bf16 %v2193, %v2190
      %v2332 = vpack.c.bf16 %v2197, %v2194
      %v2333 = vpack.c.bf16 %v2198, %v2195
      %v2334 = vpack.c.bf16 %v2199, %v2196
      %v2335 = vpack.c.bf16 %v2203, %v2200
      %v2336 = vpack.c.bf16 %v2204, %v2201
      %v2337 = vpack.c.bf16 %v2205, %v2202
      %v2338 = vpack.c.bf16 %v2209, %v2206
      %v2339 = vpack.c.bf16 %v2210, %v2207
      %v2340 = vpack.c.bf16 %v2211, %v2208
      %v2341 = vpack.c.bf16 %v2215, %v2212
      %v2342 = vpack.c.bf16 %v2216, %v2213
      %v2343 = vpack.c.bf16 %v2217, %v2214
      %v2344 = vpack.c.bf16 %v2221, %v2218
      %v2345 = vpack.c.bf16 %v2222, %v2219
      %v2346 = vpack.c.bf16 %v2223, %v2220
      %v2347 = vpack.c.bf16 %v2227, %v2224
      %v2348 = vpack.c.bf16 %v2228, %v2225
      %v2349 = vpack.c.bf16 %v2229, %v2226
      %v2350 = vpack.c.bf16 %v2233, %v2230
      %v2351 = vpack.c.bf16 %v2234, %v2231
      %v2352 = vpack.c.bf16 %v2235, %v2232
      %v2353 = vpack.c.bf16 %v2239, %v2236
      %v2354 = vpack.c.bf16 %v2240, %v2237
      %v2355 = vpack.c.bf16 %v2241, %v2238
      %v2356 = vpack.c.bf16 %v2245, %v2242
      %v2357 = vpack.c.bf16 %v2246, %v2243
      %v2358 = vpack.c.bf16 %v2247, %v2244
      %v2359 = vpack.c.bf16 %v2251, %v2248
      %v2360 = vpack.c.bf16 %v2252, %v2249
      %v2361 = vpack.c.bf16 %v2253, %v2250
      %v2362 = vpack.c.bf16 %v2257, %v2254
      %v2363 = vpack.c.bf16 %v2258, %v2255
      %v2364 = vpack.c.bf16 %v2259, %v2256
      %v2365 = vpack.c.bf16 %v2263, %v2260
      %v2366 = vpack.c.bf16 %v2264, %v2261
      %v2367 = vpack.c.bf16 %v2265, %v2262
      %v2368 = vpack.c.bf16 %v2269, %v2266
      %v2369 = vpack.c.bf16 %v2270, %v2267
      %v2370 = vpack.c.bf16 %v2271, %v2268
      %v2371 = vpack.c.bf16 %v2275, %v2272
      %v2372 = vpack.c.bf16 %v2276, %v2273
      %v2373 = vpack.c.bf16 %v2277, %v2274
      %v2470 = vunpack.c.l.b16 %v2278
      %v2471 = vunpack.c.l.b16 %v2279
      %v2472 = vunpack.c.l.b16 %v2280
      %v2473 = vunpack.c.h.b16 %v2278
      %v2474 = vunpack.c.h.b16 %v2279
      %v2475 = vunpack.c.h.b16 %v2280
      %v2476 = vunpack.c.l.b16 %v2281
      %v2477 = vunpack.c.l.b16 %v2282
      %v2478 = vunpack.c.l.b16 %v2283
      %v2479 = vunpack.c.h.b16 %v2281
      %v2480 = vunpack.c.h.b16 %v2282
      %v2481 = vunpack.c.h.b16 %v2283
      %v2482 = vunpack.c.l.b16 %v2284
      %v2483 = vunpack.c.l.b16 %v2285
      %v2484 = vunpack.c.l.b16 %v2286
      %v2485 = vunpack.c.h.b16 %v2284
      %v2486 = vunpack.c.h.b16 %v2285
      %v2487 = vunpack.c.h.b16 %v2286
      %v2488 = vunpack.c.l.b16 %v2287
      %v2489 = vunpack.c.l.b16 %v2288
      %v2490 = vunpack.c.l.b16 %v2289
      %v2491 = vunpack.c.h.b16 %v2287
      %v2492 = vunpack.c.h.b16 %v2288
      %v2493 = vunpack.c.h.b16 %v2289
      %v2494 = vunpack.c.l.b16 %v2290
      %v2495 = vunpack.c.l.b16 %v2291
      %v2496 = vunpack.c.l.b16 %v2292
      %v2497 = vunpack.c.h.b16 %v2290
      %v2498 = vunpack.c.h.b16 %v2291
      %v2499 = vunpack.c.h.b16 %v2292
      %v2500 = vunpack.c.l.b16 %v2293
      %v2501 = vunpack.c.l.b16 %v2294
      %v2502 = vunpack.c.l.b16 %v2295
      %v2503 = vunpack.c.h.b16 %v2293
      %v2504 = vunpack.c.h.b16 %v2294
      %v2505 = vunpack.c.h.b16 %v2295
      %v2506 = vunpack.c.l.b16 %v2296
      %v2507 = vunpack.c.l.b16 %v2297
      %v2508 = vunpack.c.l.b16 %v2298
      %v2509 = vunpack.c.h.b16 %v2296
      %v2510 = vunpack.c.h.b16 %v2297
      %v2511 = vunpack.c.h.b16 %v2298
      %v2512 = vunpack.c.l.b16 %v2299
      %v2513 = vunpack.c.l.b16 %v2300
      %v2514 = vunpack.c.l.b16 %v2301
      %v2515 = vunpack.c.h.b16 %v2299
      %v2516 = vunpack.c.h.b16 %v2300
      %v2517 = vunpack.c.h.b16 %v2301
      %v2518 = vunpack.c.l.b16 %v2302
      %v2519 = vunpack.c.l.b16 %v2303
      %v2520 = vunpack.c.l.b16 %v2304
      %v2521 = vunpack.c.h.b16 %v2302
      %v2522 = vunpack.c.h.b16 %v2303
      %v2523 = vunpack.c.h.b16 %v2304
      %v2524 = vunpack.c.l.b16 %v2305
      %v2525 = vunpack.c.l.b16 %v2306
      %v2526 = vunpack.c.l.b16 %v2307
      %v2527 = vunpack.c.h.b16 %v2305
      %v2528 = vunpack.c.h.b16 %v2306
      %v2529 = vunpack.c.h.b16 %v2307
      %v2530 = vunpack.c.l.b16 %v2308
      %v2531 = vunpack.c.l.b16 %v2309
      %v2532 = vunpack.c.l.b16 %v2310
      %v2533 = vunpack.c.h.b16 %v2308
      %v2534 = vunpack.c.h.b16 %v2309
      %v2535 = vunpack.c.h.b16 %v2310
      %v2536 = vunpack.c.l.b16 %v2311
      %v2537 = vunpack.c.l.b16 %v2312
      %v2538 = vunpack.c.l.b16 %v2313
      %v2539 = vunpack.c.h.b16 %v2311
      %v2540 = vunpack.c.h.b16 %v2312
      %v2541 = vunpack.c.h.b16 %v2313
      %v2542 = vunpack.c.l.b16 %v2314
      %v2543 = vunpack.c.l.b16 %v2315
      %v2544 = vunpack.c.l.b16 %v2316
      %v2545 = vunpack.c.h.b16 %v2314
      %v2546 = vunpack.c.h.b16 %v2315
      %v2547 = vunpack.c.h.b16 %v2316
      %v2548 = vunpack.c.l.b16 %v2317
      %v2549 = vunpack.c.l.b16 %v2318
      %v2550 = vunpack.c.l.b16 %v2319
      %v2551 = vunpack.c.h.b16 %v2317
      %v2552 = vunpack.c.h.b16 %v2318
      %v2553 = vunpack.c.h.b16 %v2319
      %v2554 = vunpack.c.l.b16 %v2320
      %v2555 = vunpack.c.l.b16 %v2321
      %v2556 = vunpack.c.l.b16 %v2322
      %v2557 = vunpack.c.h.b16 %v2320
      %v2558 = vunpack.c.h.b16 %v2321
      %v2559 = vunpack.c.h.b16 %v2322
      %v2560 = vunpack.c.l.b16 %v2323
      %v2561 = vunpack.c.l.b16 %v2324
      %v2562 = vunpack.c.l.b16 %v2325
      %v2563 = vunpack.c.h.b16 %v2323
      %v2564 = vunpack.c.h.b16 %v2324
      %v2565 = vunpack.c.h.b16 %v2325
      %v2566 = vunpack.c.l.b16 %v2326
      %v2567 = vunpack.c.l.b16 %v2327
      %v2568 = vunpack.c.l.b16 %v2328
      %v2569 = vunpack.c.h.b16 %v2326
      %v2570 = vunpack.c.h.b16 %v2327
      %v2571 = vunpack.c.h.b16 %v2328
      %v2572 = vunpack.c.l.b16 %v2329
      %v2573 = vunpack.c.l.b16 %v2330
      %v2574 = vunpack.c.l.b16 %v2331
      %v2575 = vunpack.c.h.b16 %v2329
      %v2576 = vunpack.c.h.b16 %v2330
      %v2577 = vunpack.c.h.b16 %v2331
      %v2578 = vunpack.c.l.b16 %v2332
      %v2579 = vunpack.c.l.b16 %v2333
      %v2580 = vunpack.c.l.b16 %v2334
      %v2581 = vunpack.c.h.b16 %v2332
      %v2582 = vunpack.c.h.b16 %v2333
      %v2583 = vunpack.c.h.b16 %v2334
      %v2584 = vunpack.c.l.b16 %v2335
      %v2585 = vunpack.c.l.b16 %v2336
      %v2586 = vunpack.c.l.b16 %v2337
      %v2587 = vunpack.c.h.b16 %v2335
      %v2588 = vunpack.c.h.b16 %v2336
      %v2589 = vunpack.c.h.b16 %v2337
      %v2590 = vunpack.c.l.b16 %v2338
      %v2591 = vunpack.c.l.b16 %v2339
      %v2592 = vunpack.c.l.b16 %v2340
      %v2593 = vunpack.c.h.b16 %v2338
      %v2594 = vunpack.c.h.b16 %v2339
      %v2595 = vunpack.c.h.b16 %v2340
      %v2596 = vunpack.c.l.b16 %v2341
      %v2597 = vunpack.c.l.b16 %v2342
      %v2598 = vunpack.c.l.b16 %v2343
      %v2599 = vunpack.c.h.b16 %v2341
      %v2600 = vunpack.c.h.b16 %v2342
      %v2601 = vunpack.c.h.b16 %v2343
      %v2602 = vunpack.c.l.b16 %v2344
      %v2603 = vunpack.c.l.b16 %v2345
      %v2604 = vunpack.c.l.b16 %v2346
      %v2605 = vunpack.c.h.b16 %v2344
      %v2606 = vunpack.c.h.b16 %v2345
      %v2607 = vunpack.c.h.b16 %v2346
      %v2608 = vunpack.c.l.b16 %v2347
      %v2609 = vunpack.c.l.b16 %v2348
      %v2610 = vunpack.c.l.b16 %v2349
      %v2611 = vunpack.c.h.b16 %v2347
      %v2612 = vunpack.c.h.b16 %v2348
      %v2613 = vunpack.c.h.b16 %v2349
      %v2614 = vunpack.c.l.b16 %v2350
      %v2615 = vunpack.c.l.b16 %v2351
      %v2616 = vunpack.c.l.b16 %v2352
      %v2617 = vunpack.c.h.b16 %v2350
      %v2618 = vunpack.c.h.b16 %v2351
      %v2619 = vunpack.c.h.b16 %v2352
      %v2620 = vunpack.c.l.b16 %v2353
      %v2621 = vunpack.c.l.b16 %v2354
      %v2622 = vunpack.c.l.b16 %v2355
      %v2623 = vunpack.c.h.b16 %v2353
      %v2624 = vunpack.c.h.b16 %v2354
      %v2625 = vunpack.c.h.b16 %v2355
      %v2626 = vunpack.c.l.b16 %v2356
      %v2627 = vunpack.c.l.b16 %v2357
      %v2628 = vunpack.c.l.b16 %v2358
      %v2629 = vunpack.c.h.b16 %v2356
      %v2630 = vunpack.c.h.b16 %v2357
      %v2631 = vunpack.c.h.b16 %v2358
      %v2632 = vunpack.c.l.b16 %v2359
      %v2633 = vunpack.c.l.b16 %v2360
      %v2634 = vunpack.c.l.b16 %v2361
      %v2635 = vunpack.c.h.b16 %v2359
      %v2636 = vunpack.c.h.b16 %v2360
      %v2637 = vunpack.c.h.b16 %v2361
      %v2638 = vunpack.c.l.b16 %v2362
      %v2639 = vunpack.c.l.b16 %v2363
      %v2640 = vunpack.c.l.b16 %v2364
      %v2641 = vunpack.c.h.b16 %v2362
      %v2642 = vunpack.c.h.b16 %v2363
      %v2643 = vunpack.c.h.b16 %v2364
      %v2644 = vunpack.c.l.b16 %v2365
      %v2645 = vunpack.c.l.b16 %v2366
      %v2646 = vunpack.c.l.b16 %v2367
      %v2647 = vunpack.c.h.b16 %v2365
      %v2648 = vunpack.c.h.b16 %v2366
      %v2649 = vunpack.c.h.b16 %v2367
      %v2650 = vunpack.c.l.b16 %v2368
      %v2651 = vunpack.c.l.b16 %v2369
      %v2652 = vunpack.c.l.b16 %v2370
      %v2653 = vunpack.c.h.b16 %v2368
      %v2654 = vunpack.c.h.b16 %v2369
      %v2655 = vunpack.c.h.b16 %v2370
      %v2656 = vunpack.c.l.b16 %v2371
      %v2657 = vunpack.c.l.b16 %v2372
      %v2658 = vunpack.c.l.b16 %v2373
      %v2659 = vunpack.c.h.b16 %v2371
      %v2660 = vunpack.c.h.b16 %v2372
      %v2661 = vunpack.c.h.b16 %v2373
      %v2662 = vpack.c.b16 %v2471, %v2470
      %v2663 = vpack.c.b16 %v2472, %v2472
      %v2664 = vpack.c.b16 %v2474, %v2473
      %v2665 = vpack.c.b16 %v2475, %v2475
      %v2666 = vpack.c.b16 %v2477, %v2476
      %v2667 = vpack.c.b16 %v2478, %v2478
      %v2668 = vpack.c.b16 %v2480, %v2479
      %v2669 = vpack.c.b16 %v2481, %v2481
      %v2670 = vpack.c.b16 %v2483, %v2482
      %v2671 = vpack.c.b16 %v2484, %v2484
      %v2672 = vpack.c.b16 %v2486, %v2485
      %v2673 = vpack.c.b16 %v2487, %v2487
      %v2674 = vpack.c.b16 %v2489, %v2488
      %v2675 = vpack.c.b16 %v2490, %v2490
      %v2676 = vpack.c.b16 %v2492, %v2491
      %v2677 = vpack.c.b16 %v2493, %v2493
      %v2678 = vpack.c.b16 %v2495, %v2494
      %v2679 = vpack.c.b16 %v2496, %v2496
      %v2680 = vpack.c.b16 %v2498, %v2497
      %v2681 = vpack.c.b16 %v2499, %v2499
      %v2682 = vpack.c.b16 %v2501, %v2500
      %v2683 = vpack.c.b16 %v2502, %v2502
      %v2684 = vpack.c.b16 %v2504, %v2503
      %v2685 = vpack.c.b16 %v2505, %v2505
      %v2686 = vpack.c.b16 %v2507, %v2506
      %v2687 = vpack.c.b16 %v2508, %v2508
      %v2688 = vpack.c.b16 %v2510, %v2509
      %v2689 = vpack.c.b16 %v2511, %v2511
      %v2690 = vpack.c.b16 %v2513, %v2512
      %v2691 = vpack.c.b16 %v2514, %v2514
      %v2692 = vpack.c.b16 %v2516, %v2515
      %v2693 = vpack.c.b16 %v2517, %v2517
      %v2694 = vpack.c.b16 %v2519, %v2518
      %v2695 = vpack.c.b16 %v2520, %v2520
      %v2696 = vpack.c.b16 %v2522, %v2521
      %v2697 = vpack.c.b16 %v2523, %v2523
      %v2698 = vpack.c.b16 %v2525, %v2524
      %v2699 = vpack.c.b16 %v2526, %v2526
      %v2700 = vpack.c.b16 %v2528, %v2527
      %v2701 = vpack.c.b16 %v2529, %v2529
      %v2702 = vpack.c.b16 %v2531, %v2530
      %v2703 = vpack.c.b16 %v2532, %v2532
      %v2704 = vpack.c.b16 %v2534, %v2533
      %v2705 = vpack.c.b16 %v2535, %v2535
      %v2706 = vpack.c.b16 %v2537, %v2536
      %v2707 = vpack.c.b16 %v2538, %v2538
      %v2708 = vpack.c.b16 %v2540, %v2539
      %v2709 = vpack.c.b16 %v2541, %v2541
      %v2710 = vpack.c.b16 %v2543, %v2542
      %v2711 = vpack.c.b16 %v2544, %v2544
      %v2712 = vpack.c.b16 %v2546, %v2545
      %v2713 = vpack.c.b16 %v2547, %v2547
      %v2714 = vpack.c.b16 %v2549, %v2548
      %v2715 = vpack.c.b16 %v2550, %v2550
      %v2716 = vpack.c.b16 %v2552, %v2551
      %v2717 = vpack.c.b16 %v2553, %v2553
      %v2718 = vpack.c.b16 %v2555, %v2554
      %v2719 = vpack.c.b16 %v2556, %v2556
      %v2720 = vpack.c.b16 %v2558, %v2557
      %v2721 = vpack.c.b16 %v2559, %v2559
      %v2722 = vpack.c.b16 %v2561, %v2560
      %v2723 = vpack.c.b16 %v2562, %v2562
      %v2724 = vpack.c.b16 %v2564, %v2563
      %v2725 = vpack.c.b16 %v2565, %v2565
      %v2726 = vpack.c.b16 %v2567, %v2566
      %v2727 = vpack.c.b16 %v2568, %v2568
      %v2728 = vpack.c.b16 %v2570, %v2569
      %v2729 = vpack.c.b16 %v2571, %v2571
      %v2730 = vpack.c.b16 %v2573, %v2572
      %v2731 = vpack.c.b16 %v2574, %v2574
      %v2732 = vpack.c.b16 %v2576, %v2575
      %v2733 = vpack.c.b16 %v2577, %v2577
      %v2734 = vpack.c.b16 %v2579, %v2578
      %v2735 = vpack.c.b16 %v2580, %v2580
      %v2736 = vpack.c.b16 %v2582, %v2581
      %v2737 = vpack.c.b16 %v2583, %v2583
      %v2738 = vpack.c.b16 %v2585, %v2584
      %v2739 = vpack.c.b16 %v2586, %v2586
      %v2740 = vpack.c.b16 %v2588, %v2587
      %v2741 = vpack.c.b16 %v2589, %v2589
      %v2742 = vpack.c.b16 %v2591, %v2590
      %v2743 = vpack.c.b16 %v2592, %v2592
      %v2744 = vpack.c.b16 %v2594, %v2593
      %v2745 = vpack.c.b16 %v2595, %v2595
      %v2746 = vpack.c.b16 %v2597, %v2596
      %v2747 = vpack.c.b16 %v2598, %v2598
      %v2748 = vpack.c.b16 %v2600, %v2599
      %v2749 = vpack.c.b16 %v2601, %v2601
      %v2750 = vpack.c.b16 %v2603, %v2602
      %v2751 = vpack.c.b16 %v2604, %v2604
      %v2752 = vpack.c.b16 %v2606, %v2605
      %v2753 = vpack.c.b16 %v2607, %v2607
      %v2754 = vpack.c.b16 %v2609, %v2608
      %v2755 = vpack.c.b16 %v2610, %v2610
      %v2756 = vpack.c.b16 %v2612, %v2611
      %v2757 = vpack.c.b16 %v2613, %v2613
      %v2758 = vpack.c.b16 %v2615, %v2614
      %v2759 = vpack.c.b16 %v2616, %v2616
      %v2760 = vpack.c.b16 %v2618, %v2617
      %v2761 = vpack.c.b16 %v2619, %v2619
      %v2762 = vpack.c.b16 %v2621, %v2620
      %v2763 = vpack.c.b16 %v2622, %v2622
      %v2764 = vpack.c.b16 %v2624, %v2623
      %v2765 = vpack.c.b16 %v2625, %v2625
      %v2766 = vpack.c.b16 %v2627, %v2626
      %v2767 = vpack.c.b16 %v2628, %v2628
      %v2768 = vpack.c.b16 %v2630, %v2629
      %v2769 = vpack.c.b16 %v2631, %v2631
      %v2770 = vpack.c.b16 %v2633, %v2632
      %v2771 = vpack.c.b16 %v2634, %v2634
      %v2772 = vpack.c.b16 %v2636, %v2635
      %v2773 = vpack.c.b16 %v2637, %v2637
      %v2774 = vpack.c.b16 %v2639, %v2638
      %v2775 = vpack.c.b16 %v2640, %v2640
      %v2776 = vpack.c.b16 %v2642, %v2641
      %v2777 = vpack.c.b16 %v2643, %v2643
      %v2778 = vpack.c.b16 %v2645, %v2644
      %v2779 = vpack.c.b16 %v2646, %v2646
      %v2780 = vpack.c.b16 %v2648, %v2647
      %v2781 = vpack.c.b16 %v2649, %v2649
      %v2782 = vpack.c.b16 %v2651, %v2650
      %v2783 = vpack.c.b16 %v2652, %v2652
      %v2784 = vpack.c.b16 %v2654, %v2653
      %v2785 = vpack.c.b16 %v2655, %v2655
      %v2786 = vpack.c.b16 %v2657, %v2656
      %v2787 = vpack.c.b16 %v2658, %v2658
      %v2788 = vpack.c.b16 %v2660, %v2659
      %v2789 = vpack.c.b16 %v2661, %v2661
      %2918 = vst [vmem:[#allocation8] sm:$0xff] %v2662
      %2919 = vst [vmem:[#allocation8 + $0x8] sm:$0xf] %v2663
      %2920 = vst [vmem:[#allocation8 + $0xc] sm:$0xff] %v2664
      %2921 = vst [vmem:[#allocation8 + $0x14] sm:$0xf] %v2665
      %2922 = vst [vmem:[#allocation8 + $0x18] sm:$0xff] %v2666
      %2923 = vst [vmem:[#allocation8 + $0x20] sm:$0xf] %v2667
      %2924 = vst [vmem:[#allocation8 + $0x24] sm:$0xff] %v2668
      %2925 = vst [vmem:[#allocation8 + $0x2c] sm:$0xf] %v2669
      %2926 = vst [vmem:[#allocation8 + $0x30] sm:$0xff] %v2670
      %2927 = vst [vmem:[#allocation8 + $0x38] sm:$0xf] %v2671
      %2928 = vst [vmem:[#allocation8 + $0x3c] sm:$0xff] %v2672
      %2929 = vst [vmem:[#allocation8 + $0x44] sm:$0xf] %v2673
      %2930 = vst [vmem:[#allocation8 + $0x48] sm:$0xff] %v2674
      %2931 = vst [vmem:[#allocation8 + $0x50] sm:$0xf] %v2675
      %2932 = vst [vmem:[#allocation8 + $0x54] sm:$0xff] %v2676
      %2933 = vst [vmem:[#allocation8 + $0x5c] sm:$0xf] %v2677
      %2934 = vst [vmem:[#allocation8 + $0x60] sm:$0xff] %v2678
      %2935 = vst [vmem:[#allocation8 + $0x68] sm:$0xf] %v2679
      %2936 = vst [vmem:[#allocation8 + $0x6c] sm:$0xff] %v2680
      %2937 = vst [vmem:[#allocation8 + $0x74] sm:$0xf] %v2681
      %2938 = vst [vmem:[#allocation8 + $0x78] sm:$0xff] %v2682
      %2939 = vst [vmem:[#allocation8 + $0x80] sm:$0xf] %v2683
      %2940 = vst [vmem:[#allocation8 + $0x84] sm:$0xff] %v2684
      %2941 = vst [vmem:[#allocation8 + $0x8c] sm:$0xf] %v2685
      %2942 = vst [vmem:[#allocation8 + $0x90] sm:$0xff] %v2686
      %2943 = vst [vmem:[#allocation8 + $0x98] sm:$0xf] %v2687
      %2944 = vst [vmem:[#allocation8 + $0x9c] sm:$0xff] %v2688
      %2945 = vst [vmem:[#allocation8 + $0xa4] sm:$0xf] %v2689
      %2946 = vst [vmem:[#allocation8 + $0xa8] sm:$0xff] %v2690
      %2947 = vst [vmem:[#allocation8 + $0xb0] sm:$0xf] %v2691
      %2948 = vst [vmem:[#allocation8 + $0xb4] sm:$0xff] %v2692
      %2949 = vst [vmem:[#allocation8 + $0xbc] sm:$0xf] %v2693
      %2950 = vst [vmem:[#allocation8 + $0xc0] sm:$0xff] %v2694
      %2951 = vst [vmem:[#allocation8 + $0xc8] sm:$0xf] %v2695
      %2952 = vst [vmem:[#allocation8 + $0xcc] sm:$0xff] %v2696
      %2953 = vst [vmem:[#allocation8 + $0xd4] sm:$0xf] %v2697
      %2954 = vst [vmem:[#allocation8 + $0xd8] sm:$0xff] %v2698
      %2955 = vst [vmem:[#allocation8 + $0xe0] sm:$0xf] %v2699
      %2956 = vst [vmem:[#allocation8 + $0xe4] sm:$0xff] %v2700
      %2957 = vst [vmem:[#allocation8 + $0xec] sm:$0xf] %v2701
      %2958 = vst [vmem:[#allocation8 + $0xf0] sm:$0xff] %v2702
      %2959 = vst [vmem:[#allocation8 + $0xf8] sm:$0xf] %v2703
      %2960 = vst [vmem:[#allocation8 + $0xfc] sm:$0xff] %v2704
      %2961 = vst [vmem:[#allocation8 + $0x104] sm:$0xf] %v2705
      %2962 = vst [vmem:[#allocation8 + $0x108] sm:$0xff] %v2706
      %2963 = vst [vmem:[#allocation8 + $0x110] sm:$0xf] %v2707
      %2964 = vst [vmem:[#allocation8 + $0x114] sm:$0xff] %v2708
      %2965 = vst [vmem:[#allocation8 + $0x11c] sm:$0xf] %v2709
      %2966 = vst [vmem:[#allocation8 + $0x120] sm:$0xff] %v2710
      %2967 = vst [vmem:[#allocation8 + $0x128] sm:$0xf] %v2711
      %2968 = vst [vmem:[#allocation8 + $0x12c] sm:$0xff] %v2712
      %2969 = vst [vmem:[#allocation8 + $0x134] sm:$0xf] %v2713
      %2970 = vst [vmem:[#allocation8 + $0x138] sm:$0xff] %v2714
      %2971 = vst [vmem:[#allocation8 + $0x140] sm:$0xf] %v2715
      %2972 = vst [vmem:[#allocation8 + $0x144] sm:$0xff] %v2716
      %2973 = vst [vmem:[#allocation8 + $0x14c] sm:$0xf] %v2717
      %2974 = vst [vmem:[#allocation8 + $0x150] sm:$0xff] %v2718
      %2975 = vst [vmem:[#allocation8 + $0x158] sm:$0xf] %v2719
      %2976 = vst [vmem:[#allocation8 + $0x15c] sm:$0xff] %v2720
      %2977 = vst [vmem:[#allocation8 + $0x164] sm:$0xf] %v2721
      %2978 = vst [vmem:[#allocation8 + $0x168] sm:$0xff] %v2722
      %2979 = vst [vmem:[#allocation8 + $0x170] sm:$0xf] %v2723
      %2980 = vst [vmem:[#allocation8 + $0x174] sm:$0xff] %v2724
      %2981 = vst [vmem:[#allocation8 + $0x17c] sm:$0xf] %v2725
      %2982 = vst [vmem:[#allocation8 + $0x180] sm:$0xff] %v2726
      %2983 = vst [vmem:[#allocation8 + $0x188] sm:$0xf] %v2727
      %2984 = vst [vmem:[#allocation8 + $0x18c] sm:$0xff] %v2728
      %2985 = vst [vmem:[#allocation8 + $0x194] sm:$0xf] %v2729
      %2986 = vst [vmem:[#allocation8 + $0x198] sm:$0xff] %v2730
      %2987 = vst [vmem:[#allocation8 + $0x1a0] sm:$0xf] %v2731
      %2988 = vst [vmem:[#allocation8 + $0x1a4] sm:$0xff] %v2732
      %2989 = vst [vmem:[#allocation8 + $0x1ac] sm:$0xf] %v2733
      %2990 = vst [vmem:[#allocation8 + $0x1b0] sm:$0xff] %v2734
      %2991 = vst [vmem:[#allocation8 + $0x1b8] sm:$0xf] %v2735
      %2992 = vst [vmem:[#allocation8 + $0x1bc] sm:$0xff] %v2736
      %2993 = vst [vmem:[#allocation8 + $0x1c4] sm:$0xf] %v2737
      %2994 = vst [vmem:[#allocation8 + $0x1c8] sm:$0xff] %v2738
      %2995 = vst [vmem:[#allocation8 + $0x1d0] sm:$0xf] %v2739
      %2996 = vst [vmem:[#allocation8 + $0x1d4] sm:$0xff] %v2740
      %2997 = vst [vmem:[#allocation8 + $0x1dc] sm:$0xf] %v2741
      %2998 = vst [vmem:[#allocation8 + $0x1e0] sm:$0xff] %v2742
      %2999 = vst [vmem:[#allocation8 + $0x1e8] sm:$0xf] %v2743
      %3000 = vst [vmem:[#allocation8 + $0x1ec] sm:$0xff] %v2744
      %3001 = vst [vmem:[#allocation8 + $0x1f4] sm:$0xf] %v2745
      %3002 = vst [vmem:[#allocation8 + $0x1f8] sm:$0xff] %v2746
      %3003 = vst [vmem:[#allocation8 + $0x200] sm:$0xf] %v2747
      %3004 = vst [vmem:[#allocation8 + $0x204] sm:$0xff] %v2748
      %3005 = vst [vmem:[#allocation8 + $0x20c] sm:$0xf] %v2749
      %3006 = vst [vmem:[#allocation8 + $0x210] sm:$0xff] %v2750
      %3007 = vst [vmem:[#allocation8 + $0x218] sm:$0xf] %v2751
      %3008 = vst [vmem:[#allocation8 + $0x21c] sm:$0xff] %v2752
      %3009 = vst [vmem:[#allocation8 + $0x224] sm:$0xf] %v2753
      %3010 = vst [vmem:[#allocation8 + $0x228] sm:$0xff] %v2754
      %3011 = vst [vmem:[#allocation8 + $0x230] sm:$0xf] %v2755
      %3012 = vst [vmem:[#allocation8 + $0x234] sm:$0xff] %v2756
      %3013 = vst [vmem:[#allocation8 + $0x23c] sm:$0xf] %v2757
      %3014 = vst [vmem:[#allocation8 + $0x240] sm:$0xff] %v2758
      %3015 = vst [vmem:[#allocation8 + $0x248] sm:$0xf] %v2759
      %3016 = vst [vmem:[#allocation8 + $0x24c] sm:$0xff] %v2760
      %3017 = vst [vmem:[#allocation8 + $0x254] sm:$0xf] %v2761
      %3018 = vst [vmem:[#allocation8 + $0x258] sm:$0xff] %v2762
      %3019 = vst [vmem:[#allocation8 + $0x260] sm:$0xf] %v2763
      %3020 = vst [vmem:[#allocation8 + $0x264] sm:$0xff] %v2764
      %3021 = vst [vmem:[#allocation8 + $0x26c] sm:$0xf] %v2765
      %3022 = vst [vmem:[#allocation8 + $0x270] sm:$0xff] %v2766
      %3023 = vst [vmem:[#allocation8 + $0x278] sm:$0xf] %v2767
      %3024 = vst [vmem:[#allocation8 + $0x27c] sm:$0xff] %v2768
      %3025 = vst [vmem:[#allocation8 + $0x284] sm:$0xf] %v2769
      %3026 = vst [vmem:[#allocation8 + $0x288] sm:$0xff] %v2770
      %3027 = vst [vmem:[#allocation8 + $0x290] sm:$0xf] %v2771
      %3028 = vst [vmem:[#allocation8 + $0x294] sm:$0xff] %v2772
      %3029 = vst [vmem:[#allocation8 + $0x29c] sm:$0xf] %v2773
      %3030 = vst [vmem:[#allocation8 + $0x2a0] sm:$0xff] %v2774
      %3031 = vst [vmem:[#allocation8 + $0x2a8] sm:$0xf] %v2775
      %3032 = vst [vmem:[#allocation8 + $0x2ac] sm:$0xff] %v2776
      %3033 = vst [vmem:[#allocation8 + $0x2b4] sm:$0xf] %v2777
      %3034 = vst [vmem:[#allocation8 + $0x2b8] sm:$0xff] %v2778
      %3035 = vst [vmem:[#allocation8 + $0x2c0] sm:$0xf] %v2779
      %3036 = vst [vmem:[#allocation8 + $0x2c4] sm:$0xff] %v2780
      %3037 = vst [vmem:[#allocation8 + $0x2cc] sm:$0xf] %v2781
      %3038 = vst [vmem:[#allocation8 + $0x2d0] sm:$0xff] %v2782
      %3039 = vst [vmem:[#allocation8 + $0x2d8] sm:$0xf] %v2783
      %3040 = vst [vmem:[#allocation8 + $0x2dc] sm:$0xff] %v2784
      %3041 = vst [vmem:[#allocation8 + $0x2e4] sm:$0xf] %v2785
      %3042 = vst [vmem:[#allocation8 + $0x2e8] sm:$0xff] %v2786
      %3043 = vst [vmem:[#allocation8 + $0x2f0] sm:$0xf] %v2787
      %3044 = vst [vmem:[#allocation8 + $0x2f4] sm:$0xff] %v2788
      %3045 = vst [vmem:[#allocation8 + $0x2fc] sm:$0xf] %v2789
    $region29: #{tpu_custom_call.1} parent=1 // pred_fallthru
      _
    // Predicated region
    $region30: #{tpu_custom_call.1} parent=1 // pred_check
      _
    $region31: #{tpu_custom_call.1} parent=1 // pred_check_branch
      %3047 = sbr.rel (0) target = $region33
    $region32: #{tpu_custom_call.1} parent=1 // pred_region
      %s3049 = ssub.s32 12288, 12288
      %3050 = vsyncadd [#allocation5], %s3049
      %s3051 = sshll.u32 [#allocation8], 4
      %s3052 = int_to_ptr.vmem [resolvable:$true] %s3051
      %3057 = dma.vmem_to_hbm [thread:$0]  %s3052, 12288, %s3, [#allocation5], 192, 192, 12
    $region33: #{tpu_custom_call.1} parent=1 // pred_fallthru
      _
    // Predicated region
    $region34: #{tpu_custom_call.1} parent=1 // pred_check
      _
    $region35: #{tpu_custom_call.1} parent=1 // pred_check_branch
      %3059 = sbr.rel (0) target = $region37
    $region36: #{tpu_custom_call.1} parent=1 // pred_region
      %3060 = dma.done [#allocation5], 12288
    $region37: #{tpu_custom_call.1} parent=1 // pred_fallthru
      _
    %3061 = vsyncpa [#allocation4], 1
    %3062 = vsyncpa [#allocation7], 1
    %3063 = vsyncpa [#allocation5], 1

</llo_original>
